<compile_context>
chip_gen: v6e
topology: v6e:2x2x1
jax: 0.10.0
libtpu: 0.0.40
codegen_flags: <defaults>
</compile_context>

<pallas_src>
import jax
import jax.numpy as jnp
from jax import lax
from jax.experimental import pallas as pl
from jax.experimental.pallas import tpu as pltpu

BN_EPS = 1e-5


# ----------------------------------------------------------------------------
# Fused  y = ELU(x @ w + b)  Pallas kernel (used for every conv stage + the FC)
# ----------------------------------------------------------------------------
def _matmul_bias_elu_kernel(x_ref, w_ref, b_ref, o_ref):
    z = jnp.dot(x_ref[...], w_ref[...], preferred_element_type=jnp.float32)
    z = z + b_ref[...]                                     # (TM, N) + (1, N)
    # ELU(alpha=1): z if z > 0 else exp(z) - 1 ; clamp the exp argument so the
    # unselected branch never produces inf.
    neg = jnp.exp(jnp.minimum(z, 0.0)) - 1.0
    o_ref[...] = jnp.where(z > 0, z, neg).astype(o_ref.dtype)


def matmul_bias_elu(x, w, b, *, block_m=512):
    """Fused ELU(x @ w + b).  x: (M, K), w: (K, N), b: (N,) -> (M, N) f32."""
    M, K = x.shape
    Kw, N = w.shape
    assert K == Kw
    b2 = b.reshape(1, N).astype(jnp.float32)

    tm = M if M <= block_m else block_m
    grid_m = pl.cdiv(M, tm)
    Mp = grid_m * tm
    if Mp != M:                        # keep every M-tile full / sublane aligned
        x = jnp.pad(x, ((0, Mp - M), (0, 0)))

    out = pl.pallas_call(
        _matmul_bias_elu_kernel,
        out_shape=jax.ShapeDtypeStruct((Mp, N), jnp.float32),
        grid=(grid_m,),
        in_specs=[
            pl.BlockSpec((tm, K), lambda i: (i, 0)),   # stream rows of x
            pl.BlockSpec((K, N), lambda i: (0, 0)),    # weight pinned in VMEM
            pl.BlockSpec((1, N), lambda i: (0, 0)),    # bias pinned in VMEM
        ],
        out_specs=pl.BlockSpec((tm, N), lambda i: (i, 0)),
        compiler_params=pltpu.CompilerParams(
            dimension_semantics=("parallel",)),        # shard M-tiles across TCs
    )(x.astype(jnp.float32), w.astype(jnp.float32), b2)
    return out[:M] if Mp != M else out


# ----------------------------------------------------------------------------
# Layout plumbing (wrapper-side, free XLA ops)
# ----------------------------------------------------------------------------
def _im2col_k3s2p1(x_nhwc):
    """3x3 / stride-2 / pad-1 patches: (B,H,W,C) -> ((B*OH*OW, 9*C), (B,OH,OW))."""
    B, H, W, C = x_nhwc.shape
    OH, OW = (H + 1) // 2, (W + 1) // 2
    xp = jnp.pad(x_nhwc, ((0, 0), (1, 1), (1, 1), (0, 0)))
    taps = []
    for dy in range(3):
        for dx in range(3):
            taps.append(xp[:, dy:dy + 2 * OH:2, dx:dx + 2 * OW:2, :])
    patches = jnp.concatenate(taps, axis=-1)               # (B, OH, OW, 9*C)
    return patches.reshape(B * OH * OW, 9 * C), (B, OH, OW)


def _fold_conv_bn(p):
    """Fold eval-mode BatchNorm into the conv weight/bias (HWIO -> (9*Cin, Cout))."""
    w, b = p["w"], p["b"]
    scale = p["gamma"] / jnp.sqrt(p["var"] + BN_EPS)
    w2d = w.reshape(-1, w.shape[-1]) * scale[None, :]
    b_eff = (b - p["mean"]) * scale + p["beta"]
    return w2d, b_eff


def image_encoder_bg(x_nchw, params):
    """Pallas forward of ImageEncoderBg: (B, 3, H, W) -> (B, img_enc_dim_bg)."""
    x = jnp.transpose(x_nchw, (0, 2, 3, 1))                # NHWC, channels on lanes
    for p in params["convs"]:
        w2d, b_eff = _fold_conv_bn(p)
        patches, (B, OH, OW) = _im2col_k3s2p1(x)
        y = matmul_bias_elu(patches, w2d, b_eff)           # Conv+BN+ELU as one matmul
        x = y.reshape(B, OH, OW, -1)
    B = x.shape[0]
    h = jnp.transpose(x, (0, 3, 1, 2)).reshape(B, -1)      # PyTorch Flatten order (C,H,W)
    return matmul_bias_elu(h, params["fc_w"], params["fc_b"])  # Linear + ELU


# ----------------------------------------------------------------------------
# Pure-JAX reference (real convolutions)
# ----------------------------------------------------------------------------
def reference(x_nchw, params):
    x = jnp.transpose(x_nchw, (0, 2, 3, 1))
    for p in params["convs"]:
        y = lax.conv_general_dilated(
            x, p["w"], window_strides=(2, 2), padding=((1, 1), (1, 1)),
            dimension_numbers=("NHWC", "HWIO", "NHWC"))
        y = y + p["b"]
        scale = p["gamma"] / jnp.sqrt(p["var"] + BN_EPS)
        y = (y - p["mean"]) * scale + p["beta"]
        x = jax.nn.elu(y)
    B = x.shape[0]
    h = jnp.transpose(x, (0, 3, 1, 2)).reshape(B, -1)
    z = h @ params["fc_w"] + params["fc_b"]
    return jax.nn.elu(z)


if __name__ == "__main__":
    key = jax.random.PRNGKey(0)

    B = 2
    IMG = 64                      # arch.img_shape[0]; embed_size = IMG // 16 = 4
    IMG_ENC_DIM_BG = 64           # arch.img_enc_dim_bg
    embed = IMG // 16

    # Deterministic synthetic parameters (not a checkpoint load).
    convs = []
    cin = 3
    for _ in range(4):
        key, kw, kb, kg, kbt, km, kv = jax.random.split(key, 7)
        cout = 64
        bound = 1.0 / ((cin * 9) ** 0.5)
        convs.append(dict(
            w=jax.random.uniform(kw, (3, 3, cin, cout), jnp.float32, -bound, bound),
            b=jax.random.uniform(kb, (cout,), jnp.float32, -bound, bound),
            gamma=jax.random.uniform(kg, (cout,), jnp.float32, 0.8, 1.2),
            beta=jax.random.uniform(kbt, (cout,), jnp.float32, -0.1, 0.1),
            mean=jax.random.normal(km, (cout,), jnp.float32) * 0.1,
            var=jax.random.uniform(kv, (cout,), jnp.float32, 0.5, 1.5),
        ))
        cin = cout

    feat = 64 * embed * embed
    key, kfw, kfb, kx = jax.random.split(key, 4)
    bound = 1.0 / (feat ** 0.5)
    params = dict(
        convs=convs,
        fc_w=jax.random.uniform(kfw, (feat, IMG_ENC_DIM_BG), jnp.float32, -bound, bound),
        fc_b=jax.random.uniform(kfb, (IMG_ENC_DIM_BG,), jnp.float32, -bound, bound),
    )

    x = jax.random.normal(kx, (B, 3, IMG, IMG), jnp.float32)

    out = jax.jit(image_encoder_bg)(x, params)
    jax.block_until_ready(out)

    ref = reference(x, params)
    assert out.shape == (B, IMG_ENC_DIM_BG)
    max_err = float(jnp.max(jnp.abs(out - ref)))
    assert jnp.allclose(out, ref, atol=2e-2, rtol=2e-2), f"max abs diff {max_err}"
    print("KERNEL_OK")
</pallas_src>

<mosaic_0001>
module attributes {stable_mosaic.version = 11 : i64} {
  func.func @_matmul_bias_elu_kernel(%arg0: i32, %arg1: memref<512x27xf32, #tpu.memory_space<vmem>>, %arg2: memref<27x64xf32, #tpu.memory_space<vmem>>, %arg3: memref<1x64xf32, #tpu.memory_space<vmem>>, %arg4: memref<512x64xf32, #tpu.memory_space<vmem>>) attributes {dimension_semantics = [#tpu.dimension_semantics<parallel>], iteration_bounds = array<i64: 4>, scalar_prefetch = 0 : i64, scratch_operands = 0 : i64, tpu.core_type = #tpu.core_type<tc>, window_params = [{transform_indices = @transform_0, window_bounds = array<i64: 512, 27>}, {pipeline_mode = #tpu.pipeline_mode<synchronous>, transform_indices = @transform_1, window_bounds = array<i64: 27, 64>}, {pipeline_mode = #tpu.pipeline_mode<synchronous>, transform_indices = @transform_2, window_bounds = array<i64: 1, 64>}, {transform_indices = @transform_3, window_bounds = array<i64: 512, 64>}]} {
    %c0 = arith.constant 0 : index
    %c0_0 = arith.constant 0 : index
    %0 = vector.load %arg1[%c0, %c0_0] : memref<512x27xf32, #tpu.memory_space<vmem>>, vector<512x27xf32>
    %c0_1 = arith.constant 0 : index
    %c0_2 = arith.constant 0 : index
    %1 = vector.load %arg2[%c0_1, %c0_2] : memref<27x64xf32, #tpu.memory_space<vmem>>, vector<27x64xf32>
    %cst = arith.constant dense<0.000000e+00> : vector<512x64xf32>
    %2 = tpu.matmul %0, %1, %cst {dimension_numbers = #tpu.dot_dimension_numbers<[1], [0], [0], [1], [0, 0, 1, 1], [], []>} : vector<512x27xf32>, vector<27x64xf32>, vector<512x64xf32> -> vector<512x64xf32>
    %c0_3 = arith.constant 0 : index
    %c0_4 = arith.constant 0 : index
    %3 = vector.load %arg3[%c0_3, %c0_4] : memref<1x64xf32, #tpu.memory_space<vmem>>, vector<1x64xf32>
    %4 = vector.broadcast %3 : vector<1x64xf32> to vector<512x64xf32>
    %5 = arith.addf %2, %4 : vector<512x64xf32>
    %cst_5 = arith.constant 0.000000e+00 : f32
    %6 = vector.broadcast %cst_5 : f32 to vector<512x64xf32>
    %7 = arith.minimumf %5, %6 : vector<512x64xf32>
    %8 = math.exp %7 : vector<512x64xf32>
    %cst_6 = arith.constant 1.000000e+00 : f32
    %9 = vector.broadcast %cst_6 : f32 to vector<512x64xf32>
    %10 = arith.subf %8, %9 : vector<512x64xf32>
    %cst_7 = arith.constant 0.000000e+00 : f32
    %11 = vector.broadcast %cst_7 : f32 to vector<512x64xf32>
    %12 = arith.cmpf ogt, %5, %11 : vector<512x64xf32>
    %13 = arith.select %12, %5, %10 : vector<512x64xi1>, vector<512x64xf32>
    %c0_8 = arith.constant 0 : index
    %c0_9 = arith.constant 0 : index
    %14 = vector.load %arg4[%c0_8, %c0_9] : memref<512x64xf32, #tpu.memory_space<vmem>>, vector<512x64xf32>
    tpu.vector_store %arg4[%c0_8, %c0_9], %13 {strides = array<i32>} : memref<512x64xf32, #tpu.memory_space<vmem>>, vector<512x64xf32>,
    return
  }
  func.func @transform_0(%arg0: i32) -> (i32, i32) {
    %c0_i32 = arith.constant 0 : i32
    %c0_i32_0 = arith.constant 0 : i32
    return %arg0, %c0_i32 : i32, i32
  }
  func.func @transform_1(%arg0: i32) -> (i32, i32) {
    %c0_i32 = arith.constant 0 : i32
    %c0_i32_0 = arith.constant 0 : i32
    %c0_i32_1 = arith.constant 0 : i32
    return %c0_i32, %c0_i32_0 : i32, i32
  }
  func.func @transform_2(%arg0: i32) -> (i32, i32) {
    %c0_i32 = arith.constant 0 : i32
    %c0_i32_0 = arith.constant 0 : i32
    %c0_i32_1 = arith.constant 0 : i32
    return %c0_i32, %c0_i32_0 : i32, i32
  }
  func.func @transform_3(%arg0: i32) -> (i32, i32) {
    %c0_i32 = arith.constant 0 : i32
    %c0_i32_0 = arith.constant 0 : i32
    return %arg0, %c0_i32 : i32, i32
  }
}

module attributes {stable_mosaic.version = 11 : i64} {
  func.func @_matmul_bias_elu_kernel(%arg0: i32, %arg1: memref<512x576xf32, #tpu.memory_space<vmem>>, %arg2: memref<576x64xf32, #tpu.memory_space<vmem>>, %arg3: memref<1x64xf32, #tpu.memory_space<vmem>>, %arg4: memref<512x64xf32, #tpu.memory_space<vmem>>) attributes {dimension_semantics = [#tpu.dimension_semantics<parallel>], iteration_bounds = array<i64: 1>, scalar_prefetch = 0 : i64, scratch_operands = 0 : i64, tpu.core_type = #tpu.core_type<tc>, window_params = [{transform_indices = @transform_0, window_bounds = array<i64: 512, 576>}, {pipeline_mode = #tpu.pipeline_mode<synchronous>, transform_indices = @transform_1, window_bounds = array<i64: 576, 64>}, {pipeline_mode = #tpu.pipeline_mode<synchronous>, transform_indices = @transform_2, window_bounds = array<i64: 1, 64>}, {transform_indices = @transform_3, window_bounds = array<i64: 512, 64>}]} {
    %c0 = arith.constant 0 : index
    %c0_0 = arith.constant 0 : index
    %0 = vector.load %arg1[%c0, %c0_0] : memref<512x576xf32, #tpu.memory_space<vmem>>, vector<512x576xf32>
    %c0_1 = arith.constant 0 : index
    %c0_2 = arith.constant 0 : index
    %1 = vector.load %arg2[%c0_1, %c0_2] : memref<576x64xf32, #tpu.memory_space<vmem>>, vector<576x64xf32>
    %cst = arith.constant dense<0.000000e+00> : vector<512x64xf32>
    %2 = tpu.matmul %0, %1, %cst {dimension_numbers = #tpu.dot_dimension_numbers<[1], [0], [0], [1], [0, 0, 1, 1], [], []>} : vector<512x576xf32>, vector<576x64xf32>, vector<512x64xf32> -> vector<512x64xf32>
    %c0_3 = arith.constant 0 : index
    %c0_4 = arith.constant 0 : index
    %3 = vector.load %arg3[%c0_3, %c0_4] : memref<1x64xf32, #tpu.memory_space<vmem>>, vector<1x64xf32>
    %4 = vector.broadcast %3 : vector<1x64xf32> to vector<512x64xf32>
    %5 = arith.addf %2, %4 : vector<512x64xf32>
    %cst_5 = arith.constant 0.000000e+00 : f32
    %6 = vector.broadcast %cst_5 : f32 to vector<512x64xf32>
    %7 = arith.minimumf %5, %6 : vector<512x64xf32>
    %8 = math.exp %7 : vector<512x64xf32>
    %cst_6 = arith.constant 1.000000e+00 : f32
    %9 = vector.broadcast %cst_6 : f32 to vector<512x64xf32>
    %10 = arith.subf %8, %9 : vector<512x64xf32>
    %cst_7 = arith.constant 0.000000e+00 : f32
    %11 = vector.broadcast %cst_7 : f32 to vector<512x64xf32>
    %12 = arith.cmpf ogt, %5, %11 : vector<512x64xf32>
    %13 = arith.select %12, %5, %10 : vector<512x64xi1>, vector<512x64xf32>
    %c0_8 = arith.constant 0 : index
    %c0_9 = arith.constant 0 : index
    %14 = vector.load %arg4[%c0_8, %c0_9] : memref<512x64xf32, #tpu.memory_space<vmem>>, vector<512x64xf32>
    tpu.vector_store %arg4[%c0_8, %c0_9], %13 {strides = array<i32>} : memref<512x64xf32, #tpu.memory_space<vmem>>, vector<512x64xf32>,
    return
  }
  func.func @transform_0(%arg0: i32) -> (i32, i32) {
    %c0_i32 = arith.constant 0 : i32
    %c0_i32_0 = arith.constant 0 : i32
    return %arg0, %c0_i32 : i32, i32
  }
  func.func @transform_1(%arg0: i32) -> (i32, i32) {
    %c0_i32 = arith.constant 0 : i32
    %c0_i32_0 = arith.constant 0 : i32
    %c0_i32_1 = arith.constant 0 : i32
    return %c0_i32, %c0_i32_0 : i32, i32
  }
  func.func @transform_2(%arg0: i32) -> (i32, i32) {
    %c0_i32 = arith.constant 0 : i32
    %c0_i32_0 = arith.constant 0 : i32
    %c0_i32_1 = arith.constant 0 : i32
    return %c0_i32, %c0_i32_0 : i32, i32
  }
  func.func @transform_3(%arg0: i32) -> (i32, i32) {
    %c0_i32 = arith.constant 0 : i32
    %c0_i32_0 = arith.constant 0 : i32
    return %arg0, %c0_i32 : i32, i32
  }
}

module attributes {stable_mosaic.version = 11 : i64} {
  func.func @_matmul_bias_elu_kernel(%arg0: i32, %arg1: memref<128x576xf32, #tpu.memory_space<vmem>>, %arg2: memref<576x64xf32, #tpu.memory_space<vmem>>, %arg3: memref<1x64xf32, #tpu.memory_space<vmem>>, %arg4: memref<128x64xf32, #tpu.memory_space<vmem>>) attributes {dimension_semantics = [#tpu.dimension_semantics<parallel>], iteration_bounds = array<i64: 1>, scalar_prefetch = 0 : i64, scratch_operands = 0 : i64, tpu.core_type = #tpu.core_type<tc>, window_params = [{transform_indices = @transform_0, window_bounds = array<i64: 128, 576>}, {pipeline_mode = #tpu.pipeline_mode<synchronous>, transform_indices = @transform_1, window_bounds = array<i64: 576, 64>}, {pipeline_mode = #tpu.pipeline_mode<synchronous>, transform_indices = @transform_2, window_bounds = array<i64: 1, 64>}, {transform_indices = @transform_3, window_bounds = array<i64: 128, 64>}]} {
    %c0 = arith.constant 0 : index
    %c0_0 = arith.constant 0 : index
    %0 = vector.load %arg1[%c0, %c0_0] : memref<128x576xf32, #tpu.memory_space<vmem>>, vector<128x576xf32>
    %c0_1 = arith.constant 0 : index
    %c0_2 = arith.constant 0 : index
    %1 = vector.load %arg2[%c0_1, %c0_2] : memref<576x64xf32, #tpu.memory_space<vmem>>, vector<576x64xf32>
    %cst = arith.constant dense<0.000000e+00> : vector<128x64xf32>
    %2 = tpu.matmul %0, %1, %cst {dimension_numbers = #tpu.dot_dimension_numbers<[1], [0], [0], [1], [0, 0, 1, 1], [], []>} : vector<128x576xf32>, vector<576x64xf32>, vector<128x64xf32> -> vector<128x64xf32>
    %c0_3 = arith.constant 0 : index
    %c0_4 = arith.constant 0 : index
    %3 = vector.load %arg3[%c0_3, %c0_4] : memref<1x64xf32, #tpu.memory_space<vmem>>, vector<1x64xf32>
    %4 = vector.broadcast %3 : vector<1x64xf32> to vector<128x64xf32>
    %5 = arith.addf %2, %4 : vector<128x64xf32>
    %cst_5 = arith.constant 0.000000e+00 : f32
    %6 = vector.broadcast %cst_5 : f32 to vector<128x64xf32>
    %7 = arith.minimumf %5, %6 : vector<128x64xf32>
    %8 = math.exp %7 : vector<128x64xf32>
    %cst_6 = arith.constant 1.000000e+00 : f32
    %9 = vector.broadcast %cst_6 : f32 to vector<128x64xf32>
    %10 = arith.subf %8, %9 : vector<128x64xf32>
    %cst_7 = arith.constant 0.000000e+00 : f32
    %11 = vector.broadcast %cst_7 : f32 to vector<128x64xf32>
    %12 = arith.cmpf ogt, %5, %11 : vector<128x64xf32>
    %13 = arith.select %12, %5, %10 : vector<128x64xi1>, vector<128x64xf32>
    %c0_8 = arith.constant 0 : index
    %c0_9 = arith.constant 0 : index
    %14 = vector.load %arg4[%c0_8, %c0_9] : memref<128x64xf32, #tpu.memory_space<vmem>>, vector<128x64xf32>
    tpu.vector_store %arg4[%c0_8, %c0_9], %13 {strides = array<i32>} : memref<128x64xf32, #tpu.memory_space<vmem>>, vector<128x64xf32>,
    return
  }
  func.func @transform_0(%arg0: i32) -> (i32, i32) {
    %c0_i32 = arith.constant 0 : i32
    %c0_i32_0 = arith.constant 0 : i32
    return %arg0, %c0_i32 : i32, i32
  }
  func.func @transform_1(%arg0: i32) -> (i32, i32) {
    %c0_i32 = arith.constant 0 : i32
    %c0_i32_0 = arith.constant 0 : i32
    %c0_i32_1 = arith.constant 0 : i32
    return %c0_i32, %c0_i32_0 : i32, i32
  }
  func.func @transform_2(%arg0: i32) -> (i32, i32) {
    %c0_i32 = arith.constant 0 : i32
    %c0_i32_0 = arith.constant 0 : i32
    %c0_i32_1 = arith.constant 0 : i32
    return %c0_i32, %c0_i32_0 : i32, i32
  }
  func.func @transform_3(%arg0: i32) -> (i32, i32) {
    %c0_i32 = arith.constant 0 : i32
    %c0_i32_0 = arith.constant 0 : i32
    return %arg0, %c0_i32 : i32, i32
  }
}

module attributes {stable_mosaic.version = 11 : i64} {
  func.func @_matmul_bias_elu_kernel(%arg0: i32, %arg1: memref<32x576xf32, #tpu.memory_space<vmem>>, %arg2: memref<576x64xf32, #tpu.memory_space<vmem>>, %arg3: memref<1x64xf32, #tpu.memory_space<vmem>>, %arg4: memref<32x64xf32, #tpu.memory_space<vmem>>) attributes {dimension_semantics = [#tpu.dimension_semantics<parallel>], iteration_bounds = array<i64: 1>, scalar_prefetch = 0 : i64, scratch_operands = 0 : i64, tpu.core_type = #tpu.core_type<tc>, window_params = [{transform_indices = @transform_0, window_bounds = array<i64: 32, 576>}, {pipeline_mode = #tpu.pipeline_mode<synchronous>, transform_indices = @transform_1, window_bounds = array<i64: 576, 64>}, {pipeline_mode = #tpu.pipeline_mode<synchronous>, transform_indices = @transform_2, window_bounds = array<i64: 1, 64>}, {transform_indices = @transform_3, window_bounds = array<i64: 32, 64>}]} {
    %c0 = arith.constant 0 : index
    %c0_0 = arith.constant 0 : index
    %0 = vector.load %arg1[%c0, %c0_0] : memref<32x576xf32, #tpu.memory_space<vmem>>, vector<32x576xf32>
    %c0_1 = arith.constant 0 : index
    %c0_2 = arith.constant 0 : index
    %1 = vector.load %arg2[%c0_1, %c0_2] : memref<576x64xf32, #tpu.memory_space<vmem>>, vector<576x64xf32>
    %cst = arith.constant dense<0.000000e+00> : vector<32x64xf32>
    %2 = tpu.matmul %0, %1, %cst {dimension_numbers = #tpu.dot_dimension_numbers<[1], [0], [0], [1], [0, 0, 1, 1], [], []>} : vector<32x576xf32>, vector<576x64xf32>, vector<32x64xf32> -> vector<32x64xf32>
    %c0_3 = arith.constant 0 : index
    %c0_4 = arith.constant 0 : index
    %3 = vector.load %arg3[%c0_3, %c0_4] : memref<1x64xf32, #tpu.memory_space<vmem>>, vector<1x64xf32>
    %4 = vector.broadcast %3 : vector<1x64xf32> to vector<32x64xf32>
    %5 = arith.addf %2, %4 : vector<32x64xf32>
    %cst_5 = arith.constant 0.000000e+00 : f32
    %6 = vector.broadcast %cst_5 : f32 to vector<32x64xf32>
    %7 = arith.minimumf %5, %6 : vector<32x64xf32>
    %8 = math.exp %7 : vector<32x64xf32>
    %cst_6 = arith.constant 1.000000e+00 : f32
    %9 = vector.broadcast %cst_6 : f32 to vector<32x64xf32>
    %10 = arith.subf %8, %9 : vector<32x64xf32>
    %cst_7 = arith.constant 0.000000e+00 : f32
    %11 = vector.broadcast %cst_7 : f32 to vector<32x64xf32>
    %12 = arith.cmpf ogt, %5, %11 : vector<32x64xf32>
    %13 = arith.select %12, %5, %10 : vector<32x64xi1>, vector<32x64xf32>
    %c0_8 = arith.constant 0 : index
    %c0_9 = arith.constant 0 : index
    %14 = vector.load %arg4[%c0_8, %c0_9] : memref<32x64xf32, #tpu.memory_space<vmem>>, vector<32x64xf32>
    tpu.vector_store %arg4[%c0_8, %c0_9], %13 {strides = array<i32>} : memref<32x64xf32, #tpu.memory_space<vmem>>, vector<32x64xf32>,
    return
  }
  func.func @transform_0(%arg0: i32) -> (i32, i32) {
    %c0_i32 = arith.constant 0 : i32
    %c0_i32_0 = arith.constant 0 : i32
    return %arg0, %c0_i32 : i32, i32
  }
  func.func @transform_1(%arg0: i32) -> (i32, i32) {
    %c0_i32 = arith.constant 0 : i32
    %c0_i32_0 = arith.constant 0 : i32
    %c0_i32_1 = arith.constant 0 : i32
    return %c0_i32, %c0_i32_0 : i32, i32
  }
  func.func @transform_2(%arg0: i32) -> (i32, i32) {
    %c0_i32 = arith.constant 0 : i32
    %c0_i32_0 = arith.constant 0 : i32
    %c0_i32_1 = arith.constant 0 : i32
    return %c0_i32, %c0_i32_0 : i32, i32
  }
  func.func @transform_3(%arg0: i32) -> (i32, i32) {
    %c0_i32 = arith.constant 0 : i32
    %c0_i32_0 = arith.constant 0 : i32
    return %arg0, %c0_i32 : i32, i32
  }
}

module attributes {stable_mosaic.version = 11 : i64} {
  func.func @_matmul_bias_elu_kernel(%arg0: i32, %arg1: memref<2x1024xf32, #tpu.memory_space<vmem>>, %arg2: memref<1024x64xf32, #tpu.memory_space<vmem>>, %arg3: memref<1x64xf32, #tpu.memory_space<vmem>>, %arg4: memref<2x64xf32, #tpu.memory_space<vmem>>) attributes {dimension_semantics = [#tpu.dimension_semantics<parallel>], iteration_bounds = array<i64: 1>, scalar_prefetch = 0 : i64, scratch_operands = 0 : i64, tpu.core_type = #tpu.core_type<tc>, window_params = [{transform_indices = @transform_0, window_bounds = array<i64: 2, 1024>}, {pipeline_mode = #tpu.pipeline_mode<synchronous>, transform_indices = @transform_1, window_bounds = array<i64: 1024, 64>}, {pipeline_mode = #tpu.pipeline_mode<synchronous>, transform_indices = @transform_2, window_bounds = array<i64: 1, 64>}, {transform_indices = @transform_3, window_bounds = array<i64: 2, 64>}]} {
    %c0 = arith.constant 0 : index
    %c0_0 = arith.constant 0 : index
    %0 = vector.load %arg1[%c0, %c0_0] : memref<2x1024xf32, #tpu.memory_space<vmem>>, vector<2x1024xf32>
    %c0_1 = arith.constant 0 : index
    %c0_2 = arith.constant 0 : index
    %1 = vector.load %arg2[%c0_1, %c0_2] : memref<1024x64xf32, #tpu.memory_space<vmem>>, vector<1024x64xf32>
    %cst = arith.constant dense<0.000000e+00> : vector<2x64xf32>
    %2 = tpu.matmul %0, %1, %cst {dimension_numbers = #tpu.dot_dimension_numbers<[1], [0], [0], [1], [0, 0, 1, 1], [], []>} : vector<2x1024xf32>, vector<1024x64xf32>, vector<2x64xf32> -> vector<2x64xf32>
    %c0_3 = arith.constant 0 : index
    %c0_4 = arith.constant 0 : index
    %3 = vector.load %arg3[%c0_3, %c0_4] : memref<1x64xf32, #tpu.memory_space<vmem>>, vector<1x64xf32>
    %4 = vector.broadcast %3 : vector<1x64xf32> to vector<2x64xf32>
    %5 = arith.addf %2, %4 : vector<2x64xf32>
    %cst_5 = arith.constant 0.000000e+00 : f32
    %6 = vector.broadcast %cst_5 : f32 to vector<2x64xf32>
    %7 = arith.minimumf %5, %6 : vector<2x64xf32>
    %8 = math.exp %7 : vector<2x64xf32>
    %cst_6 = arith.constant 1.000000e+00 : f32
    %9 = vector.broadcast %cst_6 : f32 to vector<2x64xf32>
    %10 = arith.subf %8, %9 : vector<2x64xf32>
    %cst_7 = arith.constant 0.000000e+00 : f32
    %11 = vector.broadcast %cst_7 : f32 to vector<2x64xf32>
    %12 = arith.cmpf ogt, %5, %11 : vector<2x64xf32>
    %13 = arith.select %12, %5, %10 : vector<2x64xi1>, vector<2x64xf32>
    %c0_8 = arith.constant 0 : index
    %c0_9 = arith.constant 0 : index
    %14 = vector.load %arg4[%c0_8, %c0_9] : memref<2x64xf32, #tpu.memory_space<vmem>>, vector<2x64xf32>
    tpu.vector_store %arg4[%c0_8, %c0_9], %13 {strides = array<i32>} : memref<2x64xf32, #tpu.memory_space<vmem>>, vector<2x64xf32>,
    return
  }
  func.func @transform_0(%arg0: i32) -> (i32, i32) {
    %c0_i32 = arith.constant 0 : i32
    %c0_i32_0 = arith.constant 0 : i32
    return %arg0, %c0_i32 : i32, i32
  }
  func.func @transform_1(%arg0: i32) -> (i32, i32) {
    %c0_i32 = arith.constant 0 : i32
    %c0_i32_0 = arith.constant 0 : i32
    %c0_i32_1 = arith.constant 0 : i32
    return %c0_i32, %c0_i32_0 : i32, i32
  }
  func.func @transform_2(%arg0: i32) -> (i32, i32) {
    %c0_i32 = arith.constant 0 : i32
    %c0_i32_0 = arith.constant 0 : i32
    %c0_i32_1 = arith.constant 0 : i32
    return %c0_i32, %c0_i32_0 : i32, i32
  }
  func.func @transform_3(%arg0: i32) -> (i32, i32) {
    %c0_i32 = arith.constant 0 : i32
    %c0_i32_0 = arith.constant 0 : i32
    return %arg0, %c0_i32 : i32, i32
  }
}

</mosaic_0001>

<llo_original>
// kernel: image_encoder_bg.5
$region0: #{image_encoder_bg.5}
  #allocation0 [shape = 'u32[]', space=smem, size = 0x4, offset = 0x4, fixed_abs, tag = 'smem constant byte address 0x4 - core index']
  #allocation1 [shape = 'u32[144,128]{1,0:T(1,128)}', space=vmem, size = 0x12000, scoped, tag = 'internal scratch']
  %s0 = inlined_call_operand.vmem [shape: f32[2048,27], index: 0, kind: input, shape index: {}]
  %s1 = inlined_call_operand.vmem [shape: f32[27,64], index: 1, kind: input, shape index: {}]
  %s2 = inlined_call_operand.vmem [shape: f32[1,64], index: 2, kind: input, shape index: {}]
  %s3 = inlined_call_operand.vmem [shape: f32[2048,64], index: 3, kind: output, shape index: {}]
  %s4 = sld [smem:[#allocation0]]
  $region45: #{image_encoder_bg.5} parent=0
    _
  %s6 = ssub.s32 1, %s4
  %s7 = scalar_select 0, %s6, %s4
  loop: start=0, step=1, limit=6
  $region2: #{image_encoder_bg.5} parent=0 // loop_pre_header
    _
  $region3: #{image_encoder_bg.5} parent=0 // loop_header
    %s9 = sphi 0, %s13
    %p10 = scmp.ge.s32.totalorder %s9, 6
    %s19 = sphi 0, %s21
    %s22 = sphi 0, %s19
    %s23 = sphi 0, %s22
    %s39 = sphi 0, %s23
    %s43 = sphi 0, %s43
    %s45 = sphi 0, %s43
    %s46 = sphi 0, %s45
    %s60 = sphi 0, %s46
    %s64 = sphi 0, %s64
    %s66 = sphi 0, %s64
    %s67 = sphi 0, %s66
    %s81 = sphi 0, %s67
    %s87 = sphi 0, %s89
    %s90 = sphi 0, %s87
    %s91 = sphi 0, %s90
    %s107 = sphi 0, %s91
  $region4: #{image_encoder_bg.5} parent=0 // loop_header_branch
    %12 = sbr.rel (%p10) target = $region8
  $region5: #{image_encoder_bg.5} parent=0 // loop_body
    %s14 = ssub.s32 %s9, 1
    %s15 = ssub.s32 %s9, 2
    %s16 = sadd.s32 %s9, 1
    %s17 = ssub.s32 %s9, %s16
    %p18 = scmp.eq.s32.totalorder %s17, 0
    %s20 = sadd.s32 %s19, 1
    %s21 = scalar_select %p18, %s19, %s20
    %p24 = pneg %p18
    %p25 = scmp.eq.s32.totalorder %s9, 3
    %p26 = por %p24, %p25
    %p27 = scmp.ne.s32.totalorder %s19, %s22
    %p28 = scmp.eq.s32.totalorder %s9, 0
    %p29 = por %p27, %p28
    %p30 = scmp.ne.s32.totalorder %s19, %s22
    %p31 = scmp.eq.s32.totalorder %s14, 3
    %p32 = por %p30, %p31
    %p33 = scmp.ne.s32.totalorder %s22, %s23
    %p34 = scmp.eq.s32.totalorder %s14, 0
    %p35 = por %p33, %p34
    %p36 = scmp.ne.s32.totalorder %s22, %s23
    %p37 = scmp.eq.s32.totalorder %s15, 3
    %p38 = por %p36, %p37
    %p40 = scmp.ne.s32.totalorder %s23, %s39
    %p41 = scmp.eq.s32.totalorder %s15, 0
    %p42 = por %p40, %p41
    %s44 = sadd.s32 %s43, 1
    %p47 = scmp.eq.s32.totalorder %s9, 3
    %p48 = scmp.ne.s32.totalorder %s43, %s45
    %p49 = scmp.eq.s32.totalorder %s9, 0
    %p50 = por %p48, %p49
    %p51 = scmp.ne.s32.totalorder %s43, %s45
    %p52 = scmp.eq.s32.totalorder %s14, 3
    %p53 = por %p51, %p52
    %p54 = scmp.ne.s32.totalorder %s45, %s46
    %p55 = scmp.eq.s32.totalorder %s14, 0
    %p56 = por %p54, %p55
    %p57 = scmp.ne.s32.totalorder %s45, %s46
    %p58 = scmp.eq.s32.totalorder %s15, 3
    %p59 = por %p57, %p58
    %p61 = scmp.ne.s32.totalorder %s46, %s60
    %p62 = scmp.eq.s32.totalorder %s15, 0
    %p63 = por %p61, %p62
    %s65 = sadd.s32 %s64, 1
    %p68 = scmp.eq.s32.totalorder %s9, 3
    %p69 = scmp.ne.s32.totalorder %s64, %s66
    %p70 = scmp.eq.s32.totalorder %s9, 0
    %p71 = por %p69, %p70
    %p72 = scmp.ne.s32.totalorder %s64, %s66
    %p73 = scmp.eq.s32.totalorder %s14, 3
    %p74 = por %p72, %p73
    %p75 = scmp.ne.s32.totalorder %s66, %s67
    %p76 = scmp.eq.s32.totalorder %s14, 0
    %p77 = por %p75, %p76
    %p78 = scmp.ne.s32.totalorder %s66, %s67
    %p79 = scmp.eq.s32.totalorder %s15, 3
    %p80 = por %p78, %p79
    %p82 = scmp.ne.s32.totalorder %s67, %s81
    %p83 = scmp.eq.s32.totalorder %s15, 0
    %p84 = por %p82, %p83
    %s85 = ssub.s32 %s9, %s16
    %p86 = scmp.eq.s32.totalorder %s85, 0
    %s88 = sadd.s32 %s87, 1
    %s89 = scalar_select %p86, %s87, %s88
    %p92 = pneg %p86
    %p93 = scmp.eq.s32.totalorder %s9, 3
    %p94 = por %p92, %p93
    %p95 = scmp.ne.s32.totalorder %s87, %s90
    %p96 = scmp.eq.s32.totalorder %s9, 0
    %p97 = por %p95, %p96
    %p98 = scmp.ne.s32.totalorder %s87, %s90
    %p99 = scmp.eq.s32.totalorder %s14, 3
    %p100 = por %p98, %p99
    %p101 = scmp.ne.s32.totalorder %s90, %s91
    %p102 = scmp.eq.s32.totalorder %s14, 0
    %p103 = por %p101, %p102
    %p104 = scmp.ne.s32.totalorder %s90, %s91
    %p105 = scmp.eq.s32.totalorder %s15, 3
    %p106 = por %p104, %p105
    %p108 = scmp.ne.s32.totalorder %s91, %s107
    %p109 = scmp.eq.s32.totalorder %s15, 0
    %p110 = por %p108, %p109
    %p111 = scmp.le.s32.totalorder 1, %s9
    %p112 = scmp.lt.s32.totalorder %s9, 5
    %p113 = pnand %p111, %p112
    %p114 = pneg %p113
    // Predicated region
    $region9: #{image_encoder_bg.5} parent=5 // pred_check
      _
    $region10: #{image_encoder_bg.5} parent=5 // pred_check_branch
      %116 = sbr.rel (%p113) target = $region12
    $region11: #{image_encoder_bg.5} parent=5 // pred_region
      %s117 = ssub.s32 %s9, 1
      // Predicated region
      $region13: #{image_encoder_bg.5} parent=11 // pred_check
        %p118 = pneg %p56
      $region14: #{image_encoder_bg.5} parent=11 // pred_check_branch
        %120 = sbr.rel (%p118) target = $region16
      $region15: #{image_encoder_bg.5} parent=11 // pred_region
        _
      $region16: #{image_encoder_bg.5} parent=11 // pred_fallthru
        _
      // Predicated region
      $region17: #{image_encoder_bg.5} parent=11 // pred_check
        %p121 = pneg %p77
      $region18: #{image_encoder_bg.5} parent=11 // pred_check_branch
        %123 = sbr.rel (%p121) target = $region20
      $region19: #{image_encoder_bg.5} parent=11 // pred_region
        _
      $region20: #{image_encoder_bg.5} parent=11 // pred_fallthru
        _
    $region12: #{image_encoder_bg.5} parent=5 // pred_fallthru
      _
    %p124 = scmp.lt.s32.totalorder %s9, 4
    // Predicated region
    $region21: #{image_encoder_bg.5} parent=5 // pred_check
      %p125 = pneg %p124
    $region22: #{image_encoder_bg.5} parent=5 // pred_check_branch
      %127 = sbr.rel (%p125) target = $region24
    $region23: #{image_encoder_bg.5} parent=5 // pred_region
      // Predicated region
      $region25: #{image_encoder_bg.5} parent=23 // pred_check
        %p128 = pneg %p29
      $region26: #{image_encoder_bg.5} parent=23 // pred_check_branch
        %130 = sbr.rel (%p128) target = $region28
      $region27: #{image_encoder_bg.5} parent=23 // pred_region
        %s131 = smul.u32 64, %s9
        %p132 = scmp.lt.s32.totalorder %s131, 255
        %s133 = scalar_select %p132, %s131, 255
        %s134 = smul.addr %s133, 8
        %s135 = scalar_lea.vmem %s0, %s134
        %s136 = smul.u32 64, %s9
      $region28: #{image_encoder_bg.5} parent=23 // pred_fallthru
        _
    $region24: #{image_encoder_bg.5} parent=5 // pred_fallthru
      _
    %p137 = scmp.le.s32.totalorder 1, %s9
    %p138 = scmp.lt.s32.totalorder %s9, 5
    %p139 = pnand %p137, %p138
    %p140 = pneg %p139
    // Predicated region
    $region29: #{image_encoder_bg.5} parent=5 // pred_check
      _
    $region30: #{image_encoder_bg.5} parent=5 // pred_check_branch
      %142 = sbr.rel (%p139) target = $region32
    $region31: #{image_encoder_bg.5} parent=5 // pred_region
      %s143 = ssub.s32 %s9, 1
      %s144 = smul.u32 64, %s14
      %p145 = scmp.lt.s32.totalorder %s144, 255
      %s146 = scalar_select %p145, %s144, 255
      %s147 = smul.addr %s146, 8
      %s148 = scalar_lea.vmem %s0, %s147
      %p149 = pneg %p35
      %p150 = pneg %p32
      %p151 = pneg %p56
      %p152 = pneg %p53
      %p153 = pneg %p77
      %p154 = pneg %p74
      %p155 = pneg %p103
      %p156 = pneg %p100
      %s157 = smul.u32 64, %s14
      %p158 = scmp.lt.s32.totalorder %s157, 255
      %s159 = scalar_select %p158, %s157, 255
      %s160 = smul.addr %s159, 8
      %s161 = scalar_lea.vmem %s3, %s160
      %s162 = smul.u32 64, %s14
      %p163 = scmp.lt.s32.totalorder %s162, 255
      %s164 = scalar_select %p163, %s162, 255
      %s165 = smul.addr %s164, 8
      %s166 = scalar_lea.vmem %s0, %s165
      %s167 = smul.u32 64, %s14
      %s168 = smul.u32 64, %s14
      %p169 = scmp.lt.s32.totalorder %s168, 255
      %s170 = scalar_select %p169, %s168, 255
      %s171 = smul.addr %s170, 8
      %s172 = scalar_lea.vmem %s3, %s171
      %s173 = smul.u32 64, %s14
      %v174 = vld [vmem:[%s166] sm:$0xff]
      %v175 = vld [vmem:[%s166 + $0x8] sm:$0xff]
      %v176 = vld [vmem:[%s166 + $0x10] sm:$0xff]
      %v177 = vld [vmem:[%s166 + $0x18] sm:$0xff]
      %v178 = vld [vmem:[%s166 + $0x20] sm:$0xff]
      %v179 = vld [vmem:[%s166 + $0x28] sm:$0xff]
      %v180 = vld [vmem:[%s166 + $0x30] sm:$0xff]
      %v181 = vld [vmem:[%s166 + $0x38] sm:$0xff]
      %v182 = vld [vmem:[%s166 + $0x40] sm:$0xff]
      %v183 = vld [vmem:[%s166 + $0x48] sm:$0xff]
      %v184 = vld [vmem:[%s166 + $0x50] sm:$0xff]
      %v185 = vld [vmem:[%s166 + $0x58] sm:$0xff]
      %v186 = vld [vmem:[%s166 + $0x60] sm:$0xff]
      %v187 = vld [vmem:[%s166 + $0x68] sm:$0xff]
      %v188 = vld [vmem:[%s166 + $0x70] sm:$0xff]
      %v189 = vld [vmem:[%s166 + $0x78] sm:$0xff]
      %v190 = vld [vmem:[%s166 + $0x80] sm:$0xff]
      %v191 = vld [vmem:[%s166 + $0x88] sm:$0xff]
      %v192 = vld [vmem:[%s166 + $0x90] sm:$0xff]
      %v193 = vld [vmem:[%s166 + $0x98] sm:$0xff]
      %v194 = vld [vmem:[%s166 + $0xa0] sm:$0xff]
      %v195 = vld [vmem:[%s166 + $0xa8] sm:$0xff]
      %v196 = vld [vmem:[%s166 + $0xb0] sm:$0xff]
      %v197 = vld [vmem:[%s166 + $0xb8] sm:$0xff]
      %v198 = vld [vmem:[%s166 + $0xc0] sm:$0xff]
      %v199 = vld [vmem:[%s166 + $0xc8] sm:$0xff]
      %v200 = vld [vmem:[%s166 + $0xd0] sm:$0xff]
      %v201 = vld [vmem:[%s166 + $0xd8] sm:$0xff]
      %v202 = vld [vmem:[%s166 + $0xe0] sm:$0xff]
      %v203 = vld [vmem:[%s166 + $0xe8] sm:$0xff]
      %v204 = vld [vmem:[%s166 + $0xf0] sm:$0xff]
      %v205 = vld [vmem:[%s166 + $0xf8] sm:$0xff]
      %v206 = vld [vmem:[%s166 + $0x100] sm:$0xff]
      %v207 = vld [vmem:[%s166 + $0x108] sm:$0xff]
      %v208 = vld [vmem:[%s166 + $0x110] sm:$0xff]
      %v209 = vld [vmem:[%s166 + $0x118] sm:$0xff]
      %v210 = vld [vmem:[%s166 + $0x120] sm:$0xff]
      %v211 = vld [vmem:[%s166 + $0x128] sm:$0xff]
      %v212 = vld [vmem:[%s166 + $0x130] sm:$0xff]
      %v213 = vld [vmem:[%s166 + $0x138] sm:$0xff]
      %v214 = vld [vmem:[%s166 + $0x140] sm:$0xff]
      %v215 = vld [vmem:[%s166 + $0x148] sm:$0xff]
      %v216 = vld [vmem:[%s166 + $0x150] sm:$0xff]
      %v217 = vld [vmem:[%s166 + $0x158] sm:$0xff]
      %v218 = vld [vmem:[%s166 + $0x160] sm:$0xff]
      %v219 = vld [vmem:[%s166 + $0x168] sm:$0xff]
      %v220 = vld [vmem:[%s166 + $0x170] sm:$0xff]
      %v221 = vld [vmem:[%s166 + $0x178] sm:$0xff]
      %v222 = vld [vmem:[%s166 + $0x180] sm:$0xff]
      %v223 = vld [vmem:[%s166 + $0x188] sm:$0xff]
      %v224 = vld [vmem:[%s166 + $0x190] sm:$0xff]
      %v225 = vld [vmem:[%s166 + $0x198] sm:$0xff]
      %v226 = vld [vmem:[%s166 + $0x1a0] sm:$0xff]
      %v227 = vld [vmem:[%s166 + $0x1a8] sm:$0xff]
      %v228 = vld [vmem:[%s166 + $0x1b0] sm:$0xff]
      %v229 = vld [vmem:[%s166 + $0x1b8] sm:$0xff]
      %v230 = vld [vmem:[%s166 + $0x1c0] sm:$0xff]
      %v231 = vld [vmem:[%s166 + $0x1c8] sm:$0xff]
      %v232 = vld [vmem:[%s166 + $0x1d0] sm:$0xff]
      %v233 = vld [vmem:[%s166 + $0x1d8] sm:$0xff]
      %v234 = vld [vmem:[%s166 + $0x1e0] sm:$0xff]
      %v235 = vld [vmem:[%s166 + $0x1e8] sm:$0xff]
      %v236 = vld [vmem:[%s166 + $0x1f0] sm:$0xff]
      %v237 = vld [vmem:[%s166 + $0x1f8] sm:$0xff]
      %v238 = vld [vmem:[%s1] sm:$0xff]
      %v239 = vld [vmem:[%s1 + $0x8] sm:$0xff]
      %v240 = vld [vmem:[%s1 + $0x10] sm:$0xff]
      %v241 = vld [vmem:[%s1 + $0x18] sm:$0x7]
      %v242 = vld [vmem:[%s2] sm:$0x1]
      %v244 = vlaneseq
      %v245 = vshrl.u32 %v244, 7
      %v246 = vsub.s32 0, %v245
      %v247 = vrot.slane %v242, %v246
      %vm249 = vcmask 220160
      %v251 = vsel %vm249, %v174, 0
      %v254 = vsel %vm249, %v175, 0
      %v257 = vsel %vm249, %v176, 0
      %v260 = vsel %vm249, %v177, 0
      %v263 = vsel %vm249, %v178, 0
      %v266 = vsel %vm249, %v179, 0
      %v269 = vsel %vm249, %v180, 0
      %v272 = vsel %vm249, %v181, 0
      %v275 = vsel %vm249, %v182, 0
      %v278 = vsel %vm249, %v183, 0
      %v281 = vsel %vm249, %v184, 0
      %v284 = vsel %vm249, %v185, 0
      %v287 = vsel %vm249, %v186, 0
      %v290 = vsel %vm249, %v187, 0
      %v293 = vsel %vm249, %v188, 0
      %v296 = vsel %vm249, %v189, 0
      %v299 = vsel %vm249, %v190, 0
      %v302 = vsel %vm249, %v191, 0
      %v305 = vsel %vm249, %v192, 0
      %v308 = vsel %vm249, %v193, 0
      %v311 = vsel %vm249, %v194, 0
      %v314 = vsel %vm249, %v195, 0
      %v317 = vsel %vm249, %v196, 0
      %v320 = vsel %vm249, %v197, 0
      %v323 = vsel %vm249, %v198, 0
      %v326 = vsel %vm249, %v199, 0
      %v329 = vsel %vm249, %v200, 0
      %v332 = vsel %vm249, %v201, 0
      %v335 = vsel %vm249, %v202, 0
      %v338 = vsel %vm249, %v203, 0
      %v341 = vsel %vm249, %v204, 0
      %v344 = vsel %vm249, %v205, 0
      %v347 = vsel %vm249, %v206, 0
      %v350 = vsel %vm249, %v207, 0
      %v353 = vsel %vm249, %v208, 0
      %v356 = vsel %vm249, %v209, 0
      %v359 = vsel %vm249, %v210, 0
      %v362 = vsel %vm249, %v211, 0
      %v365 = vsel %vm249, %v212, 0
      %v368 = vsel %vm249, %v213, 0
      %v371 = vsel %vm249, %v214, 0
      %v374 = vsel %vm249, %v215, 0
      %v377 = vsel %vm249, %v216, 0
      %v380 = vsel %vm249, %v217, 0
      %v383 = vsel %vm249, %v218, 0
      %v386 = vsel %vm249, %v219, 0
      %v389 = vsel %vm249, %v220, 0
      %v392 = vsel %vm249, %v221, 0
      %v395 = vsel %vm249, %v222, 0
      %v398 = vsel %vm249, %v223, 0
      %v401 = vsel %vm249, %v224, 0
      %v404 = vsel %vm249, %v225, 0
      %v407 = vsel %vm249, %v226, 0
      %v410 = vsel %vm249, %v227, 0
      %v413 = vsel %vm249, %v228, 0
      %v416 = vsel %vm249, %v229, 0
      %v419 = vsel %vm249, %v230, 0
      %v422 = vsel %vm249, %v231, 0
      %v425 = vsel %vm249, %v232, 0
      %v428 = vsel %vm249, %v233, 0
      %v431 = vsel %vm249, %v234, 0
      %v434 = vsel %vm249, %v235, 0
      %v437 = vsel %vm249, %v236, 0
      %v440 = vsel %vm249, %v237, 0
      %vm442 = vcmask 1042432
      %v444 = vsel %vm442, %v241, 0
      %446 = vmatprep.subr.mxu0 0.0
      %447 = vmatpush1.msra.mxu0 0.0
      %448 = vmatprep.subr.mxu0 0.0
      %449 = vmatpush1.msra.mxu0 0.0
      %450 = vmatprep.subr.mxu0 0.0
      %451 = vmatpush1.msra.mxu0 0.0
      %452 = vmatprep.subr.mxu0 0.0
      %453 = vmatpush1.msra.mxu0 0.0
      %454 = vmatprep.subr.mxu0 0.0
      %455 = vmatpush1.msra.mxu0 0.0
      %456 = vmatprep.subr.mxu0 0.0
      %457 = vmatpush1.msra.mxu0 0.0
      %458 = vmatprep.subr.mxu0 0.0
      %459 = vmatpush1.msra.mxu0 0.0
      %460 = vmatprep.subr.mxu0 0.0
      %461 = vmatpush1.msra.mxu0 0.0
      %462 = vmatprep.subr.mxu0 0.0
      %463 = vmatpush1.msra.mxu0 0.0
      %464 = vmatprep.subr.mxu0 0.0
      %465 = vmatpush1.msra.mxu0 0.0
      %466 = vmatprep.subr.mxu0 0.0
      %467 = vmatpush1.msra.mxu0 0.0
      %468 = vmatprep.subr.mxu0 0.0
      %469 = vmatpush1.msra.mxu0 0.0
      %470 = vmatprep.subr.mxu0 0.0
      %471 = vmatpush1.msra.mxu0 %v444
      %472 = vmatprep.subr.mxu0 0.0
      %473 = vmatpush1.msra.mxu0 %v240
      %474 = vmatprep.subr.mxu0 0.0
      %475 = vmatpush1.msra.mxu0 %v239
      %476 = vmatprep.subr.mxu0 0.0
      %477 = vmatpush1.msra.mxu0 %v238
      %478 = vmatprep.subr.mxu0 0.0
      %479 = vmatpush2.msra.mxu0 0.0
      %480 = vmatprep.subr.mxu0 0.0
      %481 = vmatpush2.msra.mxu0 0.0
      %482 = vmatprep.subr.mxu0 0.0
      %483 = vmatpush2.msra.mxu0 0.0
      %484 = vmatprep.subr.mxu0 0.0
      %485 = vmatpush2.msra.mxu0 0.0
      %486 = vmatprep.subr.mxu0 0.0
      %487 = vmatpush2.msra.mxu0 0.0
      %488 = vmatprep.subr.mxu0 0.0
      %489 = vmatpush2.msra.mxu0 0.0
      %490 = vmatprep.subr.mxu0 0.0
      %491 = vmatpush2.msra.mxu0 0.0
      %492 = vmatprep.subr.mxu0 0.0
      %493 = vmatpush2.msra.mxu0 0.0
      %494 = vmatprep.subr.mxu0 0.0
      %495 = vmatpush2.msra.mxu0 0.0
      %496 = vmatprep.subr.mxu0 0.0
      %497 = vmatpush2.msra.mxu0 0.0
      %498 = vmatprep.subr.mxu0 0.0
      %499 = vmatpush2.msra.mxu0 0.0
      %500 = vmatprep.subr.mxu0 0.0
      %501 = vmatpush2.msra.mxu0 0.0
      %502 = vmatprep.subr.mxu0 0.0
      %503 = vmatpush2.msra.mxu0 0.0
      %504 = vmatprep.subr.mxu0 0.0
      %505 = vmatpush2.msra.mxu0 0.0
      %506 = vmatprep.subr.mxu0 0.0
      %507 = vmatpush2.msra.mxu0 0.0
      %508 = vmatprep.subr.mxu0 0.0
      %509 = vmatpush2.msra.mxu0 0.0
      %510 = vmatprep.mubr.f32.mxu0 0.0
      %511 = vmatmul.mubr.f32.gmra.mxu0 %v251
      %v512 = vpop.f32.mrf.mxu0
      %v513 = vadd.f32 %v247, %v512
      %v514 = vpop.f32.mrf.mxu0
      %515 = vmatprep.mubr.f32.mxu0 0.0
      %516 = vmatmul.mubr.f32.gmra.mxu0 %v254
      %v517 = vpop.f32.mrf.mxu0
      %v518 = vadd.f32 %v247, %v517
      %v519 = vpop.f32.mrf.mxu0
      %520 = vmatprep.mubr.f32.mxu0 0.0
      %521 = vmatmul.mubr.f32.gmra.mxu0 %v257
      %v522 = vpop.f32.mrf.mxu0
      %v523 = vadd.f32 %v247, %v522
      %v524 = vpop.f32.mrf.mxu0
      %525 = vmatprep.mubr.f32.mxu0 0.0
      %526 = vmatmul.mubr.f32.gmra.mxu0 %v260
      %v527 = vpop.f32.mrf.mxu0
      %v528 = vadd.f32 %v247, %v527
      %v529 = vpop.f32.mrf.mxu0
      %530 = vmatprep.mubr.f32.mxu0 0.0
      %531 = vmatmul.mubr.f32.gmra.mxu0 %v263
      %v532 = vpop.f32.mrf.mxu0
      %v533 = vadd.f32 %v247, %v532
      %v534 = vpop.f32.mrf.mxu0
      %535 = vmatprep.mubr.f32.mxu0 0.0
      %536 = vmatmul.mubr.f32.gmra.mxu0 %v266
      %v537 = vpop.f32.mrf.mxu0
      %v538 = vadd.f32 %v247, %v537
      %v539 = vpop.f32.mrf.mxu0
      %540 = vmatprep.mubr.f32.mxu0 0.0
      %541 = vmatmul.mubr.f32.gmra.mxu0 %v269
      %v542 = vpop.f32.mrf.mxu0
      %v543 = vadd.f32 %v247, %v542
      %v544 = vpop.f32.mrf.mxu0
      %545 = vmatprep.mubr.f32.mxu0 0.0
      %546 = vmatmul.mubr.f32.gmra.mxu0 %v272
      %v547 = vpop.f32.mrf.mxu0
      %v548 = vadd.f32 %v247, %v547
      %v549 = vpop.f32.mrf.mxu0
      %550 = vmatprep.mubr.f32.mxu0 0.0
      %551 = vmatmul.mubr.f32.gmra.mxu0 %v275
      %v552 = vpop.f32.mrf.mxu0
      %v553 = vadd.f32 %v247, %v552
      %v554 = vpop.f32.mrf.mxu0
      %555 = vmatprep.mubr.f32.mxu0 0.0
      %556 = vmatmul.mubr.f32.gmra.mxu0 %v278
      %v557 = vpop.f32.mrf.mxu0
      %v558 = vadd.f32 %v247, %v557
      %v559 = vpop.f32.mrf.mxu0
      %560 = vmatprep.mubr.f32.mxu0 0.0
      %561 = vmatmul.mubr.f32.gmra.mxu0 %v281
      %v562 = vpop.f32.mrf.mxu0
      %v563 = vadd.f32 %v247, %v562
      %v564 = vpop.f32.mrf.mxu0
      %565 = vmatprep.mubr.f32.mxu0 0.0
      %566 = vmatmul.mubr.f32.gmra.mxu0 %v284
      %v567 = vpop.f32.mrf.mxu0
      %v568 = vadd.f32 %v247, %v567
      %v569 = vpop.f32.mrf.mxu0
      %570 = vmatprep.mubr.f32.mxu0 0.0
      %571 = vmatmul.mubr.f32.gmra.mxu0 %v287
      %v572 = vpop.f32.mrf.mxu0
      %v573 = vadd.f32 %v247, %v572
      %v574 = vpop.f32.mrf.mxu0
      %575 = vmatprep.mubr.f32.mxu0 0.0
      %576 = vmatmul.mubr.f32.gmra.mxu0 %v290
      %v577 = vpop.f32.mrf.mxu0
      %v578 = vadd.f32 %v247, %v577
      %v579 = vpop.f32.mrf.mxu0
      %580 = vmatprep.mubr.f32.mxu0 0.0
      %581 = vmatmul.mubr.f32.gmra.mxu0 %v293
      %v582 = vpop.f32.mrf.mxu0
      %v583 = vadd.f32 %v247, %v582
      %v584 = vpop.f32.mrf.mxu0
      %585 = vmatprep.mubr.f32.mxu0 0.0
      %586 = vmatmul.mubr.f32.gmra.mxu0 %v296
      %v587 = vpop.f32.mrf.mxu0
      %v588 = vadd.f32 %v247, %v587
      %v589 = vpop.f32.mrf.mxu0
      %590 = vmatprep.mubr.f32.mxu0 0.0
      %591 = vmatmul.mubr.f32.gmra.mxu0 %v299
      %v592 = vpop.f32.mrf.mxu0
      %v593 = vadd.f32 %v247, %v592
      %v594 = vpop.f32.mrf.mxu0
      %595 = vmatprep.mubr.f32.mxu0 0.0
      %596 = vmatmul.mubr.f32.gmra.mxu0 %v302
      %v597 = vpop.f32.mrf.mxu0
      %v598 = vadd.f32 %v247, %v597
      %v599 = vpop.f32.mrf.mxu0
      %600 = vmatprep.mubr.f32.mxu0 0.0
      %601 = vmatmul.mubr.f32.gmra.mxu0 %v305
      %v602 = vpop.f32.mrf.mxu0
      %v603 = vadd.f32 %v247, %v602
      %v604 = vpop.f32.mrf.mxu0
      %605 = vmatprep.mubr.f32.mxu0 0.0
      %606 = vmatmul.mubr.f32.gmra.mxu0 %v308
      %v607 = vpop.f32.mrf.mxu0
      %v608 = vadd.f32 %v247, %v607
      %v609 = vpop.f32.mrf.mxu0
      %610 = vmatprep.mubr.f32.mxu0 0.0
      %611 = vmatmul.mubr.f32.gmra.mxu0 %v311
      %v612 = vpop.f32.mrf.mxu0
      %v613 = vadd.f32 %v247, %v612
      %v614 = vpop.f32.mrf.mxu0
      %615 = vmatprep.mubr.f32.mxu0 0.0
      %616 = vmatmul.mubr.f32.gmra.mxu0 %v314
      %v617 = vpop.f32.mrf.mxu0
      %v618 = vadd.f32 %v247, %v617
      %v619 = vpop.f32.mrf.mxu0
      %620 = vmatprep.mubr.f32.mxu0 0.0
      %621 = vmatmul.mubr.f32.gmra.mxu0 %v317
      %v622 = vpop.f32.mrf.mxu0
      %v623 = vadd.f32 %v247, %v622
      %v624 = vpop.f32.mrf.mxu0
      %625 = vmatprep.mubr.f32.mxu0 0.0
      %626 = vmatmul.mubr.f32.gmra.mxu0 %v320
      %v627 = vpop.f32.mrf.mxu0
      %v628 = vadd.f32 %v247, %v627
      %v629 = vpop.f32.mrf.mxu0
      %630 = vmatprep.mubr.f32.mxu0 0.0
      %631 = vmatmul.mubr.f32.gmra.mxu0 %v323
      %v632 = vpop.f32.mrf.mxu0
      %v633 = vadd.f32 %v247, %v632
      %v634 = vpop.f32.mrf.mxu0
      %635 = vmatprep.mubr.f32.mxu0 0.0
      %636 = vmatmul.mubr.f32.gmra.mxu0 %v326
      %v637 = vpop.f32.mrf.mxu0
      %v638 = vadd.f32 %v247, %v637
      %v639 = vpop.f32.mrf.mxu0
      %640 = vmatprep.mubr.f32.mxu0 0.0
      %641 = vmatmul.mubr.f32.gmra.mxu0 %v329
      %v642 = vpop.f32.mrf.mxu0
      %v643 = vadd.f32 %v247, %v642
      %v644 = vpop.f32.mrf.mxu0
      %645 = vmatprep.mubr.f32.mxu0 0.0
      %646 = vmatmul.mubr.f32.gmra.mxu0 %v332
      %v647 = vpop.f32.mrf.mxu0
      %v648 = vadd.f32 %v247, %v647
      %v649 = vpop.f32.mrf.mxu0
      %650 = vmatprep.mubr.f32.mxu0 0.0
      %651 = vmatmul.mubr.f32.gmra.mxu0 %v335
      %v652 = vpop.f32.mrf.mxu0
      %v653 = vadd.f32 %v247, %v652
      %v654 = vpop.f32.mrf.mxu0
      %655 = vmatprep.mubr.f32.mxu0 0.0
      %656 = vmatmul.mubr.f32.gmra.mxu0 %v338
      %v657 = vpop.f32.mrf.mxu0
      %v658 = vadd.f32 %v247, %v657
      %v659 = vpop.f32.mrf.mxu0
      %660 = vmatprep.mubr.f32.mxu0 0.0
      %661 = vmatmul.mubr.f32.gmra.mxu0 %v341
      %v662 = vpop.f32.mrf.mxu0
      %v663 = vadd.f32 %v247, %v662
      %v664 = vpop.f32.mrf.mxu0
      %665 = vmatprep.mubr.f32.mxu0 0.0
      %666 = vmatmul.mubr.f32.gmra.mxu0 %v344
      %v667 = vpop.f32.mrf.mxu0
      %v668 = vadd.f32 %v247, %v667
      %v669 = vpop.f32.mrf.mxu0
      %670 = vmatprep.mubr.f32.mxu0 0.0
      %671 = vmatmul.mubr.f32.gmra.mxu0 %v347
      %v672 = vpop.f32.mrf.mxu0
      %v673 = vadd.f32 %v247, %v672
      %v674 = vpop.f32.mrf.mxu0
      %675 = vmatprep.mubr.f32.mxu0 0.0
      %676 = vmatmul.mubr.f32.gmra.mxu0 %v350
      %v677 = vpop.f32.mrf.mxu0
      %v678 = vadd.f32 %v247, %v677
      %v679 = vpop.f32.mrf.mxu0
      %680 = vmatprep.mubr.f32.mxu0 0.0
      %681 = vmatmul.mubr.f32.gmra.mxu0 %v353
      %v682 = vpop.f32.mrf.mxu0
      %v683 = vadd.f32 %v247, %v682
      %v684 = vpop.f32.mrf.mxu0
      %685 = vmatprep.mubr.f32.mxu0 0.0
      %686 = vmatmul.mubr.f32.gmra.mxu0 %v356
      %v687 = vpop.f32.mrf.mxu0
      %v688 = vadd.f32 %v247, %v687
      %v689 = vpop.f32.mrf.mxu0
      %690 = vmatprep.mubr.f32.mxu0 0.0
      %691 = vmatmul.mubr.f32.gmra.mxu0 %v359
      %v692 = vpop.f32.mrf.mxu0
      %v693 = vadd.f32 %v247, %v692
      %v694 = vpop.f32.mrf.mxu0
      %695 = vmatprep.mubr.f32.mxu0 0.0
      %696 = vmatmul.mubr.f32.gmra.mxu0 %v362
      %v697 = vpop.f32.mrf.mxu0
      %v698 = vadd.f32 %v247, %v697
      %v699 = vpop.f32.mrf.mxu0
      %700 = vmatprep.mubr.f32.mxu0 0.0
      %701 = vmatmul.mubr.f32.gmra.mxu0 %v365
      %v702 = vpop.f32.mrf.mxu0
      %v703 = vadd.f32 %v247, %v702
      %v704 = vpop.f32.mrf.mxu0
      %705 = vmatprep.mubr.f32.mxu0 0.0
      %706 = vmatmul.mubr.f32.gmra.mxu0 %v368
      %v707 = vpop.f32.mrf.mxu0
      %v708 = vadd.f32 %v247, %v707
      %v709 = vpop.f32.mrf.mxu0
      %710 = vmatprep.mubr.f32.mxu0 0.0
      %711 = vmatmul.mubr.f32.gmra.mxu0 %v371
      %v712 = vpop.f32.mrf.mxu0
      %v713 = vadd.f32 %v247, %v712
      %v714 = vpop.f32.mrf.mxu0
      %715 = vmatprep.mubr.f32.mxu0 0.0
      %716 = vmatmul.mubr.f32.gmra.mxu0 %v374
      %v717 = vpop.f32.mrf.mxu0
      %v718 = vadd.f32 %v247, %v717
      %v719 = vpop.f32.mrf.mxu0
      %720 = vmatprep.mubr.f32.mxu0 0.0
      %721 = vmatmul.mubr.f32.gmra.mxu0 %v377
      %v722 = vpop.f32.mrf.mxu0
      %v723 = vadd.f32 %v247, %v722
      %v724 = vpop.f32.mrf.mxu0
      %725 = vmatprep.mubr.f32.mxu0 0.0
      %726 = vmatmul.mubr.f32.gmra.mxu0 %v380
      %v727 = vpop.f32.mrf.mxu0
      %v728 = vadd.f32 %v247, %v727
      %v729 = vpop.f32.mrf.mxu0
      %730 = vmatprep.mubr.f32.mxu0 0.0
      %731 = vmatmul.mubr.f32.gmra.mxu0 %v383
      %v732 = vpop.f32.mrf.mxu0
      %v733 = vadd.f32 %v247, %v732
      %v734 = vpop.f32.mrf.mxu0
      %735 = vmatprep.mubr.f32.mxu0 0.0
      %736 = vmatmul.mubr.f32.gmra.mxu0 %v386
      %v737 = vpop.f32.mrf.mxu0
      %v738 = vadd.f32 %v247, %v737
      %v739 = vpop.f32.mrf.mxu0
      %740 = vmatprep.mubr.f32.mxu0 0.0
      %741 = vmatmul.mubr.f32.gmra.mxu0 %v389
      %v742 = vpop.f32.mrf.mxu0
      %v743 = vadd.f32 %v247, %v742
      %v744 = vpop.f32.mrf.mxu0
      %745 = vmatprep.mubr.f32.mxu0 0.0
      %746 = vmatmul.mubr.f32.gmra.mxu0 %v392
      %v747 = vpop.f32.mrf.mxu0
      %v748 = vadd.f32 %v247, %v747
      %v749 = vpop.f32.mrf.mxu0
      %750 = vmatprep.mubr.f32.mxu0 0.0
      %751 = vmatmul.mubr.f32.gmra.mxu0 %v395
      %v752 = vpop.f32.mrf.mxu0
      %v753 = vadd.f32 %v247, %v752
      %v754 = vpop.f32.mrf.mxu0
      %755 = vmatprep.mubr.f32.mxu0 0.0
      %756 = vmatmul.mubr.f32.gmra.mxu0 %v398
      %v757 = vpop.f32.mrf.mxu0
      %v758 = vadd.f32 %v247, %v757
      %v759 = vpop.f32.mrf.mxu0
      %760 = vmatprep.mubr.f32.mxu0 0.0
      %761 = vmatmul.mubr.f32.gmra.mxu0 %v401
      %v762 = vpop.f32.mrf.mxu0
      %v763 = vadd.f32 %v247, %v762
      %v764 = vpop.f32.mrf.mxu0
      %765 = vmatprep.mubr.f32.mxu0 0.0
      %766 = vmatmul.mubr.f32.gmra.mxu0 %v404
      %v767 = vpop.f32.mrf.mxu0
      %v768 = vadd.f32 %v247, %v767
      %v769 = vpop.f32.mrf.mxu0
      %770 = vmatprep.mubr.f32.mxu0 0.0
      %771 = vmatmul.mubr.f32.gmra.mxu0 %v407
      %v772 = vpop.f32.mrf.mxu0
      %v773 = vadd.f32 %v247, %v772
      %v774 = vpop.f32.mrf.mxu0
      %775 = vmatprep.mubr.f32.mxu0 0.0
      %776 = vmatmul.mubr.f32.gmra.mxu0 %v410
      %v777 = vpop.f32.mrf.mxu0
      %v778 = vadd.f32 %v247, %v777
      %v779 = vpop.f32.mrf.mxu0
      %780 = vmatprep.mubr.f32.mxu0 0.0
      %781 = vmatmul.mubr.f32.gmra.mxu0 %v413
      %v782 = vpop.f32.mrf.mxu0
      %v783 = vadd.f32 %v247, %v782
      %v784 = vpop.f32.mrf.mxu0
      %785 = vmatprep.mubr.f32.mxu0 0.0
      %786 = vmatmul.mubr.f32.gmra.mxu0 %v416
      %v787 = vpop.f32.mrf.mxu0
      %v788 = vadd.f32 %v247, %v787
      %v789 = vpop.f32.mrf.mxu0
      %790 = vmatprep.mubr.f32.mxu0 0.0
      %791 = vmatmul.mubr.f32.gmra.mxu0 %v419
      %v792 = vpop.f32.mrf.mxu0
      %v793 = vadd.f32 %v247, %v792
      %v794 = vpop.f32.mrf.mxu0
      %795 = vmatprep.mubr.f32.mxu0 0.0
      %796 = vmatmul.mubr.f32.gmra.mxu0 %v422
      %v797 = vpop.f32.mrf.mxu0
      %v798 = vadd.f32 %v247, %v797
      %v799 = vpop.f32.mrf.mxu0
      %800 = vmatprep.mubr.f32.mxu0 0.0
      %801 = vmatmul.mubr.f32.gmra.mxu0 %v425
      %v802 = vpop.f32.mrf.mxu0
      %v803 = vadd.f32 %v247, %v802
      %v804 = vpop.f32.mrf.mxu0
      %805 = vmatprep.mubr.f32.mxu0 0.0
      %806 = vmatmul.mubr.f32.gmra.mxu0 %v428
      %v807 = vpop.f32.mrf.mxu0
      %v808 = vadd.f32 %v247, %v807
      %v809 = vpop.f32.mrf.mxu0
      %810 = vmatprep.mubr.f32.mxu0 0.0
      %811 = vmatmul.mubr.f32.gmra.mxu0 %v431
      %v812 = vpop.f32.mrf.mxu0
      %v813 = vadd.f32 %v247, %v812
      %v814 = vpop.f32.mrf.mxu0
      %815 = vmatprep.mubr.f32.mxu0 0.0
      %816 = vmatmul.mubr.f32.gmra.mxu0 %v434
      %v817 = vpop.f32.mrf.mxu0
      %v818 = vadd.f32 %v247, %v817
      %v819 = vpop.f32.mrf.mxu0
      %820 = vmatprep.mubr.f32.mxu0 0.0
      %821 = vmatmul.mubr.f32.gmra.mxu0 %v437
      %v822 = vpop.f32.mrf.mxu0
      %v823 = vadd.f32 %v247, %v822
      %v824 = vpop.f32.mrf.mxu0
      %825 = vmatprep.mubr.f32.mxu0 0.0
      %826 = vmatmul.mubr.f32.gmra.mxu0 %v440
      %v827 = vpop.f32.mrf.mxu0
      %v828 = vadd.f32 %v247, %v827
      %v829 = vpop.f32.mrf.mxu0
      %830 = vdwg.mxu0
      %v831 = vmin.f32 %v513, 0.0
      %v832 = vmin.f32 %v518, 0.0
      %v833 = vmin.f32 %v523, 0.0
      %v834 = vmin.f32 %v528, 0.0
      %v835 = vmin.f32 %v533, 0.0
      %v836 = vmin.f32 %v538, 0.0
      %v837 = vmin.f32 %v543, 0.0
      %v838 = vmin.f32 %v548, 0.0
      %v839 = vmin.f32 %v553, 0.0
      %v840 = vmin.f32 %v558, 0.0
      %v841 = vmin.f32 %v563, 0.0
      %v842 = vmin.f32 %v568, 0.0
      %v843 = vmin.f32 %v573, 0.0
      %v844 = vmin.f32 %v578, 0.0
      %v845 = vmin.f32 %v583, 0.0
      %v846 = vmin.f32 %v588, 0.0
      %v847 = vmin.f32 %v593, 0.0
      %v848 = vmin.f32 %v598, 0.0
      %v849 = vmin.f32 %v603, 0.0
      %v850 = vmin.f32 %v608, 0.0
      %v851 = vmin.f32 %v613, 0.0
      %v852 = vmin.f32 %v618, 0.0
      %v853 = vmin.f32 %v623, 0.0
      %v854 = vmin.f32 %v628, 0.0
      %v855 = vmin.f32 %v633, 0.0
      %v856 = vmin.f32 %v638, 0.0
      %v857 = vmin.f32 %v643, 0.0
      %v858 = vmin.f32 %v648, 0.0
      %v859 = vmin.f32 %v653, 0.0
      %v860 = vmin.f32 %v658, 0.0
      %v861 = vmin.f32 %v663, 0.0
      %v862 = vmin.f32 %v668, 0.0
      %v863 = vmin.f32 %v673, 0.0
      %v864 = vmin.f32 %v678, 0.0
      %v865 = vmin.f32 %v683, 0.0
      %v866 = vmin.f32 %v688, 0.0
      %v867 = vmin.f32 %v693, 0.0
      %v868 = vmin.f32 %v698, 0.0
      %v869 = vmin.f32 %v703, 0.0
      %v870 = vmin.f32 %v708, 0.0
      %v871 = vmin.f32 %v713, 0.0
      %v872 = vmin.f32 %v718, 0.0
      %v873 = vmin.f32 %v723, 0.0
      %v874 = vmin.f32 %v728, 0.0
      %v875 = vmin.f32 %v733, 0.0
      %v876 = vmin.f32 %v738, 0.0
      %v877 = vmin.f32 %v743, 0.0
      %v878 = vmin.f32 %v748, 0.0
      %v879 = vmin.f32 %v753, 0.0
      %v880 = vmin.f32 %v758, 0.0
      %v881 = vmin.f32 %v763, 0.0
      %v882 = vmin.f32 %v768, 0.0
      %v883 = vmin.f32 %v773, 0.0
      %v884 = vmin.f32 %v778, 0.0
      %v885 = vmin.f32 %v783, 0.0
      %v886 = vmin.f32 %v788, 0.0
      %v887 = vmin.f32 %v793, 0.0
      %v888 = vmin.f32 %v798, 0.0
      %v889 = vmin.f32 %v803, 0.0
      %v890 = vmin.f32 %v808, 0.0
      %v891 = vmin.f32 %v813, 0.0
      %v892 = vmin.f32 %v818, 0.0
      %v893 = vmin.f32 %v823, 0.0
      %v894 = vmin.f32 %v828, 0.0
      %v895 = vmul.f32 %v831, 1.442695
      %v896 = vpow.pop %v895
      %v897 = vmul.f32 %v832, 1.442695
      %v898 = vpow.pop %v897
      %v899 = vmul.f32 %v833, 1.442695
      %v900 = vpow.pop %v899
      %v901 = vmul.f32 %v834, 1.442695
      %v902 = vpow.pop %v901
      %v903 = vmul.f32 %v835, 1.442695
      %v904 = vpow.pop %v903
      %v905 = vmul.f32 %v836, 1.442695
      %v906 = vpow.pop %v905
      %v907 = vmul.f32 %v837, 1.442695
      %v908 = vpow.pop %v907
      %v909 = vmul.f32 %v838, 1.442695
      %v910 = vpow.pop %v909
      %v911 = vmul.f32 %v839, 1.442695
      %v912 = vpow.pop %v911
      %v913 = vmul.f32 %v840, 1.442695
      %v914 = vpow.pop %v913
      %v915 = vmul.f32 %v841, 1.442695
      %v916 = vpow.pop %v915
      %v917 = vmul.f32 %v842, 1.442695
      %v918 = vpow.pop %v917
      %v919 = vmul.f32 %v843, 1.442695
      %v920 = vpow.pop %v919
      %v921 = vmul.f32 %v844, 1.442695
      %v922 = vpow.pop %v921
      %v923 = vmul.f32 %v845, 1.442695
      %v924 = vpow.pop %v923
      %v925 = vmul.f32 %v846, 1.442695
      %v926 = vpow.pop %v925
      %v927 = vmul.f32 %v847, 1.442695
      %v928 = vpow.pop %v927
      %v929 = vmul.f32 %v848, 1.442695
      %v930 = vpow.pop %v929
      %v931 = vmul.f32 %v849, 1.442695
      %v932 = vpow.pop %v931
      %v933 = vmul.f32 %v850, 1.442695
      %v934 = vpow.pop %v933
      %v935 = vmul.f32 %v851, 1.442695
      %v936 = vpow.pop %v935
      %v937 = vmul.f32 %v852, 1.442695
      %v938 = vpow.pop %v937
      %v939 = vmul.f32 %v853, 1.442695
      %v940 = vpow.pop %v939
      %v941 = vmul.f32 %v854, 1.442695
      %v942 = vpow.pop %v941
      %v943 = vmul.f32 %v855, 1.442695
      %v944 = vpow.pop %v943
      %v945 = vmul.f32 %v856, 1.442695
      %v946 = vpow.pop %v945
      %v947 = vmul.f32 %v857, 1.442695
      %v948 = vpow.pop %v947
      %v949 = vmul.f32 %v858, 1.442695
      %v950 = vpow.pop %v949
      %v951 = vmul.f32 %v859, 1.442695
      %v952 = vpow.pop %v951
      %v953 = vmul.f32 %v860, 1.442695
      %v954 = vpow.pop %v953
      %v955 = vmul.f32 %v861, 1.442695
      %v956 = vpow.pop %v955
      %v957 = vmul.f32 %v862, 1.442695
      %v958 = vpow.pop %v957
      %v959 = vmul.f32 %v863, 1.442695
      %v960 = vpow.pop %v959
      %v961 = vmul.f32 %v864, 1.442695
      %v962 = vpow.pop %v961
      %v963 = vmul.f32 %v865, 1.442695
      %v964 = vpow.pop %v963
      %v965 = vmul.f32 %v866, 1.442695
      %v966 = vpow.pop %v965
      %v967 = vmul.f32 %v867, 1.442695
      %v968 = vpow.pop %v967
      %v969 = vmul.f32 %v868, 1.442695
      %v970 = vpow.pop %v969
      %v971 = vmul.f32 %v869, 1.442695
      %v972 = vpow.pop %v971
      %v973 = vmul.f32 %v870, 1.442695
      %v974 = vpow.pop %v973
      %v975 = vmul.f32 %v871, 1.442695
      %v976 = vpow.pop %v975
      %v977 = vmul.f32 %v872, 1.442695
      %v978 = vpow.pop %v977
      %v979 = vmul.f32 %v873, 1.442695
      %v980 = vpow.pop %v979
      %v981 = vmul.f32 %v874, 1.442695
      %v982 = vpow.pop %v981
      %v983 = vmul.f32 %v875, 1.442695
      %v984 = vpow.pop %v983
      %v985 = vmul.f32 %v876, 1.442695
      %v986 = vpow.pop %v985
      %v987 = vmul.f32 %v877, 1.442695
      %v988 = vpow.pop %v987
      %v989 = vmul.f32 %v878, 1.442695
      %v990 = vpow.pop %v989
      %v991 = vmul.f32 %v879, 1.442695
      %v992 = vpow.pop %v991
      %v993 = vmul.f32 %v880, 1.442695
      %v994 = vpow.pop %v993
      %v995 = vmul.f32 %v881, 1.442695
      %v996 = vpow.pop %v995
      %v997 = vmul.f32 %v882, 1.442695
      %v998 = vpow.pop %v997
      %v999 = vmul.f32 %v883, 1.442695
      %v1000 = vpow.pop %v999
      %v1001 = vmul.f32 %v884, 1.442695
      %v1002 = vpow.pop %v1001
      %v1003 = vmul.f32 %v885, 1.442695
      %v1004 = vpow.pop %v1003
      %v1005 = vmul.f32 %v886, 1.442695
      %v1006 = vpow.pop %v1005
      %v1007 = vmul.f32 %v887, 1.442695
      %v1008 = vpow.pop %v1007
      %v1009 = vmul.f32 %v888, 1.442695
      %v1010 = vpow.pop %v1009
      %v1011 = vmul.f32 %v889, 1.442695
      %v1012 = vpow.pop %v1011
      %v1013 = vmul.f32 %v890, 1.442695
      %v1014 = vpow.pop %v1013
      %v1015 = vmul.f32 %v891, 1.442695
      %v1016 = vpow.pop %v1015
      %v1017 = vmul.f32 %v892, 1.442695
      %v1018 = vpow.pop %v1017
      %v1019 = vmul.f32 %v893, 1.442695
      %v1020 = vpow.pop %v1019
      %v1021 = vmul.f32 %v894, 1.442695
      %v1022 = vpow.pop %v1021
      %v1023 = vsub.f32 %v896, 1.0
      %v1024 = vsub.f32 %v898, 1.0
      %v1025 = vsub.f32 %v900, 1.0
      %v1026 = vsub.f32 %v902, 1.0
      %v1027 = vsub.f32 %v904, 1.0
      %v1028 = vsub.f32 %v906, 1.0
      %v1029 = vsub.f32 %v908, 1.0
      %v1030 = vsub.f32 %v910, 1.0
      %v1031 = vsub.f32 %v912, 1.0
      %v1032 = vsub.f32 %v914, 1.0
      %v1033 = vsub.f32 %v916, 1.0
      %v1034 = vsub.f32 %v918, 1.0
      %v1035 = vsub.f32 %v920, 1.0
      %v1036 = vsub.f32 %v922, 1.0
      %v1037 = vsub.f32 %v924, 1.0
      %v1038 = vsub.f32 %v926, 1.0
      %v1039 = vsub.f32 %v928, 1.0
      %v1040 = vsub.f32 %v930, 1.0
      %v1041 = vsub.f32 %v932, 1.0
      %v1042 = vsub.f32 %v934, 1.0
      %v1043 = vsub.f32 %v936, 1.0
      %v1044 = vsub.f32 %v938, 1.0
      %v1045 = vsub.f32 %v940, 1.0
      %v1046 = vsub.f32 %v942, 1.0
      %v1047 = vsub.f32 %v944, 1.0
      %v1048 = vsub.f32 %v946, 1.0
      %v1049 = vsub.f32 %v948, 1.0
      %v1050 = vsub.f32 %v950, 1.0
      %v1051 = vsub.f32 %v952, 1.0
      %v1052 = vsub.f32 %v954, 1.0
      %v1053 = vsub.f32 %v956, 1.0
      %v1054 = vsub.f32 %v958, 1.0
      %v1055 = vsub.f32 %v960, 1.0
      %v1056 = vsub.f32 %v962, 1.0
      %v1057 = vsub.f32 %v964, 1.0
      %v1058 = vsub.f32 %v966, 1.0
      %v1059 = vsub.f32 %v968, 1.0
      %v1060 = vsub.f32 %v970, 1.0
      %v1061 = vsub.f32 %v972, 1.0
      %v1062 = vsub.f32 %v974, 1.0
      %v1063 = vsub.f32 %v976, 1.0
      %v1064 = vsub.f32 %v978, 1.0
      %v1065 = vsub.f32 %v980, 1.0
      %v1066 = vsub.f32 %v982, 1.0
      %v1067 = vsub.f32 %v984, 1.0
      %v1068 = vsub.f32 %v986, 1.0
      %v1069 = vsub.f32 %v988, 1.0
      %v1070 = vsub.f32 %v990, 1.0
      %v1071 = vsub.f32 %v992, 1.0
      %v1072 = vsub.f32 %v994, 1.0
      %v1073 = vsub.f32 %v996, 1.0
      %v1074 = vsub.f32 %v998, 1.0
      %v1075 = vsub.f32 %v1000, 1.0
      %v1076 = vsub.f32 %v1002, 1.0
      %v1077 = vsub.f32 %v1004, 1.0
      %v1078 = vsub.f32 %v1006, 1.0
      %v1079 = vsub.f32 %v1008, 1.0
      %v1080 = vsub.f32 %v1010, 1.0
      %v1081 = vsub.f32 %v1012, 1.0
      %v1082 = vsub.f32 %v1014, 1.0
      %v1083 = vsub.f32 %v1016, 1.0
      %v1084 = vsub.f32 %v1018, 1.0
      %v1085 = vsub.f32 %v1020, 1.0
      %v1086 = vsub.f32 %v1022, 1.0
      %vm1087 = vcmp.gt.f32.partialorder %v513, 0.0
      %vm1088 = vcmp.gt.f32.partialorder %v518, 0.0
      %vm1089 = vcmp.gt.f32.partialorder %v523, 0.0
      %vm1090 = vcmp.gt.f32.partialorder %v528, 0.0
      %vm1091 = vcmp.gt.f32.partialorder %v533, 0.0
      %vm1092 = vcmp.gt.f32.partialorder %v538, 0.0
      %vm1093 = vcmp.gt.f32.partialorder %v543, 0.0
      %vm1094 = vcmp.gt.f32.partialorder %v548, 0.0
      %vm1095 = vcmp.gt.f32.partialorder %v553, 0.0
      %vm1096 = vcmp.gt.f32.partialorder %v558, 0.0
      %vm1097 = vcmp.gt.f32.partialorder %v563, 0.0
      %vm1098 = vcmp.gt.f32.partialorder %v568, 0.0
      %vm1099 = vcmp.gt.f32.partialorder %v573, 0.0
      %vm1100 = vcmp.gt.f32.partialorder %v578, 0.0
      %vm1101 = vcmp.gt.f32.partialorder %v583, 0.0
      %vm1102 = vcmp.gt.f32.partialorder %v588, 0.0
      %vm1103 = vcmp.gt.f32.partialorder %v593, 0.0
      %vm1104 = vcmp.gt.f32.partialorder %v598, 0.0
      %vm1105 = vcmp.gt.f32.partialorder %v603, 0.0
      %vm1106 = vcmp.gt.f32.partialorder %v608, 0.0
      %vm1107 = vcmp.gt.f32.partialorder %v613, 0.0
      %vm1108 = vcmp.gt.f32.partialorder %v618, 0.0
      %vm1109 = vcmp.gt.f32.partialorder %v623, 0.0
      %vm1110 = vcmp.gt.f32.partialorder %v628, 0.0
      %vm1111 = vcmp.gt.f32.partialorder %v633, 0.0
      %vm1112 = vcmp.gt.f32.partialorder %v638, 0.0
      %vm1113 = vcmp.gt.f32.partialorder %v643, 0.0
      %vm1114 = vcmp.gt.f32.partialorder %v648, 0.0
      %vm1115 = vcmp.gt.f32.partialorder %v653, 0.0
      %vm1116 = vcmp.gt.f32.partialorder %v658, 0.0
      %vm1117 = vcmp.gt.f32.partialorder %v663, 0.0
      %vm1118 = vcmp.gt.f32.partialorder %v668, 0.0
      %vm1119 = vcmp.gt.f32.partialorder %v673, 0.0
      %vm1120 = vcmp.gt.f32.partialorder %v678, 0.0
      %vm1121 = vcmp.gt.f32.partialorder %v683, 0.0
      %vm1122 = vcmp.gt.f32.partialorder %v688, 0.0
      %vm1123 = vcmp.gt.f32.partialorder %v693, 0.0
      %vm1124 = vcmp.gt.f32.partialorder %v698, 0.0
      %vm1125 = vcmp.gt.f32.partialorder %v703, 0.0
      %vm1126 = vcmp.gt.f32.partialorder %v708, 0.0
      %vm1127 = vcmp.gt.f32.partialorder %v713, 0.0
      %vm1128 = vcmp.gt.f32.partialorder %v718, 0.0
      %vm1129 = vcmp.gt.f32.partialorder %v723, 0.0
      %vm1130 = vcmp.gt.f32.partialorder %v728, 0.0
      %vm1131 = vcmp.gt.f32.partialorder %v733, 0.0
      %vm1132 = vcmp.gt.f32.partialorder %v738, 0.0
      %vm1133 = vcmp.gt.f32.partialorder %v743, 0.0
      %vm1134 = vcmp.gt.f32.partialorder %v748, 0.0
      %vm1135 = vcmp.gt.f32.partialorder %v753, 0.0
      %vm1136 = vcmp.gt.f32.partialorder %v758, 0.0
      %vm1137 = vcmp.gt.f32.partialorder %v763, 0.0
      %vm1138 = vcmp.gt.f32.partialorder %v768, 0.0
      %vm1139 = vcmp.gt.f32.partialorder %v773, 0.0
      %vm1140 = vcmp.gt.f32.partialorder %v778, 0.0
      %vm1141 = vcmp.gt.f32.partialorder %v783, 0.0
      %vm1142 = vcmp.gt.f32.partialorder %v788, 0.0
      %vm1143 = vcmp.gt.f32.partialorder %v793, 0.0
      %vm1144 = vcmp.gt.f32.partialorder %v798, 0.0
      %vm1145 = vcmp.gt.f32.partialorder %v803, 0.0
      %vm1146 = vcmp.gt.f32.partialorder %v808, 0.0
      %vm1147 = vcmp.gt.f32.partialorder %v813, 0.0
      %vm1148 = vcmp.gt.f32.partialorder %v818, 0.0
      %vm1149 = vcmp.gt.f32.partialorder %v823, 0.0
      %vm1150 = vcmp.gt.f32.partialorder %v828, 0.0
      %v1151 = vsel %vm1087, %v513, %v1023
      %v1152 = vsel %vm1088, %v518, %v1024
      %v1153 = vsel %vm1089, %v523, %v1025
      %v1154 = vsel %vm1090, %v528, %v1026
      %v1155 = vsel %vm1091, %v533, %v1027
      %v1156 = vsel %vm1092, %v538, %v1028
      %v1157 = vsel %vm1093, %v543, %v1029
      %v1158 = vsel %vm1094, %v548, %v1030
      %v1159 = vsel %vm1095, %v553, %v1031
      %v1160 = vsel %vm1096, %v558, %v1032
      %v1161 = vsel %vm1097, %v563, %v1033
      %v1162 = vsel %vm1098, %v568, %v1034
      %v1163 = vsel %vm1099, %v573, %v1035
      %v1164 = vsel %vm1100, %v578, %v1036
      %v1165 = vsel %vm1101, %v583, %v1037
      %v1166 = vsel %vm1102, %v588, %v1038
      %v1167 = vsel %vm1103, %v593, %v1039
      %v1168 = vsel %vm1104, %v598, %v1040
      %v1169 = vsel %vm1105, %v603, %v1041
      %v1170 = vsel %vm1106, %v608, %v1042
      %v1171 = vsel %vm1107, %v613, %v1043
      %v1172 = vsel %vm1108, %v618, %v1044
      %v1173 = vsel %vm1109, %v623, %v1045
      %v1174 = vsel %vm1110, %v628, %v1046
      %v1175 = vsel %vm1111, %v633, %v1047
      %v1176 = vsel %vm1112, %v638, %v1048
      %v1177 = vsel %vm1113, %v643, %v1049
      %v1178 = vsel %vm1114, %v648, %v1050
      %v1179 = vsel %vm1115, %v653, %v1051
      %v1180 = vsel %vm1116, %v658, %v1052
      %v1181 = vsel %vm1117, %v663, %v1053
      %v1182 = vsel %vm1118, %v668, %v1054
      %v1183 = vsel %vm1119, %v673, %v1055
      %v1184 = vsel %vm1120, %v678, %v1056
      %v1185 = vsel %vm1121, %v683, %v1057
      %v1186 = vsel %vm1122, %v688, %v1058
      %v1187 = vsel %vm1123, %v693, %v1059
      %v1188 = vsel %vm1124, %v698, %v1060
      %v1189 = vsel %vm1125, %v703, %v1061
      %v1190 = vsel %vm1126, %v708, %v1062
      %v1191 = vsel %vm1127, %v713, %v1063
      %v1192 = vsel %vm1128, %v718, %v1064
      %v1193 = vsel %vm1129, %v723, %v1065
      %v1194 = vsel %vm1130, %v728, %v1066
      %v1195 = vsel %vm1131, %v733, %v1067
      %v1196 = vsel %vm1132, %v738, %v1068
      %v1197 = vsel %vm1133, %v743, %v1069
      %v1198 = vsel %vm1134, %v748, %v1070
      %v1199 = vsel %vm1135, %v753, %v1071
      %v1200 = vsel %vm1136, %v758, %v1072
      %v1201 = vsel %vm1137, %v763, %v1073
      %v1202 = vsel %vm1138, %v768, %v1074
      %v1203 = vsel %vm1139, %v773, %v1075
      %v1204 = vsel %vm1140, %v778, %v1076
      %v1205 = vsel %vm1141, %v783, %v1077
      %v1206 = vsel %vm1142, %v788, %v1078
      %v1207 = vsel %vm1143, %v793, %v1079
      %v1208 = vsel %vm1144, %v798, %v1080
      %v1209 = vsel %vm1145, %v803, %v1081
      %v1210 = vsel %vm1146, %v808, %v1082
      %v1211 = vsel %vm1147, %v813, %v1083
      %v1212 = vsel %vm1148, %v818, %v1084
      %v1213 = vsel %vm1149, %v823, %v1085
      %v1214 = vsel %vm1150, %v828, %v1086
      %vm1215 = vcmask 523264
      %1216 = vst.msk [vmem:[%s172] sm:$0xff] %vm1215, %v1151
      %1217 = vst.msk [vmem:[%s172 + $0x8] sm:$0xff] %vm1215, %v1152
      %1218 = vst.msk [vmem:[%s172 + $0x10] sm:$0xff] %vm1215, %v1153
      %1219 = vst.msk [vmem:[%s172 + $0x18] sm:$0xff] %vm1215, %v1154
      %1220 = vst.msk [vmem:[%s172 + $0x20] sm:$0xff] %vm1215, %v1155
      %1221 = vst.msk [vmem:[%s172 + $0x28] sm:$0xff] %vm1215, %v1156
      %1222 = vst.msk [vmem:[%s172 + $0x30] sm:$0xff] %vm1215, %v1157
      %1223 = vst.msk [vmem:[%s172 + $0x38] sm:$0xff] %vm1215, %v1158
      %1224 = vst.msk [vmem:[%s172 + $0x40] sm:$0xff] %vm1215, %v1159
      %1225 = vst.msk [vmem:[%s172 + $0x48] sm:$0xff] %vm1215, %v1160
      %1226 = vst.msk [vmem:[%s172 + $0x50] sm:$0xff] %vm1215, %v1161
      %1227 = vst.msk [vmem:[%s172 + $0x58] sm:$0xff] %vm1215, %v1162
      %1228 = vst.msk [vmem:[%s172 + $0x60] sm:$0xff] %vm1215, %v1163
      %1229 = vst.msk [vmem:[%s172 + $0x68] sm:$0xff] %vm1215, %v1164
      %1230 = vst.msk [vmem:[%s172 + $0x70] sm:$0xff] %vm1215, %v1165
      %1231 = vst.msk [vmem:[%s172 + $0x78] sm:$0xff] %vm1215, %v1166
      %1232 = vst.msk [vmem:[%s172 + $0x80] sm:$0xff] %vm1215, %v1167
      %1233 = vst.msk [vmem:[%s172 + $0x88] sm:$0xff] %vm1215, %v1168
      %1234 = vst.msk [vmem:[%s172 + $0x90] sm:$0xff] %vm1215, %v1169
      %1235 = vst.msk [vmem:[%s172 + $0x98] sm:$0xff] %vm1215, %v1170
      %1236 = vst.msk [vmem:[%s172 + $0xa0] sm:$0xff] %vm1215, %v1171
      %1237 = vst.msk [vmem:[%s172 + $0xa8] sm:$0xff] %vm1215, %v1172
      %1238 = vst.msk [vmem:[%s172 + $0xb0] sm:$0xff] %vm1215, %v1173
      %1239 = vst.msk [vmem:[%s172 + $0xb8] sm:$0xff] %vm1215, %v1174
      %1240 = vst.msk [vmem:[%s172 + $0xc0] sm:$0xff] %vm1215, %v1175
      %1241 = vst.msk [vmem:[%s172 + $0xc8] sm:$0xff] %vm1215, %v1176
      %1242 = vst.msk [vmem:[%s172 + $0xd0] sm:$0xff] %vm1215, %v1177
      %1243 = vst.msk [vmem:[%s172 + $0xd8] sm:$0xff] %vm1215, %v1178
      %1244 = vst.msk [vmem:[%s172 + $0xe0] sm:$0xff] %vm1215, %v1179
      %1245 = vst.msk [vmem:[%s172 + $0xe8] sm:$0xff] %vm1215, %v1180
      %1246 = vst.msk [vmem:[%s172 + $0xf0] sm:$0xff] %vm1215, %v1181
      %1247 = vst.msk [vmem:[%s172 + $0xf8] sm:$0xff] %vm1215, %v1182
      %1248 = vst.msk [vmem:[%s172 + $0x100] sm:$0xff] %vm1215, %v1183
      %1249 = vst.msk [vmem:[%s172 + $0x108] sm:$0xff] %vm1215, %v1184
      %1250 = vst.msk [vmem:[%s172 + $0x110] sm:$0xff] %vm1215, %v1185
      %1251 = vst.msk [vmem:[%s172 + $0x118] sm:$0xff] %vm1215, %v1186
      %1252 = vst.msk [vmem:[%s172 + $0x120] sm:$0xff] %vm1215, %v1187
      %1253 = vst.msk [vmem:[%s172 + $0x128] sm:$0xff] %vm1215, %v1188
      %1254 = vst.msk [vmem:[%s172 + $0x130] sm:$0xff] %vm1215, %v1189
      %1255 = vst.msk [vmem:[%s172 + $0x138] sm:$0xff] %vm1215, %v1190
      %1256 = vst.msk [vmem:[%s172 + $0x140] sm:$0xff] %vm1215, %v1191
      %1257 = vst.msk [vmem:[%s172 + $0x148] sm:$0xff] %vm1215, %v1192
      %1258 = vst.msk [vmem:[%s172 + $0x150] sm:$0xff] %vm1215, %v1193
      %1259 = vst.msk [vmem:[%s172 + $0x158] sm:$0xff] %vm1215, %v1194
      %1260 = vst.msk [vmem:[%s172 + $0x160] sm:$0xff] %vm1215, %v1195
      %1261 = vst.msk [vmem:[%s172 + $0x168] sm:$0xff] %vm1215, %v1196
      %1262 = vst.msk [vmem:[%s172 + $0x170] sm:$0xff] %vm1215, %v1197
      %1263 = vst.msk [vmem:[%s172 + $0x178] sm:$0xff] %vm1215, %v1198
      %1264 = vst.msk [vmem:[%s172 + $0x180] sm:$0xff] %vm1215, %v1199
      %1265 = vst.msk [vmem:[%s172 + $0x188] sm:$0xff] %vm1215, %v1200
      %1266 = vst.msk [vmem:[%s172 + $0x190] sm:$0xff] %vm1215, %v1201
      %1267 = vst.msk [vmem:[%s172 + $0x198] sm:$0xff] %vm1215, %v1202
      %1268 = vst.msk [vmem:[%s172 + $0x1a0] sm:$0xff] %vm1215, %v1203
      %1269 = vst.msk [vmem:[%s172 + $0x1a8] sm:$0xff] %vm1215, %v1204
      %1270 = vst.msk [vmem:[%s172 + $0x1b0] sm:$0xff] %vm1215, %v1205
      %1271 = vst.msk [vmem:[%s172 + $0x1b8] sm:$0xff] %vm1215, %v1206
      %1272 = vst.msk [vmem:[%s172 + $0x1c0] sm:$0xff] %vm1215, %v1207
      %1273 = vst.msk [vmem:[%s172 + $0x1c8] sm:$0xff] %vm1215, %v1208
      %1274 = vst.msk [vmem:[%s172 + $0x1d0] sm:$0xff] %vm1215, %v1209
      %1275 = vst.msk [vmem:[%s172 + $0x1d8] sm:$0xff] %vm1215, %v1210
      %1276 = vst.msk [vmem:[%s172 + $0x1e0] sm:$0xff] %vm1215, %v1211
      %1277 = vst.msk [vmem:[%s172 + $0x1e8] sm:$0xff] %vm1215, %v1212
      %1278 = vst.msk [vmem:[%s172 + $0x1f0] sm:$0xff] %vm1215, %v1213
      %1279 = vst.msk [vmem:[%s172 + $0x1f8] sm:$0xff] %vm1215, %v1214
      %s1280 = smul.u32 64, %s14
      %p1281 = scmp.lt.s32.totalorder %s1280, 255
      %s1282 = scalar_select %p1281, %s1280, 255
      %s1283 = smul.addr %s1282, 8
      %s1284 = scalar_lea.vmem %s3, %s1283
      // Predicated region
      $region33: #{image_encoder_bg.5} parent=31 // pred_check
        %p1285 = pneg %p100
      $region34: #{image_encoder_bg.5} parent=31 // pred_check_branch
        %1287 = sbr.rel (%p1285) target = $region36
      $region35: #{image_encoder_bg.5} parent=31 // pred_region
        %s1288 = smul.u32 64, %s14
      $region36: #{image_encoder_bg.5} parent=31 // pred_fallthru
        _
    $region32: #{image_encoder_bg.5} parent=5 // pred_fallthru
      _
    %p1289 = scmp.le.s32.totalorder 2, %s9
    // Predicated region
    $region37: #{image_encoder_bg.5} parent=5 // pred_check
      %p1290 = pneg %p1289
    $region38: #{image_encoder_bg.5} parent=5 // pred_check_branch
      %1292 = sbr.rel (%p1290) target = $region40
    $region39: #{image_encoder_bg.5} parent=5 // pred_region
      %s1293 = ssub.s32 %s9, 2
      // Predicated region
      $region41: #{image_encoder_bg.5} parent=39 // pred_check
        %p1294 = pneg %p106
      $region42: #{image_encoder_bg.5} parent=39 // pred_check_branch
        %1296 = sbr.rel (%p1294) target = $region44
      $region43: #{image_encoder_bg.5} parent=39 // pred_region
        %s1297 = smul.u32 64, %s15
        %p1298 = scmp.lt.s32.totalorder %s1297, 255
        %s1299 = scalar_select %p1298, %s1297, 255
        %s1300 = smul.addr %s1299, 8
        %s1301 = scalar_lea.vmem %s3, %s1300
      $region44: #{image_encoder_bg.5} parent=39 // pred_fallthru
        _
    $region40: #{image_encoder_bg.5} parent=5 // pred_fallthru
      _
  $region6: #{image_encoder_bg.5} parent=0 // loop_footer
    %s13 = sadd.s32 1, %s9
  $region7: #{image_encoder_bg.5} parent=0 // loop_footer_branch
    %8 = sbr.rel target = $region3
  $region8: #{image_encoder_bg.5} parent=0 // loop_exit
    _

// kernel: image_encoder_bg.6
$region0: #{image_encoder_bg.6}
  #allocation0 [shape = 'u32[]', space=smem, size = 0x4, offset = 0x4, fixed_abs, tag = 'smem constant byte address 0x4 - core index']
  #allocation1 [shape = 'u32[144,128]{1,0:T(1,128)}', space=vmem, size = 0x12000, scoped, tag = 'internal scratch']
  %s0 = inlined_call_operand.vmem [shape: f32[512,576], index: 0, kind: input, shape index: {}]
  %s1 = inlined_call_operand.vmem [shape: f32[576,64], index: 1, kind: input, shape index: {}]
  %s2 = inlined_call_operand.vmem [shape: f32[1,64], index: 2, kind: input, shape index: {}]
  %s3 = inlined_call_operand.vmem [shape: f32[512,64], index: 3, kind: output, shape index: {}]
  %s4 = sld [smem:[#allocation0]]
  $region22: #{image_encoder_bg.6} parent=0
    _
  %s6 = ssub.s32 1, %s4
  %s7 = scalar_select 0, %s6, %s4
  // Predicated region
  $region2: #{image_encoder_bg.6} parent=0 // pred_check
    _
  $region3: #{image_encoder_bg.6} parent=0 // pred_check_branch
    %9 = sbr.rel (0) target = $region5
  $region4: #{image_encoder_bg.6} parent=0 // pred_region
    _
  $region5: #{image_encoder_bg.6} parent=0 // pred_fallthru
    _
  // Predicated region
  $region6: #{image_encoder_bg.6} parent=0 // pred_check
    _
  $region7: #{image_encoder_bg.6} parent=0 // pred_check_branch
    %11 = sbr.rel (0) target = $region9
  $region8: #{image_encoder_bg.6} parent=0 // pred_region
    _
  $region9: #{image_encoder_bg.6} parent=0 // pred_fallthru
    _
  // Predicated region
  $region10: #{image_encoder_bg.6} parent=0 // pred_check
    _
  $region11: #{image_encoder_bg.6} parent=0 // pred_check_branch
    %13 = sbr.rel (0) target = $region13
  $region12: #{image_encoder_bg.6} parent=0 // pred_region
    _
  $region13: #{image_encoder_bg.6} parent=0 // pred_fallthru
    _
  %v14 = vld [vmem:[%s0] sm:$0xff]
  %v15 = vld [vmem:[%s0 + $0x8] sm:$0xff]
  %v16 = vld [vmem:[%s0 + $0x10] sm:$0xff]
  %v17 = vld [vmem:[%s0 + $0x18] sm:$0xff]
  %v18 = vld [vmem:[%s0 + $0x20] sm:$0xff]
  %v19 = vld [vmem:[%s0 + $0x28] sm:$0xff]
  %v20 = vld [vmem:[%s0 + $0x30] sm:$0xff]
  %v21 = vld [vmem:[%s0 + $0x38] sm:$0xff]
  %v22 = vld [vmem:[%s0 + $0x40] sm:$0xff]
  %v23 = vld [vmem:[%s0 + $0x48] sm:$0xff]
  %v24 = vld [vmem:[%s0 + $0x50] sm:$0xff]
  %v25 = vld [vmem:[%s0 + $0x58] sm:$0xff]
  %v26 = vld [vmem:[%s0 + $0x60] sm:$0xff]
  %v27 = vld [vmem:[%s0 + $0x68] sm:$0xff]
  %v28 = vld [vmem:[%s0 + $0x70] sm:$0xff]
  %v29 = vld [vmem:[%s0 + $0x78] sm:$0xff]
  %v30 = vld [vmem:[%s0 + $0x80] sm:$0xff]
  %v31 = vld [vmem:[%s0 + $0x88] sm:$0xff]
  %v32 = vld [vmem:[%s0 + $0x90] sm:$0xff]
  %v33 = vld [vmem:[%s0 + $0x98] sm:$0xff]
  %v34 = vld [vmem:[%s0 + $0xa0] sm:$0xff]
  %v35 = vld [vmem:[%s0 + $0xa8] sm:$0xff]
  %v36 = vld [vmem:[%s0 + $0xb0] sm:$0xff]
  %v37 = vld [vmem:[%s0 + $0xb8] sm:$0xff]
  %v38 = vld [vmem:[%s0 + $0xc0] sm:$0xff]
  %v39 = vld [vmem:[%s0 + $0xc8] sm:$0xff]
  %v40 = vld [vmem:[%s0 + $0xd0] sm:$0xff]
  %v41 = vld [vmem:[%s0 + $0xd8] sm:$0xff]
  %v42 = vld [vmem:[%s0 + $0xe0] sm:$0xff]
  %v43 = vld [vmem:[%s0 + $0xe8] sm:$0xff]
  %v44 = vld [vmem:[%s0 + $0xf0] sm:$0xff]
  %v45 = vld [vmem:[%s0 + $0xf8] sm:$0xff]
  %v46 = vld [vmem:[%s0 + $0x100] sm:$0xff]
  %v47 = vld [vmem:[%s0 + $0x108] sm:$0xff]
  %v48 = vld [vmem:[%s0 + $0x110] sm:$0xff]
  %v49 = vld [vmem:[%s0 + $0x118] sm:$0xff]
  %v50 = vld [vmem:[%s0 + $0x120] sm:$0xff]
  %v51 = vld [vmem:[%s0 + $0x128] sm:$0xff]
  %v52 = vld [vmem:[%s0 + $0x130] sm:$0xff]
  %v53 = vld [vmem:[%s0 + $0x138] sm:$0xff]
  %v54 = vld [vmem:[%s0 + $0x140] sm:$0xff]
  %v55 = vld [vmem:[%s0 + $0x148] sm:$0xff]
  %v56 = vld [vmem:[%s0 + $0x150] sm:$0xff]
  %v57 = vld [vmem:[%s0 + $0x158] sm:$0xff]
  %v58 = vld [vmem:[%s0 + $0x160] sm:$0xff]
  %v59 = vld [vmem:[%s0 + $0x168] sm:$0xff]
  %v60 = vld [vmem:[%s0 + $0x170] sm:$0xff]
  %v61 = vld [vmem:[%s0 + $0x178] sm:$0xff]
  %v62 = vld [vmem:[%s0 + $0x180] sm:$0xff]
  %v63 = vld [vmem:[%s0 + $0x188] sm:$0xff]
  %v64 = vld [vmem:[%s0 + $0x190] sm:$0xff]
  %v65 = vld [vmem:[%s0 + $0x198] sm:$0xff]
  %v66 = vld [vmem:[%s0 + $0x1a0] sm:$0xff]
  %v67 = vld [vmem:[%s0 + $0x1a8] sm:$0xff]
  %v68 = vld [vmem:[%s0 + $0x1b0] sm:$0xff]
  %v69 = vld [vmem:[%s0 + $0x1b8] sm:$0xff]
  %v70 = vld [vmem:[%s0 + $0x1c0] sm:$0xff]
  %v71 = vld [vmem:[%s0 + $0x1c8] sm:$0xff]
  %v72 = vld [vmem:[%s0 + $0x1d0] sm:$0xff]
  %v73 = vld [vmem:[%s0 + $0x1d8] sm:$0xff]
  %v74 = vld [vmem:[%s0 + $0x1e0] sm:$0xff]
  %v75 = vld [vmem:[%s0 + $0x1e8] sm:$0xff]
  %v76 = vld [vmem:[%s0 + $0x1f0] sm:$0xff]
  %v77 = vld [vmem:[%s0 + $0x1f8] sm:$0xff]
  %v78 = vld [vmem:[%s0 + $0x200] sm:$0xff]
  %v79 = vld [vmem:[%s0 + $0x208] sm:$0xff]
  %v80 = vld [vmem:[%s0 + $0x210] sm:$0xff]
  %v81 = vld [vmem:[%s0 + $0x218] sm:$0xff]
  %v82 = vld [vmem:[%s0 + $0x220] sm:$0xff]
  %v83 = vld [vmem:[%s0 + $0x228] sm:$0xff]
  %v84 = vld [vmem:[%s0 + $0x230] sm:$0xff]
  %v85 = vld [vmem:[%s0 + $0x238] sm:$0xff]
  %v86 = vld [vmem:[%s0 + $0x240] sm:$0xff]
  %v87 = vld [vmem:[%s0 + $0x248] sm:$0xff]
  %v88 = vld [vmem:[%s0 + $0x250] sm:$0xff]
  %v89 = vld [vmem:[%s0 + $0x258] sm:$0xff]
  %v90 = vld [vmem:[%s0 + $0x260] sm:$0xff]
  %v91 = vld [vmem:[%s0 + $0x268] sm:$0xff]
  %v92 = vld [vmem:[%s0 + $0x270] sm:$0xff]
  %v93 = vld [vmem:[%s0 + $0x278] sm:$0xff]
  %v94 = vld [vmem:[%s0 + $0x280] sm:$0xff]
  %v95 = vld [vmem:[%s0 + $0x288] sm:$0xff]
  %v96 = vld [vmem:[%s0 + $0x290] sm:$0xff]
  %v97 = vld [vmem:[%s0 + $0x298] sm:$0xff]
  %v98 = vld [vmem:[%s0 + $0x2a0] sm:$0xff]
  %v99 = vld [vmem:[%s0 + $0x2a8] sm:$0xff]
  %v100 = vld [vmem:[%s0 + $0x2b0] sm:$0xff]
  %v101 = vld [vmem:[%s0 + $0x2b8] sm:$0xff]
  %v102 = vld [vmem:[%s0 + $0x2c0] sm:$0xff]
  %v103 = vld [vmem:[%s0 + $0x2c8] sm:$0xff]
  %v104 = vld [vmem:[%s0 + $0x2d0] sm:$0xff]
  %v105 = vld [vmem:[%s0 + $0x2d8] sm:$0xff]
  %v106 = vld [vmem:[%s0 + $0x2e0] sm:$0xff]
  %v107 = vld [vmem:[%s0 + $0x2e8] sm:$0xff]
  %v108 = vld [vmem:[%s0 + $0x2f0] sm:$0xff]
  %v109 = vld [vmem:[%s0 + $0x2f8] sm:$0xff]
  %v110 = vld [vmem:[%s0 + $0x300] sm:$0xff]
  %v111 = vld [vmem:[%s0 + $0x308] sm:$0xff]
  %v112 = vld [vmem:[%s0 + $0x310] sm:$0xff]
  %v113 = vld [vmem:[%s0 + $0x318] sm:$0xff]
  %v114 = vld [vmem:[%s0 + $0x320] sm:$0xff]
  %v115 = vld [vmem:[%s0 + $0x328] sm:$0xff]
  %v116 = vld [vmem:[%s0 + $0x330] sm:$0xff]
  %v117 = vld [vmem:[%s0 + $0x338] sm:$0xff]
  %v118 = vld [vmem:[%s0 + $0x340] sm:$0xff]
  %v119 = vld [vmem:[%s0 + $0x348] sm:$0xff]
  %v120 = vld [vmem:[%s0 + $0x350] sm:$0xff]
  %v121 = vld [vmem:[%s0 + $0x358] sm:$0xff]
  %v122 = vld [vmem:[%s0 + $0x360] sm:$0xff]
  %v123 = vld [vmem:[%s0 + $0x368] sm:$0xff]
  %v124 = vld [vmem:[%s0 + $0x370] sm:$0xff]
  %v125 = vld [vmem:[%s0 + $0x378] sm:$0xff]
  %v126 = vld [vmem:[%s0 + $0x380] sm:$0xff]
  %v127 = vld [vmem:[%s0 + $0x388] sm:$0xff]
  %v128 = vld [vmem:[%s0 + $0x390] sm:$0xff]
  %v129 = vld [vmem:[%s0 + $0x398] sm:$0xff]
  %v130 = vld [vmem:[%s0 + $0x3a0] sm:$0xff]
  %v131 = vld [vmem:[%s0 + $0x3a8] sm:$0xff]
  %v132 = vld [vmem:[%s0 + $0x3b0] sm:$0xff]
  %v133 = vld [vmem:[%s0 + $0x3b8] sm:$0xff]
  %v134 = vld [vmem:[%s0 + $0x3c0] sm:$0xff]
  %v135 = vld [vmem:[%s0 + $0x3c8] sm:$0xff]
  %v136 = vld [vmem:[%s0 + $0x3d0] sm:$0xff]
  %v137 = vld [vmem:[%s0 + $0x3d8] sm:$0xff]
  %v138 = vld [vmem:[%s0 + $0x3e0] sm:$0xff]
  %v139 = vld [vmem:[%s0 + $0x3e8] sm:$0xff]
  %v140 = vld [vmem:[%s0 + $0x3f0] sm:$0xff]
  %v141 = vld [vmem:[%s0 + $0x3f8] sm:$0xff]
  %v142 = vld [vmem:[%s0 + $0x400] sm:$0xff]
  %v143 = vld [vmem:[%s0 + $0x408] sm:$0xff]
  %v144 = vld [vmem:[%s0 + $0x410] sm:$0xff]
  %v145 = vld [vmem:[%s0 + $0x418] sm:$0xff]
  %v146 = vld [vmem:[%s0 + $0x420] sm:$0xff]
  %v147 = vld [vmem:[%s0 + $0x428] sm:$0xff]
  %v148 = vld [vmem:[%s0 + $0x430] sm:$0xff]
  %v149 = vld [vmem:[%s0 + $0x438] sm:$0xff]
  %v150 = vld [vmem:[%s0 + $0x440] sm:$0xff]
  %v151 = vld [vmem:[%s0 + $0x448] sm:$0xff]
  %v152 = vld [vmem:[%s0 + $0x450] sm:$0xff]
  %v153 = vld [vmem:[%s0 + $0x458] sm:$0xff]
  %v154 = vld [vmem:[%s0 + $0x460] sm:$0xff]
  %v155 = vld [vmem:[%s0 + $0x468] sm:$0xff]
  %v156 = vld [vmem:[%s0 + $0x470] sm:$0xff]
  %v157 = vld [vmem:[%s0 + $0x478] sm:$0xff]
  %v158 = vld [vmem:[%s0 + $0x480] sm:$0xff]
  %v159 = vld [vmem:[%s0 + $0x488] sm:$0xff]
  %v160 = vld [vmem:[%s0 + $0x490] sm:$0xff]
  %v161 = vld [vmem:[%s0 + $0x498] sm:$0xff]
  %v162 = vld [vmem:[%s0 + $0x4a0] sm:$0xff]
  %v163 = vld [vmem:[%s0 + $0x4a8] sm:$0xff]
  %v164 = vld [vmem:[%s0 + $0x4b0] sm:$0xff]
  %v165 = vld [vmem:[%s0 + $0x4b8] sm:$0xff]
  %v166 = vld [vmem:[%s0 + $0x4c0] sm:$0xff]
  %v167 = vld [vmem:[%s0 + $0x4c8] sm:$0xff]
  %v168 = vld [vmem:[%s0 + $0x4d0] sm:$0xff]
  %v169 = vld [vmem:[%s0 + $0x4d8] sm:$0xff]
  %v170 = vld [vmem:[%s0 + $0x4e0] sm:$0xff]
  %v171 = vld [vmem:[%s0 + $0x4e8] sm:$0xff]
  %v172 = vld [vmem:[%s0 + $0x4f0] sm:$0xff]
  %v173 = vld [vmem:[%s0 + $0x4f8] sm:$0xff]
  %v174 = vld [vmem:[%s0 + $0x500] sm:$0xff]
  %v175 = vld [vmem:[%s0 + $0x508] sm:$0xff]
  %v176 = vld [vmem:[%s0 + $0x510] sm:$0xff]
  %v177 = vld [vmem:[%s0 + $0x518] sm:$0xff]
  %v178 = vld [vmem:[%s0 + $0x520] sm:$0xff]
  %v179 = vld [vmem:[%s0 + $0x528] sm:$0xff]
  %v180 = vld [vmem:[%s0 + $0x530] sm:$0xff]
  %v181 = vld [vmem:[%s0 + $0x538] sm:$0xff]
  %v182 = vld [vmem:[%s0 + $0x540] sm:$0xff]
  %v183 = vld [vmem:[%s0 + $0x548] sm:$0xff]
  %v184 = vld [vmem:[%s0 + $0x550] sm:$0xff]
  %v185 = vld [vmem:[%s0 + $0x558] sm:$0xff]
  %v186 = vld [vmem:[%s0 + $0x560] sm:$0xff]
  %v187 = vld [vmem:[%s0 + $0x568] sm:$0xff]
  %v188 = vld [vmem:[%s0 + $0x570] sm:$0xff]
  %v189 = vld [vmem:[%s0 + $0x578] sm:$0xff]
  %v190 = vld [vmem:[%s0 + $0x580] sm:$0xff]
  %v191 = vld [vmem:[%s0 + $0x588] sm:$0xff]
  %v192 = vld [vmem:[%s0 + $0x590] sm:$0xff]
  %v193 = vld [vmem:[%s0 + $0x598] sm:$0xff]
  %v194 = vld [vmem:[%s0 + $0x5a0] sm:$0xff]
  %v195 = vld [vmem:[%s0 + $0x5a8] sm:$0xff]
  %v196 = vld [vmem:[%s0 + $0x5b0] sm:$0xff]
  %v197 = vld [vmem:[%s0 + $0x5b8] sm:$0xff]
  %v198 = vld [vmem:[%s0 + $0x5c0] sm:$0xff]
  %v199 = vld [vmem:[%s0 + $0x5c8] sm:$0xff]
  %v200 = vld [vmem:[%s0 + $0x5d0] sm:$0xff]
  %v201 = vld [vmem:[%s0 + $0x5d8] sm:$0xff]
  %v202 = vld [vmem:[%s0 + $0x5e0] sm:$0xff]
  %v203 = vld [vmem:[%s0 + $0x5e8] sm:$0xff]
  %v204 = vld [vmem:[%s0 + $0x5f0] sm:$0xff]
  %v205 = vld [vmem:[%s0 + $0x5f8] sm:$0xff]
  %v206 = vld [vmem:[%s0 + $0x600] sm:$0xff]
  %v207 = vld [vmem:[%s0 + $0x608] sm:$0xff]
  %v208 = vld [vmem:[%s0 + $0x610] sm:$0xff]
  %v209 = vld [vmem:[%s0 + $0x618] sm:$0xff]
  %v210 = vld [vmem:[%s0 + $0x620] sm:$0xff]
  %v211 = vld [vmem:[%s0 + $0x628] sm:$0xff]
  %v212 = vld [vmem:[%s0 + $0x630] sm:$0xff]
  %v213 = vld [vmem:[%s0 + $0x638] sm:$0xff]
  %v214 = vld [vmem:[%s0 + $0x640] sm:$0xff]
  %v215 = vld [vmem:[%s0 + $0x648] sm:$0xff]
  %v216 = vld [vmem:[%s0 + $0x650] sm:$0xff]
  %v217 = vld [vmem:[%s0 + $0x658] sm:$0xff]
  %v218 = vld [vmem:[%s0 + $0x660] sm:$0xff]
  %v219 = vld [vmem:[%s0 + $0x668] sm:$0xff]
  %v220 = vld [vmem:[%s0 + $0x670] sm:$0xff]
  %v221 = vld [vmem:[%s0 + $0x678] sm:$0xff]
  %v222 = vld [vmem:[%s0 + $0x680] sm:$0xff]
  %v223 = vld [vmem:[%s0 + $0x688] sm:$0xff]
  %v224 = vld [vmem:[%s0 + $0x690] sm:$0xff]
  %v225 = vld [vmem:[%s0 + $0x698] sm:$0xff]
  %v226 = vld [vmem:[%s0 + $0x6a0] sm:$0xff]
  %v227 = vld [vmem:[%s0 + $0x6a8] sm:$0xff]
  %v228 = vld [vmem:[%s0 + $0x6b0] sm:$0xff]
  %v229 = vld [vmem:[%s0 + $0x6b8] sm:$0xff]
  %v230 = vld [vmem:[%s0 + $0x6c0] sm:$0xff]
  %v231 = vld [vmem:[%s0 + $0x6c8] sm:$0xff]
  %v232 = vld [vmem:[%s0 + $0x6d0] sm:$0xff]
  %v233 = vld [vmem:[%s0 + $0x6d8] sm:$0xff]
  %v234 = vld [vmem:[%s0 + $0x6e0] sm:$0xff]
  %v235 = vld [vmem:[%s0 + $0x6e8] sm:$0xff]
  %v236 = vld [vmem:[%s0 + $0x6f0] sm:$0xff]
  %v237 = vld [vmem:[%s0 + $0x6f8] sm:$0xff]
  %v238 = vld [vmem:[%s0 + $0x700] sm:$0xff]
  %v239 = vld [vmem:[%s0 + $0x708] sm:$0xff]
  %v240 = vld [vmem:[%s0 + $0x710] sm:$0xff]
  %v241 = vld [vmem:[%s0 + $0x718] sm:$0xff]
  %v242 = vld [vmem:[%s0 + $0x720] sm:$0xff]
  %v243 = vld [vmem:[%s0 + $0x728] sm:$0xff]
  %v244 = vld [vmem:[%s0 + $0x730] sm:$0xff]
  %v245 = vld [vmem:[%s0 + $0x738] sm:$0xff]
  %v246 = vld [vmem:[%s0 + $0x740] sm:$0xff]
  %v247 = vld [vmem:[%s0 + $0x748] sm:$0xff]
  %v248 = vld [vmem:[%s0 + $0x750] sm:$0xff]
  %v249 = vld [vmem:[%s0 + $0x758] sm:$0xff]
  %v250 = vld [vmem:[%s0 + $0x760] sm:$0xff]
  %v251 = vld [vmem:[%s0 + $0x768] sm:$0xff]
  %v252 = vld [vmem:[%s0 + $0x770] sm:$0xff]
  %v253 = vld [vmem:[%s0 + $0x778] sm:$0xff]
  %v254 = vld [vmem:[%s0 + $0x780] sm:$0xff]
  %v255 = vld [vmem:[%s0 + $0x788] sm:$0xff]
  %v256 = vld [vmem:[%s0 + $0x790] sm:$0xff]
  %v257 = vld [vmem:[%s0 + $0x798] sm:$0xff]
  %v258 = vld [vmem:[%s0 + $0x7a0] sm:$0xff]
  %v259 = vld [vmem:[%s0 + $0x7a8] sm:$0xff]
  %v260 = vld [vmem:[%s0 + $0x7b0] sm:$0xff]
  %v261 = vld [vmem:[%s0 + $0x7b8] sm:$0xff]
  %v262 = vld [vmem:[%s0 + $0x7c0] sm:$0xff]
  %v263 = vld [vmem:[%s0 + $0x7c8] sm:$0xff]
  %v264 = vld [vmem:[%s0 + $0x7d0] sm:$0xff]
  %v265 = vld [vmem:[%s0 + $0x7d8] sm:$0xff]
  %v266 = vld [vmem:[%s0 + $0x7e0] sm:$0xff]
  %v267 = vld [vmem:[%s0 + $0x7e8] sm:$0xff]
  %v268 = vld [vmem:[%s0 + $0x7f0] sm:$0xff]
  %v269 = vld [vmem:[%s0 + $0x7f8] sm:$0xff]
  %v270 = vld [vmem:[%s0 + $0x800] sm:$0xff]
  %v271 = vld [vmem:[%s0 + $0x808] sm:$0xff]
  %v272 = vld [vmem:[%s0 + $0x810] sm:$0xff]
  %v273 = vld [vmem:[%s0 + $0x818] sm:$0xff]
  %v274 = vld [vmem:[%s0 + $0x820] sm:$0xff]
  %v275 = vld [vmem:[%s0 + $0x828] sm:$0xff]
  %v276 = vld [vmem:[%s0 + $0x830] sm:$0xff]
  %v277 = vld [vmem:[%s0 + $0x838] sm:$0xff]
  %v278 = vld [vmem:[%s0 + $0x840] sm:$0xff]
  %v279 = vld [vmem:[%s0 + $0x848] sm:$0xff]
  %v280 = vld [vmem:[%s0 + $0x850] sm:$0xff]
  %v281 = vld [vmem:[%s0 + $0x858] sm:$0xff]
  %v282 = vld [vmem:[%s0 + $0x860] sm:$0xff]
  %v283 = vld [vmem:[%s0 + $0x868] sm:$0xff]
  %v284 = vld [vmem:[%s0 + $0x870] sm:$0xff]
  %v285 = vld [vmem:[%s0 + $0x878] sm:$0xff]
  %v286 = vld [vmem:[%s0 + $0x880] sm:$0xff]
  %v287 = vld [vmem:[%s0 + $0x888] sm:$0xff]
  %v288 = vld [vmem:[%s0 + $0x890] sm:$0xff]
  %v289 = vld [vmem:[%s0 + $0x898] sm:$0xff]
  %v290 = vld [vmem:[%s0 + $0x8a0] sm:$0xff]
  %v291 = vld [vmem:[%s0 + $0x8a8] sm:$0xff]
  %v292 = vld [vmem:[%s0 + $0x8b0] sm:$0xff]
  %v293 = vld [vmem:[%s0 + $0x8b8] sm:$0xff]
  %v294 = vld [vmem:[%s0 + $0x8c0] sm:$0xff]
  %v295 = vld [vmem:[%s0 + $0x8c8] sm:$0xff]
  %v296 = vld [vmem:[%s0 + $0x8d0] sm:$0xff]
  %v297 = vld [vmem:[%s0 + $0x8d8] sm:$0xff]
  %v298 = vld [vmem:[%s0 + $0x8e0] sm:$0xff]
  %v299 = vld [vmem:[%s0 + $0x8e8] sm:$0xff]
  %v300 = vld [vmem:[%s0 + $0x8f0] sm:$0xff]
  %v301 = vld [vmem:[%s0 + $0x8f8] sm:$0xff]
  %v302 = vld [vmem:[%s0 + $0x900] sm:$0xff]
  %v303 = vld [vmem:[%s0 + $0x908] sm:$0xff]
  %v304 = vld [vmem:[%s0 + $0x910] sm:$0xff]
  %v305 = vld [vmem:[%s0 + $0x918] sm:$0xff]
  %v306 = vld [vmem:[%s0 + $0x920] sm:$0xff]
  %v307 = vld [vmem:[%s0 + $0x928] sm:$0xff]
  %v308 = vld [vmem:[%s0 + $0x930] sm:$0xff]
  %v309 = vld [vmem:[%s0 + $0x938] sm:$0xff]
  %v310 = vld [vmem:[%s0 + $0x940] sm:$0xff]
  %v311 = vld [vmem:[%s0 + $0x948] sm:$0xff]
  %v312 = vld [vmem:[%s0 + $0x950] sm:$0xff]
  %v313 = vld [vmem:[%s0 + $0x958] sm:$0xff]
  %v314 = vld [vmem:[%s0 + $0x960] sm:$0xff]
  %v315 = vld [vmem:[%s0 + $0x968] sm:$0xff]
  %v316 = vld [vmem:[%s0 + $0x970] sm:$0xff]
  %v317 = vld [vmem:[%s0 + $0x978] sm:$0xff]
  %v318 = vld [vmem:[%s0 + $0x980] sm:$0xff]
  %v319 = vld [vmem:[%s0 + $0x988] sm:$0xff]
  %v320 = vld [vmem:[%s0 + $0x990] sm:$0xff]
  %v321 = vld [vmem:[%s0 + $0x998] sm:$0xff]
  %v322 = vld [vmem:[%s0 + $0x9a0] sm:$0xff]
  %v323 = vld [vmem:[%s0 + $0x9a8] sm:$0xff]
  %v324 = vld [vmem:[%s0 + $0x9b0] sm:$0xff]
  %v325 = vld [vmem:[%s0 + $0x9b8] sm:$0xff]
  %v326 = vld [vmem:[%s0 + $0x9c0] sm:$0xff]
  %v327 = vld [vmem:[%s0 + $0x9c8] sm:$0xff]
  %v328 = vld [vmem:[%s0 + $0x9d0] sm:$0xff]
  %v329 = vld [vmem:[%s0 + $0x9d8] sm:$0xff]
  %v330 = vld [vmem:[%s0 + $0x9e0] sm:$0xff]
  %v331 = vld [vmem:[%s0 + $0x9e8] sm:$0xff]
  %v332 = vld [vmem:[%s0 + $0x9f0] sm:$0xff]
  %v333 = vld [vmem:[%s0 + $0x9f8] sm:$0xff]
  %v334 = vld [vmem:[%s1] sm:$0xff]
  %v335 = vld [vmem:[%s1 + $0x8] sm:$0xff]
  %v336 = vld [vmem:[%s1 + $0x10] sm:$0xff]
  %v337 = vld [vmem:[%s1 + $0x18] sm:$0xff]
  %v338 = vld [vmem:[%s1 + $0x20] sm:$0xff]
  %v339 = vld [vmem:[%s1 + $0x28] sm:$0xff]
  %v340 = vld [vmem:[%s1 + $0x30] sm:$0xff]
  %v341 = vld [vmem:[%s1 + $0x38] sm:$0xff]
  %v342 = vld [vmem:[%s1 + $0x40] sm:$0xff]
  %v343 = vld [vmem:[%s1 + $0x48] sm:$0xff]
  %v344 = vld [vmem:[%s1 + $0x50] sm:$0xff]
  %v345 = vld [vmem:[%s1 + $0x58] sm:$0xff]
  %v346 = vld [vmem:[%s1 + $0x60] sm:$0xff]
  %v347 = vld [vmem:[%s1 + $0x68] sm:$0xff]
  %v348 = vld [vmem:[%s1 + $0x70] sm:$0xff]
  %v349 = vld [vmem:[%s1 + $0x78] sm:$0xff]
  %v350 = vld [vmem:[%s1 + $0x80] sm:$0xff]
  %v351 = vld [vmem:[%s1 + $0x88] sm:$0xff]
  %v352 = vld [vmem:[%s1 + $0x90] sm:$0xff]
  %v353 = vld [vmem:[%s1 + $0x98] sm:$0xff]
  %v354 = vld [vmem:[%s1 + $0xa0] sm:$0xff]
  %v355 = vld [vmem:[%s1 + $0xa8] sm:$0xff]
  %v356 = vld [vmem:[%s1 + $0xb0] sm:$0xff]
  %v357 = vld [vmem:[%s1 + $0xb8] sm:$0xff]
  %v358 = vld [vmem:[%s1 + $0xc0] sm:$0xff]
  %v359 = vld [vmem:[%s1 + $0xc8] sm:$0xff]
  %v360 = vld [vmem:[%s1 + $0xd0] sm:$0xff]
  %v361 = vld [vmem:[%s1 + $0xd8] sm:$0xff]
  %v362 = vld [vmem:[%s1 + $0xe0] sm:$0xff]
  %v363 = vld [vmem:[%s1 + $0xe8] sm:$0xff]
  %v364 = vld [vmem:[%s1 + $0xf0] sm:$0xff]
  %v365 = vld [vmem:[%s1 + $0xf8] sm:$0xff]
  %v366 = vld [vmem:[%s1 + $0x100] sm:$0xff]
  %v367 = vld [vmem:[%s1 + $0x108] sm:$0xff]
  %v368 = vld [vmem:[%s1 + $0x110] sm:$0xff]
  %v369 = vld [vmem:[%s1 + $0x118] sm:$0xff]
  %v370 = vld [vmem:[%s1 + $0x120] sm:$0xff]
  %v371 = vld [vmem:[%s1 + $0x128] sm:$0xff]
  %v372 = vld [vmem:[%s1 + $0x130] sm:$0xff]
  %v373 = vld [vmem:[%s1 + $0x138] sm:$0xff]
  %v374 = vld [vmem:[%s1 + $0x140] sm:$0xff]
  %v375 = vld [vmem:[%s1 + $0x148] sm:$0xff]
  %v376 = vld [vmem:[%s1 + $0x150] sm:$0xff]
  %v377 = vld [vmem:[%s1 + $0x158] sm:$0xff]
  %v378 = vld [vmem:[%s1 + $0x160] sm:$0xff]
  %v379 = vld [vmem:[%s1 + $0x168] sm:$0xff]
  %v380 = vld [vmem:[%s1 + $0x170] sm:$0xff]
  %v381 = vld [vmem:[%s1 + $0x178] sm:$0xff]
  %v382 = vld [vmem:[%s1 + $0x180] sm:$0xff]
  %v383 = vld [vmem:[%s1 + $0x188] sm:$0xff]
  %v384 = vld [vmem:[%s1 + $0x190] sm:$0xff]
  %v385 = vld [vmem:[%s1 + $0x198] sm:$0xff]
  %v386 = vld [vmem:[%s1 + $0x1a0] sm:$0xff]
  %v387 = vld [vmem:[%s1 + $0x1a8] sm:$0xff]
  %v388 = vld [vmem:[%s1 + $0x1b0] sm:$0xff]
  %v389 = vld [vmem:[%s1 + $0x1b8] sm:$0xff]
  %v390 = vld [vmem:[%s1 + $0x1c0] sm:$0xff]
  %v391 = vld [vmem:[%s1 + $0x1c8] sm:$0xff]
  %v392 = vld [vmem:[%s1 + $0x1d0] sm:$0xff]
  %v393 = vld [vmem:[%s1 + $0x1d8] sm:$0xff]
  %v394 = vld [vmem:[%s1 + $0x1e0] sm:$0xff]
  %v395 = vld [vmem:[%s1 + $0x1e8] sm:$0xff]
  %v396 = vld [vmem:[%s1 + $0x1f0] sm:$0xff]
  %v397 = vld [vmem:[%s1 + $0x1f8] sm:$0xff]
  %v398 = vld [vmem:[%s1 + $0x200] sm:$0xff]
  %v399 = vld [vmem:[%s1 + $0x208] sm:$0xff]
  %v400 = vld [vmem:[%s1 + $0x210] sm:$0xff]
  %v401 = vld [vmem:[%s1 + $0x218] sm:$0xff]
  %v402 = vld [vmem:[%s1 + $0x220] sm:$0xff]
  %v403 = vld [vmem:[%s1 + $0x228] sm:$0xff]
  %v404 = vld [vmem:[%s1 + $0x230] sm:$0xff]
  %v405 = vld [vmem:[%s1 + $0x238] sm:$0xff]
  %v406 = vld [vmem:[%s2] sm:$0x1]
  %v408 = vlaneseq
  %v409 = vshrl.u32 %v408, 7
  %v410 = vsub.s32 0, %v409
  %v411 = vrot.slane %v406, %v410
  %vm413 = vcmask 523264
  %v415 = vsel %vm413, %v18, 0
  %v418 = vsel %vm413, %v23, 0
  %v421 = vsel %vm413, %v28, 0
  %v424 = vsel %vm413, %v33, 0
  %v427 = vsel %vm413, %v38, 0
  %v430 = vsel %vm413, %v43, 0
  %v433 = vsel %vm413, %v48, 0
  %v436 = vsel %vm413, %v53, 0
  %v439 = vsel %vm413, %v58, 0
  %v442 = vsel %vm413, %v63, 0
  %v445 = vsel %vm413, %v68, 0
  %v448 = vsel %vm413, %v73, 0
  %v451 = vsel %vm413, %v78, 0
  %v454 = vsel %vm413, %v83, 0
  %v457 = vsel %vm413, %v88, 0
  %v460 = vsel %vm413, %v93, 0
  %v463 = vsel %vm413, %v98, 0
  %v466 = vsel %vm413, %v103, 0
  %v469 = vsel %vm413, %v108, 0
  %v472 = vsel %vm413, %v113, 0
  %v475 = vsel %vm413, %v118, 0
  %v478 = vsel %vm413, %v123, 0
  %v481 = vsel %vm413, %v128, 0
  %v484 = vsel %vm413, %v133, 0
  %v487 = vsel %vm413, %v138, 0
  %v490 = vsel %vm413, %v143, 0
  %v493 = vsel %vm413, %v148, 0
  %v496 = vsel %vm413, %v153, 0
  %v499 = vsel %vm413, %v158, 0
  %v502 = vsel %vm413, %v163, 0
  %v505 = vsel %vm413, %v168, 0
  %v508 = vsel %vm413, %v173, 0
  %v511 = vsel %vm413, %v178, 0
  %v514 = vsel %vm413, %v183, 0
  %v517 = vsel %vm413, %v188, 0
  %v520 = vsel %vm413, %v193, 0
  %v523 = vsel %vm413, %v198, 0
  %v526 = vsel %vm413, %v203, 0
  %v529 = vsel %vm413, %v208, 0
  %v532 = vsel %vm413, %v213, 0
  %v535 = vsel %vm413, %v218, 0
  %v538 = vsel %vm413, %v223, 0
  %v541 = vsel %vm413, %v228, 0
  %v544 = vsel %vm413, %v233, 0
  %v547 = vsel %vm413, %v238, 0
  %v550 = vsel %vm413, %v243, 0
  %v553 = vsel %vm413, %v248, 0
  %v556 = vsel %vm413, %v253, 0
  %v559 = vsel %vm413, %v258, 0
  %v562 = vsel %vm413, %v263, 0
  %v565 = vsel %vm413, %v268, 0
  %v568 = vsel %vm413, %v273, 0
  %v571 = vsel %vm413, %v278, 0
  %v574 = vsel %vm413, %v283, 0
  %v577 = vsel %vm413, %v288, 0
  %v580 = vsel %vm413, %v293, 0
  %v583 = vsel %vm413, %v298, 0
  %v586 = vsel %vm413, %v303, 0
  %v589 = vsel %vm413, %v308, 0
  %v592 = vsel %vm413, %v313, 0
  %v595 = vsel %vm413, %v318, 0
  %v598 = vsel %vm413, %v323, 0
  %v601 = vsel %vm413, %v328, 0
  %v604 = vsel %vm413, %v333, 0
  %606 = vmatprep.subr.mxu0 0.0
  %607 = vmatpush1.msra.mxu0 %v349
  %608 = vmatprep.subr.mxu0 0.0
  %609 = vmatpush1.msra.mxu0 %v348
  %610 = vmatprep.subr.mxu0 0.0
  %611 = vmatpush1.msra.mxu0 %v347
  %612 = vmatprep.subr.mxu0 0.0
  %613 = vmatpush1.msra.mxu0 %v346
  %614 = vmatprep.subr.mxu0 0.0
  %615 = vmatpush1.msra.mxu0 %v345
  %616 = vmatprep.subr.mxu0 0.0
  %617 = vmatpush1.msra.mxu0 %v344
  %618 = vmatprep.subr.mxu0 0.0
  %619 = vmatpush1.msra.mxu0 %v343
  %620 = vmatprep.subr.mxu0 0.0
  %621 = vmatpush1.msra.mxu0 %v342
  %622 = vmatprep.subr.mxu0 0.0
  %623 = vmatpush1.msra.mxu0 %v341
  %624 = vmatprep.subr.mxu0 0.0
  %625 = vmatpush1.msra.mxu0 %v340
  %626 = vmatprep.subr.mxu0 0.0
  %627 = vmatpush1.msra.mxu0 %v339
  %628 = vmatprep.subr.mxu0 0.0
  %629 = vmatpush1.msra.mxu0 %v338
  %630 = vmatprep.subr.mxu0 0.0
  %631 = vmatpush1.msra.mxu0 %v337
  %632 = vmatprep.subr.mxu0 0.0
  %633 = vmatpush1.msra.mxu0 %v336
  %634 = vmatprep.subr.mxu0 0.0
  %635 = vmatpush1.msra.mxu0 %v335
  %636 = vmatprep.subr.mxu0 0.0
  %637 = vmatpush1.msra.mxu0 %v334
  %638 = vmatprep.subr.mxu0 0.0
  %639 = vmatpush2.msra.mxu0 %v365
  %640 = vmatprep.subr.mxu0 0.0
  %641 = vmatpush2.msra.mxu0 %v364
  %642 = vmatprep.subr.mxu0 0.0
  %643 = vmatpush2.msra.mxu0 %v363
  %644 = vmatprep.subr.mxu0 0.0
  %645 = vmatpush2.msra.mxu0 %v362
  %646 = vmatprep.subr.mxu0 0.0
  %647 = vmatpush2.msra.mxu0 %v361
  %648 = vmatprep.subr.mxu0 0.0
  %649 = vmatpush2.msra.mxu0 %v360
  %650 = vmatprep.subr.mxu0 0.0
  %651 = vmatpush2.msra.mxu0 %v359
  %652 = vmatprep.subr.mxu0 0.0
  %653 = vmatpush2.msra.mxu0 %v358
  %654 = vmatprep.subr.mxu0 0.0
  %655 = vmatpush2.msra.mxu0 %v357
  %656 = vmatprep.subr.mxu0 0.0
  %657 = vmatpush2.msra.mxu0 %v356
  %658 = vmatprep.subr.mxu0 0.0
  %659 = vmatpush2.msra.mxu0 %v355
  %660 = vmatprep.subr.mxu0 0.0
  %661 = vmatpush2.msra.mxu0 %v354
  %662 = vmatprep.subr.mxu0 0.0
  %663 = vmatpush2.msra.mxu0 %v353
  %664 = vmatprep.subr.mxu0 0.0
  %665 = vmatpush2.msra.mxu0 %v352
  %666 = vmatprep.subr.mxu0 0.0
  %667 = vmatpush2.msra.mxu0 %v351
  %668 = vmatprep.subr.mxu0 0.0
  %669 = vmatpush2.msra.mxu0 %v350
  %670 = vmatprep.mubr.f32.mxu0 %v15
  %671 = vmatmul.mubr.f32.gmra.mxu0 %v14
  %v672 = vpop.f32.mrf.mxu0
  %v673 = vadd.f32 %v411, %v672
  %v674 = vpop.f32.mrf.mxu0
  %675 = vmatprep.mubr.f32.mxu0 %v20
  %676 = vmatmul.mubr.f32.gmra.mxu0 %v19
  %v677 = vpop.f32.mrf.mxu0
  %v678 = vadd.f32 %v411, %v677
  %v679 = vpop.f32.mrf.mxu0
  %680 = vmatprep.mubr.f32.mxu0 %v25
  %681 = vmatmul.mubr.f32.gmra.mxu0 %v24
  %v682 = vpop.f32.mrf.mxu0
  %v683 = vadd.f32 %v411, %v682
  %v684 = vpop.f32.mrf.mxu0
  %685 = vmatprep.mubr.f32.mxu0 %v30
  %686 = vmatmul.mubr.f32.gmra.mxu0 %v29
  %v687 = vpop.f32.mrf.mxu0
  %v688 = vadd.f32 %v411, %v687
  %v689 = vpop.f32.mrf.mxu0
  %690 = vmatprep.mubr.f32.mxu0 %v35
  %691 = vmatmul.mubr.f32.gmra.mxu0 %v34
  %v692 = vpop.f32.mrf.mxu0
  %v693 = vadd.f32 %v411, %v692
  %v694 = vpop.f32.mrf.mxu0
  %695 = vmatprep.mubr.f32.mxu0 %v40
  %696 = vmatmul.mubr.f32.gmra.mxu0 %v39
  %v697 = vpop.f32.mrf.mxu0
  %v698 = vadd.f32 %v411, %v697
  %v699 = vpop.f32.mrf.mxu0
  %700 = vmatprep.mubr.f32.mxu0 %v45
  %701 = vmatmul.mubr.f32.gmra.mxu0 %v44
  %v702 = vpop.f32.mrf.mxu0
  %v703 = vadd.f32 %v411, %v702
  %v704 = vpop.f32.mrf.mxu0
  %705 = vmatprep.mubr.f32.mxu0 %v50
  %706 = vmatmul.mubr.f32.gmra.mxu0 %v49
  %v707 = vpop.f32.mrf.mxu0
  %v708 = vadd.f32 %v411, %v707
  %v709 = vpop.f32.mrf.mxu0
  %710 = vmatprep.mubr.f32.mxu0 %v55
  %711 = vmatmul.mubr.f32.gmra.mxu0 %v54
  %v712 = vpop.f32.mrf.mxu0
  %v713 = vadd.f32 %v411, %v712
  %v714 = vpop.f32.mrf.mxu0
  %715 = vmatprep.mubr.f32.mxu0 %v60
  %716 = vmatmul.mubr.f32.gmra.mxu0 %v59
  %v717 = vpop.f32.mrf.mxu0
  %v718 = vadd.f32 %v411, %v717
  %v719 = vpop.f32.mrf.mxu0
  %720 = vmatprep.mubr.f32.mxu0 %v65
  %721 = vmatmul.mubr.f32.gmra.mxu0 %v64
  %v722 = vpop.f32.mrf.mxu0
  %v723 = vadd.f32 %v411, %v722
  %v724 = vpop.f32.mrf.mxu0
  %725 = vmatprep.mubr.f32.mxu0 %v70
  %726 = vmatmul.mubr.f32.gmra.mxu0 %v69
  %v727 = vpop.f32.mrf.mxu0
  %v728 = vadd.f32 %v411, %v727
  %v729 = vpop.f32.mrf.mxu0
  %730 = vmatprep.mubr.f32.mxu0 %v75
  %731 = vmatmul.mubr.f32.gmra.mxu0 %v74
  %v732 = vpop.f32.mrf.mxu0
  %v733 = vadd.f32 %v411, %v732
  %v734 = vpop.f32.mrf.mxu0
  %735 = vmatprep.mubr.f32.mxu0 %v80
  %736 = vmatmul.mubr.f32.gmra.mxu0 %v79
  %v737 = vpop.f32.mrf.mxu0
  %v738 = vadd.f32 %v411, %v737
  %v739 = vpop.f32.mrf.mxu0
  %740 = vmatprep.mubr.f32.mxu0 %v85
  %741 = vmatmul.mubr.f32.gmra.mxu0 %v84
  %v742 = vpop.f32.mrf.mxu0
  %v743 = vadd.f32 %v411, %v742
  %v744 = vpop.f32.mrf.mxu0
  %745 = vmatprep.mubr.f32.mxu0 %v90
  %746 = vmatmul.mubr.f32.gmra.mxu0 %v89
  %v747 = vpop.f32.mrf.mxu0
  %v748 = vadd.f32 %v411, %v747
  %v749 = vpop.f32.mrf.mxu0
  %750 = vmatprep.mubr.f32.mxu0 %v95
  %751 = vmatmul.mubr.f32.gmra.mxu0 %v94
  %v752 = vpop.f32.mrf.mxu0
  %v753 = vadd.f32 %v411, %v752
  %v754 = vpop.f32.mrf.mxu0
  %755 = vmatprep.mubr.f32.mxu0 %v100
  %756 = vmatmul.mubr.f32.gmra.mxu0 %v99
  %v757 = vpop.f32.mrf.mxu0
  %v758 = vadd.f32 %v411, %v757
  %v759 = vpop.f32.mrf.mxu0
  %760 = vmatprep.mubr.f32.mxu0 %v105
  %761 = vmatmul.mubr.f32.gmra.mxu0 %v104
  %v762 = vpop.f32.mrf.mxu0
  %v763 = vadd.f32 %v411, %v762
  %v764 = vpop.f32.mrf.mxu0
  %765 = vmatprep.mubr.f32.mxu0 %v110
  %766 = vmatmul.mubr.f32.gmra.mxu0 %v109
  %v767 = vpop.f32.mrf.mxu0
  %v768 = vadd.f32 %v411, %v767
  %v769 = vpop.f32.mrf.mxu0
  %770 = vmatprep.mubr.f32.mxu0 %v115
  %771 = vmatmul.mubr.f32.gmra.mxu0 %v114
  %v772 = vpop.f32.mrf.mxu0
  %v773 = vadd.f32 %v411, %v772
  %v774 = vpop.f32.mrf.mxu0
  %775 = vmatprep.mubr.f32.mxu0 %v120
  %776 = vmatmul.mubr.f32.gmra.mxu0 %v119
  %v777 = vpop.f32.mrf.mxu0
  %v778 = vadd.f32 %v411, %v777
  %v779 = vpop.f32.mrf.mxu0
  %780 = vmatprep.mubr.f32.mxu0 %v125
  %781 = vmatmul.mubr.f32.gmra.mxu0 %v124
  %v782 = vpop.f32.mrf.mxu0
  %v783 = vadd.f32 %v411, %v782
  %v784 = vpop.f32.mrf.mxu0
  %785 = vmatprep.mubr.f32.mxu0 %v130
  %786 = vmatmul.mubr.f32.gmra.mxu0 %v129
  %v787 = vpop.f32.mrf.mxu0
  %v788 = vadd.f32 %v411, %v787
  %v789 = vpop.f32.mrf.mxu0
  %790 = vmatprep.mubr.f32.mxu0 %v135
  %791 = vmatmul.mubr.f32.gmra.mxu0 %v134
  %v792 = vpop.f32.mrf.mxu0
  %v793 = vadd.f32 %v411, %v792
  %v794 = vpop.f32.mrf.mxu0
  %795 = vmatprep.mubr.f32.mxu0 %v140
  %796 = vmatmul.mubr.f32.gmra.mxu0 %v139
  %v797 = vpop.f32.mrf.mxu0
  %v798 = vadd.f32 %v411, %v797
  %v799 = vpop.f32.mrf.mxu0
  %800 = vmatprep.mubr.f32.mxu0 %v145
  %801 = vmatmul.mubr.f32.gmra.mxu0 %v144
  %v802 = vpop.f32.mrf.mxu0
  %v803 = vadd.f32 %v411, %v802
  %v804 = vpop.f32.mrf.mxu0
  %805 = vmatprep.mubr.f32.mxu0 %v150
  %806 = vmatmul.mubr.f32.gmra.mxu0 %v149
  %v807 = vpop.f32.mrf.mxu0
  %v808 = vadd.f32 %v411, %v807
  %v809 = vpop.f32.mrf.mxu0
  %810 = vmatprep.mubr.f32.mxu0 %v155
  %811 = vmatmul.mubr.f32.gmra.mxu0 %v154
  %v812 = vpop.f32.mrf.mxu0
  %v813 = vadd.f32 %v411, %v812
  %v814 = vpop.f32.mrf.mxu0
  %815 = vmatprep.mubr.f32.mxu0 %v160
  %816 = vmatmul.mubr.f32.gmra.mxu0 %v159
  %v817 = vpop.f32.mrf.mxu0
  %v818 = vadd.f32 %v411, %v817
  %v819 = vpop.f32.mrf.mxu0
  %820 = vmatprep.mubr.f32.mxu0 %v165
  %821 = vmatmul.mubr.f32.gmra.mxu0 %v164
  %v822 = vpop.f32.mrf.mxu0
  %v823 = vadd.f32 %v411, %v822
  %v824 = vpop.f32.mrf.mxu0
  %825 = vmatprep.mubr.f32.mxu0 %v170
  %826 = vmatmul.mubr.f32.gmra.mxu0 %v169
  %v827 = vpop.f32.mrf.mxu0
  %v828 = vadd.f32 %v411, %v827
  %v829 = vpop.f32.mrf.mxu0
  %830 = vmatprep.mubr.f32.mxu0 %v175
  %831 = vmatmul.mubr.f32.gmra.mxu0 %v174
  %v832 = vpop.f32.mrf.mxu0
  %v833 = vadd.f32 %v411, %v832
  %v834 = vpop.f32.mrf.mxu0
  %835 = vmatprep.mubr.f32.mxu0 %v180
  %836 = vmatmul.mubr.f32.gmra.mxu0 %v179
  %v837 = vpop.f32.mrf.mxu0
  %v838 = vadd.f32 %v411, %v837
  %v839 = vpop.f32.mrf.mxu0
  %840 = vmatprep.mubr.f32.mxu0 %v185
  %841 = vmatmul.mubr.f32.gmra.mxu0 %v184
  %v842 = vpop.f32.mrf.mxu0
  %v843 = vadd.f32 %v411, %v842
  %v844 = vpop.f32.mrf.mxu0
  %845 = vmatprep.mubr.f32.mxu0 %v190
  %846 = vmatmul.mubr.f32.gmra.mxu0 %v189
  %v847 = vpop.f32.mrf.mxu0
  %v848 = vadd.f32 %v411, %v847
  %v849 = vpop.f32.mrf.mxu0
  %850 = vmatprep.mubr.f32.mxu0 %v195
  %851 = vmatmul.mubr.f32.gmra.mxu0 %v194
  %v852 = vpop.f32.mrf.mxu0
  %v853 = vadd.f32 %v411, %v852
  %v854 = vpop.f32.mrf.mxu0
  %855 = vmatprep.mubr.f32.mxu0 %v200
  %856 = vmatmul.mubr.f32.gmra.mxu0 %v199
  %v857 = vpop.f32.mrf.mxu0
  %v858 = vadd.f32 %v411, %v857
  %v859 = vpop.f32.mrf.mxu0
  %860 = vmatprep.mubr.f32.mxu0 %v205
  %861 = vmatmul.mubr.f32.gmra.mxu0 %v204
  %v862 = vpop.f32.mrf.mxu0
  %v863 = vadd.f32 %v411, %v862
  %v864 = vpop.f32.mrf.mxu0
  %865 = vmatprep.mubr.f32.mxu0 %v210
  %866 = vmatmul.mubr.f32.gmra.mxu0 %v209
  %v867 = vpop.f32.mrf.mxu0
  %v868 = vadd.f32 %v411, %v867
  %v869 = vpop.f32.mrf.mxu0
  %870 = vmatprep.mubr.f32.mxu0 %v215
  %871 = vmatmul.mubr.f32.gmra.mxu0 %v214
  %v872 = vpop.f32.mrf.mxu0
  %v873 = vadd.f32 %v411, %v872
  %v874 = vpop.f32.mrf.mxu0
  %875 = vmatprep.mubr.f32.mxu0 %v220
  %876 = vmatmul.mubr.f32.gmra.mxu0 %v219
  %v877 = vpop.f32.mrf.mxu0
  %v878 = vadd.f32 %v411, %v877
  %v879 = vpop.f32.mrf.mxu0
  %880 = vmatprep.mubr.f32.mxu0 %v225
  %881 = vmatmul.mubr.f32.gmra.mxu0 %v224
  %v882 = vpop.f32.mrf.mxu0
  %v883 = vadd.f32 %v411, %v882
  %v884 = vpop.f32.mrf.mxu0
  %885 = vmatprep.mubr.f32.mxu0 %v230
  %886 = vmatmul.mubr.f32.gmra.mxu0 %v229
  %v887 = vpop.f32.mrf.mxu0
  %v888 = vadd.f32 %v411, %v887
  %v889 = vpop.f32.mrf.mxu0
  %890 = vmatprep.mubr.f32.mxu0 %v235
  %891 = vmatmul.mubr.f32.gmra.mxu0 %v234
  %v892 = vpop.f32.mrf.mxu0
  %v893 = vadd.f32 %v411, %v892
  %v894 = vpop.f32.mrf.mxu0
  %895 = vmatprep.mubr.f32.mxu0 %v240
  %896 = vmatmul.mubr.f32.gmra.mxu0 %v239
  %v897 = vpop.f32.mrf.mxu0
  %v898 = vadd.f32 %v411, %v897
  %v899 = vpop.f32.mrf.mxu0
  %900 = vmatprep.mubr.f32.mxu0 %v245
  %901 = vmatmul.mubr.f32.gmra.mxu0 %v244
  %v902 = vpop.f32.mrf.mxu0
  %v903 = vadd.f32 %v411, %v902
  %v904 = vpop.f32.mrf.mxu0
  %905 = vmatprep.mubr.f32.mxu0 %v250
  %906 = vmatmul.mubr.f32.gmra.mxu0 %v249
  %v907 = vpop.f32.mrf.mxu0
  %v908 = vadd.f32 %v411, %v907
  %v909 = vpop.f32.mrf.mxu0
  %910 = vmatprep.mubr.f32.mxu0 %v255
  %911 = vmatmul.mubr.f32.gmra.mxu0 %v254
  %v912 = vpop.f32.mrf.mxu0
  %v913 = vadd.f32 %v411, %v912
  %v914 = vpop.f32.mrf.mxu0
  %915 = vmatprep.mubr.f32.mxu0 %v260
  %916 = vmatmul.mubr.f32.gmra.mxu0 %v259
  %v917 = vpop.f32.mrf.mxu0
  %v918 = vadd.f32 %v411, %v917
  %v919 = vpop.f32.mrf.mxu0
  %920 = vmatprep.mubr.f32.mxu0 %v265
  %921 = vmatmul.mubr.f32.gmra.mxu0 %v264
  %v922 = vpop.f32.mrf.mxu0
  %v923 = vadd.f32 %v411, %v922
  %v924 = vpop.f32.mrf.mxu0
  %925 = vmatprep.mubr.f32.mxu0 %v270
  %926 = vmatmul.mubr.f32.gmra.mxu0 %v269
  %v927 = vpop.f32.mrf.mxu0
  %v928 = vadd.f32 %v411, %v927
  %v929 = vpop.f32.mrf.mxu0
  %930 = vmatprep.mubr.f32.mxu0 %v275
  %931 = vmatmul.mubr.f32.gmra.mxu0 %v274
  %v932 = vpop.f32.mrf.mxu0
  %v933 = vadd.f32 %v411, %v932
  %v934 = vpop.f32.mrf.mxu0
  %935 = vmatprep.mubr.f32.mxu0 %v280
  %936 = vmatmul.mubr.f32.gmra.mxu0 %v279
  %v937 = vpop.f32.mrf.mxu0
  %v938 = vadd.f32 %v411, %v937
  %v939 = vpop.f32.mrf.mxu0
  %940 = vmatprep.mubr.f32.mxu0 %v285
  %941 = vmatmul.mubr.f32.gmra.mxu0 %v284
  %v942 = vpop.f32.mrf.mxu0
  %v943 = vadd.f32 %v411, %v942
  %v944 = vpop.f32.mrf.mxu0
  %945 = vmatprep.mubr.f32.mxu0 %v290
  %946 = vmatmul.mubr.f32.gmra.mxu0 %v289
  %v947 = vpop.f32.mrf.mxu0
  %v948 = vadd.f32 %v411, %v947
  %v949 = vpop.f32.mrf.mxu0
  %950 = vmatprep.mubr.f32.mxu0 %v295
  %951 = vmatmul.mubr.f32.gmra.mxu0 %v294
  %v952 = vpop.f32.mrf.mxu0
  %v953 = vadd.f32 %v411, %v952
  %v954 = vpop.f32.mrf.mxu0
  %955 = vmatprep.mubr.f32.mxu0 %v300
  %956 = vmatmul.mubr.f32.gmra.mxu0 %v299
  %v957 = vpop.f32.mrf.mxu0
  %v958 = vadd.f32 %v411, %v957
  %v959 = vpop.f32.mrf.mxu0
  %960 = vmatprep.mubr.f32.mxu0 %v305
  %961 = vmatmul.mubr.f32.gmra.mxu0 %v304
  %v962 = vpop.f32.mrf.mxu0
  %v963 = vadd.f32 %v411, %v962
  %v964 = vpop.f32.mrf.mxu0
  %965 = vmatprep.mubr.f32.mxu0 %v310
  %966 = vmatmul.mubr.f32.gmra.mxu0 %v309
  %v967 = vpop.f32.mrf.mxu0
  %v968 = vadd.f32 %v411, %v967
  %v969 = vpop.f32.mrf.mxu0
  %970 = vmatprep.mubr.f32.mxu0 %v315
  %971 = vmatmul.mubr.f32.gmra.mxu0 %v314
  %v972 = vpop.f32.mrf.mxu0
  %v973 = vadd.f32 %v411, %v972
  %v974 = vpop.f32.mrf.mxu0
  %975 = vmatprep.mubr.f32.mxu0 %v320
  %976 = vmatmul.mubr.f32.gmra.mxu0 %v319
  %v977 = vpop.f32.mrf.mxu0
  %v978 = vadd.f32 %v411, %v977
  %v979 = vpop.f32.mrf.mxu0
  %980 = vmatprep.mubr.f32.mxu0 %v325
  %981 = vmatmul.mubr.f32.gmra.mxu0 %v324
  %v982 = vpop.f32.mrf.mxu0
  %v983 = vadd.f32 %v411, %v982
  %v984 = vpop.f32.mrf.mxu0
  %985 = vmatprep.mubr.f32.mxu0 %v330
  %986 = vmatmul.mubr.f32.gmra.mxu0 %v329
  %v987 = vpop.f32.mrf.mxu0
  %v988 = vadd.f32 %v411, %v987
  %v989 = vpop.f32.mrf.mxu0
  %990 = vdwg.mxu0
  %991 = vmatprep.subr.mxu0 0.0
  %992 = vmatpush1.msra.mxu0 %v381
  %993 = vmatprep.subr.mxu0 0.0
  %994 = vmatpush1.msra.mxu0 %v380
  %995 = vmatprep.subr.mxu0 0.0
  %996 = vmatpush1.msra.mxu0 %v379
  %997 = vmatprep.subr.mxu0 0.0
  %998 = vmatpush1.msra.mxu0 %v378
  %999 = vmatprep.subr.mxu0 0.0
  %1000 = vmatpush1.msra.mxu0 %v377
  %1001 = vmatprep.subr.mxu0 0.0
  %1002 = vmatpush1.msra.mxu0 %v376
  %1003 = vmatprep.subr.mxu0 0.0
  %1004 = vmatpush1.msra.mxu0 %v375
  %1005 = vmatprep.subr.mxu0 0.0
  %1006 = vmatpush1.msra.mxu0 %v374
  %1007 = vmatprep.subr.mxu0 0.0
  %1008 = vmatpush1.msra.mxu0 %v373
  %1009 = vmatprep.subr.mxu0 0.0
  %1010 = vmatpush1.msra.mxu0 %v372
  %1011 = vmatprep.subr.mxu0 0.0
  %1012 = vmatpush1.msra.mxu0 %v371
  %1013 = vmatprep.subr.mxu0 0.0
  %1014 = vmatpush1.msra.mxu0 %v370
  %1015 = vmatprep.subr.mxu0 0.0
  %1016 = vmatpush1.msra.mxu0 %v369
  %1017 = vmatprep.subr.mxu0 0.0
  %1018 = vmatpush1.msra.mxu0 %v368
  %1019 = vmatprep.subr.mxu0 0.0
  %1020 = vmatpush1.msra.mxu0 %v367
  %1021 = vmatprep.subr.mxu0 0.0
  %1022 = vmatpush1.msra.mxu0 %v366
  %1023 = vmatprep.subr.mxu0 0.0
  %1024 = vmatpush2.msra.mxu0 %v397
  %1025 = vmatprep.subr.mxu0 0.0
  %1026 = vmatpush2.msra.mxu0 %v396
  %1027 = vmatprep.subr.mxu0 0.0
  %1028 = vmatpush2.msra.mxu0 %v395
  %1029 = vmatprep.subr.mxu0 0.0
  %1030 = vmatpush2.msra.mxu0 %v394
  %1031 = vmatprep.subr.mxu0 0.0
  %1032 = vmatpush2.msra.mxu0 %v393
  %1033 = vmatprep.subr.mxu0 0.0
  %1034 = vmatpush2.msra.mxu0 %v392
  %1035 = vmatprep.subr.mxu0 0.0
  %1036 = vmatpush2.msra.mxu0 %v391
  %1037 = vmatprep.subr.mxu0 0.0
  %1038 = vmatpush2.msra.mxu0 %v390
  %1039 = vmatprep.subr.mxu0 0.0
  %1040 = vmatpush2.msra.mxu0 %v389
  %1041 = vmatprep.subr.mxu0 0.0
  %1042 = vmatpush2.msra.mxu0 %v388
  %1043 = vmatprep.subr.mxu0 0.0
  %1044 = vmatpush2.msra.mxu0 %v387
  %1045 = vmatprep.subr.mxu0 0.0
  %1046 = vmatpush2.msra.mxu0 %v386
  %1047 = vmatprep.subr.mxu0 0.0
  %1048 = vmatpush2.msra.mxu0 %v385
  %1049 = vmatprep.subr.mxu0 0.0
  %1050 = vmatpush2.msra.mxu0 %v384
  %1051 = vmatprep.subr.mxu0 0.0
  %1052 = vmatpush2.msra.mxu0 %v383
  %1053 = vmatprep.subr.mxu0 0.0
  %1054 = vmatpush2.msra.mxu0 %v382
  %1055 = vmatprep.mubr.f32.mxu0 %v17
  %1056 = vmatmul.mubr.f32.gmra.mxu0 %v16
  %v1057 = vpop.f32.mrf.mxu0
  %v1058 = vadd.f32 %v673, %v1057
  %v1059 = vpop.f32.mrf.mxu0
  %1060 = vmatprep.mubr.f32.mxu0 %v22
  %1061 = vmatmul.mubr.f32.gmra.mxu0 %v21
  %v1062 = vpop.f32.mrf.mxu0
  %v1063 = vadd.f32 %v678, %v1062
  %v1064 = vpop.f32.mrf.mxu0
  %1065 = vmatprep.mubr.f32.mxu0 %v27
  %1066 = vmatmul.mubr.f32.gmra.mxu0 %v26
  %v1067 = vpop.f32.mrf.mxu0
  %v1068 = vadd.f32 %v683, %v1067
  %v1069 = vpop.f32.mrf.mxu0
  %1070 = vmatprep.mubr.f32.mxu0 %v32
  %1071 = vmatmul.mubr.f32.gmra.mxu0 %v31
  %v1072 = vpop.f32.mrf.mxu0
  %v1073 = vadd.f32 %v688, %v1072
  %v1074 = vpop.f32.mrf.mxu0
  %1075 = vmatprep.mubr.f32.mxu0 %v37
  %1076 = vmatmul.mubr.f32.gmra.mxu0 %v36
  %v1077 = vpop.f32.mrf.mxu0
  %v1078 = vadd.f32 %v693, %v1077
  %v1079 = vpop.f32.mrf.mxu0
  %1080 = vmatprep.mubr.f32.mxu0 %v42
  %1081 = vmatmul.mubr.f32.gmra.mxu0 %v41
  %v1082 = vpop.f32.mrf.mxu0
  %v1083 = vadd.f32 %v698, %v1082
  %v1084 = vpop.f32.mrf.mxu0
  %1085 = vmatprep.mubr.f32.mxu0 %v47
  %1086 = vmatmul.mubr.f32.gmra.mxu0 %v46
  %v1087 = vpop.f32.mrf.mxu0
  %v1088 = vadd.f32 %v703, %v1087
  %v1089 = vpop.f32.mrf.mxu0
  %1090 = vmatprep.mubr.f32.mxu0 %v52
  %1091 = vmatmul.mubr.f32.gmra.mxu0 %v51
  %v1092 = vpop.f32.mrf.mxu0
  %v1093 = vadd.f32 %v708, %v1092
  %v1094 = vpop.f32.mrf.mxu0
  %1095 = vmatprep.mubr.f32.mxu0 %v57
  %1096 = vmatmul.mubr.f32.gmra.mxu0 %v56
  %v1097 = vpop.f32.mrf.mxu0
  %v1098 = vadd.f32 %v713, %v1097
  %v1099 = vpop.f32.mrf.mxu0
  %1100 = vmatprep.mubr.f32.mxu0 %v62
  %1101 = vmatmul.mubr.f32.gmra.mxu0 %v61
  %v1102 = vpop.f32.mrf.mxu0
  %v1103 = vadd.f32 %v718, %v1102
  %v1104 = vpop.f32.mrf.mxu0
  %1105 = vmatprep.mubr.f32.mxu0 %v67
  %1106 = vmatmul.mubr.f32.gmra.mxu0 %v66
  %v1107 = vpop.f32.mrf.mxu0
  %v1108 = vadd.f32 %v723, %v1107
  %v1109 = vpop.f32.mrf.mxu0
  %1110 = vmatprep.mubr.f32.mxu0 %v72
  %1111 = vmatmul.mubr.f32.gmra.mxu0 %v71
  %v1112 = vpop.f32.mrf.mxu0
  %v1113 = vadd.f32 %v728, %v1112
  %v1114 = vpop.f32.mrf.mxu0
  %1115 = vmatprep.mubr.f32.mxu0 %v77
  %1116 = vmatmul.mubr.f32.gmra.mxu0 %v76
  %v1117 = vpop.f32.mrf.mxu0
  %v1118 = vadd.f32 %v733, %v1117
  %v1119 = vpop.f32.mrf.mxu0
  %1120 = vmatprep.mubr.f32.mxu0 %v82
  %1121 = vmatmul.mubr.f32.gmra.mxu0 %v81
  %v1122 = vpop.f32.mrf.mxu0
  %v1123 = vadd.f32 %v738, %v1122
  %v1124 = vpop.f32.mrf.mxu0
  %1125 = vmatprep.mubr.f32.mxu0 %v87
  %1126 = vmatmul.mubr.f32.gmra.mxu0 %v86
  %v1127 = vpop.f32.mrf.mxu0
  %v1128 = vadd.f32 %v743, %v1127
  %v1129 = vpop.f32.mrf.mxu0
  %1130 = vmatprep.mubr.f32.mxu0 %v92
  %1131 = vmatmul.mubr.f32.gmra.mxu0 %v91
  %v1132 = vpop.f32.mrf.mxu0
  %v1133 = vadd.f32 %v748, %v1132
  %v1134 = vpop.f32.mrf.mxu0
  %1135 = vmatprep.mubr.f32.mxu0 %v97
  %1136 = vmatmul.mubr.f32.gmra.mxu0 %v96
  %v1137 = vpop.f32.mrf.mxu0
  %v1138 = vadd.f32 %v753, %v1137
  %v1139 = vpop.f32.mrf.mxu0
  %1140 = vmatprep.mubr.f32.mxu0 %v102
  %1141 = vmatmul.mubr.f32.gmra.mxu0 %v101
  %v1142 = vpop.f32.mrf.mxu0
  %v1143 = vadd.f32 %v758, %v1142
  %v1144 = vpop.f32.mrf.mxu0
  %1145 = vmatprep.mubr.f32.mxu0 %v107
  %1146 = vmatmul.mubr.f32.gmra.mxu0 %v106
  %v1147 = vpop.f32.mrf.mxu0
  %v1148 = vadd.f32 %v763, %v1147
  %v1149 = vpop.f32.mrf.mxu0
  %1150 = vmatprep.mubr.f32.mxu0 %v112
  %1151 = vmatmul.mubr.f32.gmra.mxu0 %v111
  %v1152 = vpop.f32.mrf.mxu0
  %v1153 = vadd.f32 %v768, %v1152
  %v1154 = vpop.f32.mrf.mxu0
  %1155 = vmatprep.mubr.f32.mxu0 %v117
  %1156 = vmatmul.mubr.f32.gmra.mxu0 %v116
  %v1157 = vpop.f32.mrf.mxu0
  %v1158 = vadd.f32 %v773, %v1157
  %v1159 = vpop.f32.mrf.mxu0
  %1160 = vmatprep.mubr.f32.mxu0 %v122
  %1161 = vmatmul.mubr.f32.gmra.mxu0 %v121
  %v1162 = vpop.f32.mrf.mxu0
  %v1163 = vadd.f32 %v778, %v1162
  %v1164 = vpop.f32.mrf.mxu0
  %1165 = vmatprep.mubr.f32.mxu0 %v127
  %1166 = vmatmul.mubr.f32.gmra.mxu0 %v126
  %v1167 = vpop.f32.mrf.mxu0
  %v1168 = vadd.f32 %v783, %v1167
  %v1169 = vpop.f32.mrf.mxu0
  %1170 = vmatprep.mubr.f32.mxu0 %v132
  %1171 = vmatmul.mubr.f32.gmra.mxu0 %v131
  %v1172 = vpop.f32.mrf.mxu0
  %v1173 = vadd.f32 %v788, %v1172
  %v1174 = vpop.f32.mrf.mxu0
  %1175 = vmatprep.mubr.f32.mxu0 %v137
  %1176 = vmatmul.mubr.f32.gmra.mxu0 %v136
  %v1177 = vpop.f32.mrf.mxu0
  %v1178 = vadd.f32 %v793, %v1177
  %v1179 = vpop.f32.mrf.mxu0
  %1180 = vmatprep.mubr.f32.mxu0 %v142
  %1181 = vmatmul.mubr.f32.gmra.mxu0 %v141
  %v1182 = vpop.f32.mrf.mxu0
  %v1183 = vadd.f32 %v798, %v1182
  %v1184 = vpop.f32.mrf.mxu0
  %1185 = vmatprep.mubr.f32.mxu0 %v147
  %1186 = vmatmul.mubr.f32.gmra.mxu0 %v146
  %v1187 = vpop.f32.mrf.mxu0
  %v1188 = vadd.f32 %v803, %v1187
  %v1189 = vpop.f32.mrf.mxu0
  %1190 = vmatprep.mubr.f32.mxu0 %v152
  %1191 = vmatmul.mubr.f32.gmra.mxu0 %v151
  %v1192 = vpop.f32.mrf.mxu0
  %v1193 = vadd.f32 %v808, %v1192
  %v1194 = vpop.f32.mrf.mxu0
  %1195 = vmatprep.mubr.f32.mxu0 %v157
  %1196 = vmatmul.mubr.f32.gmra.mxu0 %v156
  %v1197 = vpop.f32.mrf.mxu0
  %v1198 = vadd.f32 %v813, %v1197
  %v1199 = vpop.f32.mrf.mxu0
  %1200 = vmatprep.mubr.f32.mxu0 %v162
  %1201 = vmatmul.mubr.f32.gmra.mxu0 %v161
  %v1202 = vpop.f32.mrf.mxu0
  %v1203 = vadd.f32 %v818, %v1202
  %v1204 = vpop.f32.mrf.mxu0
  %1205 = vmatprep.mubr.f32.mxu0 %v167
  %1206 = vmatmul.mubr.f32.gmra.mxu0 %v166
  %v1207 = vpop.f32.mrf.mxu0
  %v1208 = vadd.f32 %v823, %v1207
  %v1209 = vpop.f32.mrf.mxu0
  %1210 = vmatprep.mubr.f32.mxu0 %v172
  %1211 = vmatmul.mubr.f32.gmra.mxu0 %v171
  %v1212 = vpop.f32.mrf.mxu0
  %v1213 = vadd.f32 %v828, %v1212
  %v1214 = vpop.f32.mrf.mxu0
  %1215 = vmatprep.mubr.f32.mxu0 %v177
  %1216 = vmatmul.mubr.f32.gmra.mxu0 %v176
  %v1217 = vpop.f32.mrf.mxu0
  %v1218 = vadd.f32 %v833, %v1217
  %v1219 = vpop.f32.mrf.mxu0
  %1220 = vmatprep.mubr.f32.mxu0 %v182
  %1221 = vmatmul.mubr.f32.gmra.mxu0 %v181
  %v1222 = vpop.f32.mrf.mxu0
  %v1223 = vadd.f32 %v838, %v1222
  %v1224 = vpop.f32.mrf.mxu0
  %1225 = vmatprep.mubr.f32.mxu0 %v187
  %1226 = vmatmul.mubr.f32.gmra.mxu0 %v186
  %v1227 = vpop.f32.mrf.mxu0
  %v1228 = vadd.f32 %v843, %v1227
  %v1229 = vpop.f32.mrf.mxu0
  %1230 = vmatprep.mubr.f32.mxu0 %v192
  %1231 = vmatmul.mubr.f32.gmra.mxu0 %v191
  %v1232 = vpop.f32.mrf.mxu0
  %v1233 = vadd.f32 %v848, %v1232
  %v1234 = vpop.f32.mrf.mxu0
  %1235 = vmatprep.mubr.f32.mxu0 %v197
  %1236 = vmatmul.mubr.f32.gmra.mxu0 %v196
  %v1237 = vpop.f32.mrf.mxu0
  %v1238 = vadd.f32 %v853, %v1237
  %v1239 = vpop.f32.mrf.mxu0
  %1240 = vmatprep.mubr.f32.mxu0 %v202
  %1241 = vmatmul.mubr.f32.gmra.mxu0 %v201
  %v1242 = vpop.f32.mrf.mxu0
  %v1243 = vadd.f32 %v858, %v1242
  %v1244 = vpop.f32.mrf.mxu0
  %1245 = vmatprep.mubr.f32.mxu0 %v207
  %1246 = vmatmul.mubr.f32.gmra.mxu0 %v206
  %v1247 = vpop.f32.mrf.mxu0
  %v1248 = vadd.f32 %v863, %v1247
  %v1249 = vpop.f32.mrf.mxu0
  %1250 = vmatprep.mubr.f32.mxu0 %v212
  %1251 = vmatmul.mubr.f32.gmra.mxu0 %v211
  %v1252 = vpop.f32.mrf.mxu0
  %v1253 = vadd.f32 %v868, %v1252
  %v1254 = vpop.f32.mrf.mxu0
  %1255 = vmatprep.mubr.f32.mxu0 %v217
  %1256 = vmatmul.mubr.f32.gmra.mxu0 %v216
  %v1257 = vpop.f32.mrf.mxu0
  %v1258 = vadd.f32 %v873, %v1257
  %v1259 = vpop.f32.mrf.mxu0
  %1260 = vmatprep.mubr.f32.mxu0 %v222
  %1261 = vmatmul.mubr.f32.gmra.mxu0 %v221
  %v1262 = vpop.f32.mrf.mxu0
  %v1263 = vadd.f32 %v878, %v1262
  %v1264 = vpop.f32.mrf.mxu0
  %1265 = vmatprep.mubr.f32.mxu0 %v227
  %1266 = vmatmul.mubr.f32.gmra.mxu0 %v226
  %v1267 = vpop.f32.mrf.mxu0
  %v1268 = vadd.f32 %v883, %v1267
  %v1269 = vpop.f32.mrf.mxu0
  %1270 = vmatprep.mubr.f32.mxu0 %v232
  %1271 = vmatmul.mubr.f32.gmra.mxu0 %v231
  %v1272 = vpop.f32.mrf.mxu0
  %v1273 = vadd.f32 %v888, %v1272
  %v1274 = vpop.f32.mrf.mxu0
  %1275 = vmatprep.mubr.f32.mxu0 %v237
  %1276 = vmatmul.mubr.f32.gmra.mxu0 %v236
  %v1277 = vpop.f32.mrf.mxu0
  %v1278 = vadd.f32 %v893, %v1277
  %v1279 = vpop.f32.mrf.mxu0
  %1280 = vmatprep.mubr.f32.mxu0 %v242
  %1281 = vmatmul.mubr.f32.gmra.mxu0 %v241
  %v1282 = vpop.f32.mrf.mxu0
  %v1283 = vadd.f32 %v898, %v1282
  %v1284 = vpop.f32.mrf.mxu0
  %1285 = vmatprep.mubr.f32.mxu0 %v247
  %1286 = vmatmul.mubr.f32.gmra.mxu0 %v246
  %v1287 = vpop.f32.mrf.mxu0
  %v1288 = vadd.f32 %v903, %v1287
  %v1289 = vpop.f32.mrf.mxu0
  %1290 = vmatprep.mubr.f32.mxu0 %v252
  %1291 = vmatmul.mubr.f32.gmra.mxu0 %v251
  %v1292 = vpop.f32.mrf.mxu0
  %v1293 = vadd.f32 %v908, %v1292
  %v1294 = vpop.f32.mrf.mxu0
  %1295 = vmatprep.mubr.f32.mxu0 %v257
  %1296 = vmatmul.mubr.f32.gmra.mxu0 %v256
  %v1297 = vpop.f32.mrf.mxu0
  %v1298 = vadd.f32 %v913, %v1297
  %v1299 = vpop.f32.mrf.mxu0
  %1300 = vmatprep.mubr.f32.mxu0 %v262
  %1301 = vmatmul.mubr.f32.gmra.mxu0 %v261
  %v1302 = vpop.f32.mrf.mxu0
  %v1303 = vadd.f32 %v918, %v1302
  %v1304 = vpop.f32.mrf.mxu0
  %1305 = vmatprep.mubr.f32.mxu0 %v267
  %1306 = vmatmul.mubr.f32.gmra.mxu0 %v266
  %v1307 = vpop.f32.mrf.mxu0
  %v1308 = vadd.f32 %v923, %v1307
  %v1309 = vpop.f32.mrf.mxu0
  %1310 = vmatprep.mubr.f32.mxu0 %v272
  %1311 = vmatmul.mubr.f32.gmra.mxu0 %v271
  %v1312 = vpop.f32.mrf.mxu0
  %v1313 = vadd.f32 %v928, %v1312
  %v1314 = vpop.f32.mrf.mxu0
  %1315 = vmatprep.mubr.f32.mxu0 %v277
  %1316 = vmatmul.mubr.f32.gmra.mxu0 %v276
  %v1317 = vpop.f32.mrf.mxu0
  %v1318 = vadd.f32 %v933, %v1317
  %v1319 = vpop.f32.mrf.mxu0
  %1320 = vmatprep.mubr.f32.mxu0 %v282
  %1321 = vmatmul.mubr.f32.gmra.mxu0 %v281
  %v1322 = vpop.f32.mrf.mxu0
  %v1323 = vadd.f32 %v938, %v1322
  %v1324 = vpop.f32.mrf.mxu0
  %1325 = vmatprep.mubr.f32.mxu0 %v287
  %1326 = vmatmul.mubr.f32.gmra.mxu0 %v286
  %v1327 = vpop.f32.mrf.mxu0
  %v1328 = vadd.f32 %v943, %v1327
  %v1329 = vpop.f32.mrf.mxu0
  %1330 = vmatprep.mubr.f32.mxu0 %v292
  %1331 = vmatmul.mubr.f32.gmra.mxu0 %v291
  %v1332 = vpop.f32.mrf.mxu0
  %v1333 = vadd.f32 %v948, %v1332
  %v1334 = vpop.f32.mrf.mxu0
  %1335 = vmatprep.mubr.f32.mxu0 %v297
  %1336 = vmatmul.mubr.f32.gmra.mxu0 %v296
  %v1337 = vpop.f32.mrf.mxu0
  %v1338 = vadd.f32 %v953, %v1337
  %v1339 = vpop.f32.mrf.mxu0
  %1340 = vmatprep.mubr.f32.mxu0 %v302
  %1341 = vmatmul.mubr.f32.gmra.mxu0 %v301
  %v1342 = vpop.f32.mrf.mxu0
  %v1343 = vadd.f32 %v958, %v1342
  %v1344 = vpop.f32.mrf.mxu0
  %1345 = vmatprep.mubr.f32.mxu0 %v307
  %1346 = vmatmul.mubr.f32.gmra.mxu0 %v306
  %v1347 = vpop.f32.mrf.mxu0
  %v1348 = vadd.f32 %v963, %v1347
  %v1349 = vpop.f32.mrf.mxu0
  %1350 = vmatprep.mubr.f32.mxu0 %v312
  %1351 = vmatmul.mubr.f32.gmra.mxu0 %v311
  %v1352 = vpop.f32.mrf.mxu0
  %v1353 = vadd.f32 %v968, %v1352
  %v1354 = vpop.f32.mrf.mxu0
  %1355 = vmatprep.mubr.f32.mxu0 %v317
  %1356 = vmatmul.mubr.f32.gmra.mxu0 %v316
  %v1357 = vpop.f32.mrf.mxu0
  %v1358 = vadd.f32 %v973, %v1357
  %v1359 = vpop.f32.mrf.mxu0
  %1360 = vmatprep.mubr.f32.mxu0 %v322
  %1361 = vmatmul.mubr.f32.gmra.mxu0 %v321
  %v1362 = vpop.f32.mrf.mxu0
  %v1363 = vadd.f32 %v978, %v1362
  %v1364 = vpop.f32.mrf.mxu0
  %1365 = vmatprep.mubr.f32.mxu0 %v327
  %1366 = vmatmul.mubr.f32.gmra.mxu0 %v326
  %v1367 = vpop.f32.mrf.mxu0
  %v1368 = vadd.f32 %v983, %v1367
  %v1369 = vpop.f32.mrf.mxu0
  %1370 = vmatprep.mubr.f32.mxu0 %v332
  %1371 = vmatmul.mubr.f32.gmra.mxu0 %v331
  %v1372 = vpop.f32.mrf.mxu0
  %v1373 = vadd.f32 %v988, %v1372
  %v1374 = vpop.f32.mrf.mxu0
  %1375 = vdwg.mxu0
  %1376 = vmatprep.subr.mxu0 0.0
  %1377 = vmatpush1.msra.mxu0 0.0
  %1378 = vmatprep.subr.mxu0 0.0
  %1379 = vmatpush1.msra.mxu0 0.0
  %1380 = vmatprep.subr.mxu0 0.0
  %1381 = vmatpush1.msra.mxu0 0.0
  %1382 = vmatprep.subr.mxu0 0.0
  %1383 = vmatpush1.msra.mxu0 0.0
  %1384 = vmatprep.subr.mxu0 0.0
  %1385 = vmatpush1.msra.mxu0 0.0
  %1386 = vmatprep.subr.mxu0 0.0
  %1387 = vmatpush1.msra.mxu0 0.0
  %1388 = vmatprep.subr.mxu0 0.0
  %1389 = vmatpush1.msra.mxu0 0.0
  %1390 = vmatprep.subr.mxu0 0.0
  %1391 = vmatpush1.msra.mxu0 0.0
  %1392 = vmatprep.subr.mxu0 0.0
  %1393 = vmatpush1.msra.mxu0 %v405
  %1394 = vmatprep.subr.mxu0 0.0
  %1395 = vmatpush1.msra.mxu0 %v404
  %1396 = vmatprep.subr.mxu0 0.0
  %1397 = vmatpush1.msra.mxu0 %v403
  %1398 = vmatprep.subr.mxu0 0.0
  %1399 = vmatpush1.msra.mxu0 %v402
  %1400 = vmatprep.subr.mxu0 0.0
  %1401 = vmatpush1.msra.mxu0 %v401
  %1402 = vmatprep.subr.mxu0 0.0
  %1403 = vmatpush1.msra.mxu0 %v400
  %1404 = vmatprep.subr.mxu0 0.0
  %1405 = vmatpush1.msra.mxu0 %v399
  %1406 = vmatprep.subr.mxu0 0.0
  %1407 = vmatpush1.msra.mxu0 %v398
  %1408 = vmatprep.subr.mxu0 0.0
  %1409 = vmatpush2.msra.mxu0 0.0
  %1410 = vmatprep.subr.mxu0 0.0
  %1411 = vmatpush2.msra.mxu0 0.0
  %1412 = vmatprep.subr.mxu0 0.0
  %1413 = vmatpush2.msra.mxu0 0.0
  %1414 = vmatprep.subr.mxu0 0.0
  %1415 = vmatpush2.msra.mxu0 0.0
  %1416 = vmatprep.subr.mxu0 0.0
  %1417 = vmatpush2.msra.mxu0 0.0
  %1418 = vmatprep.subr.mxu0 0.0
  %1419 = vmatpush2.msra.mxu0 0.0
  %1420 = vmatprep.subr.mxu0 0.0
  %1421 = vmatpush2.msra.mxu0 0.0
  %1422 = vmatprep.subr.mxu0 0.0
  %1423 = vmatpush2.msra.mxu0 0.0
  %1424 = vmatprep.subr.mxu0 0.0
  %1425 = vmatpush2.msra.mxu0 0.0
  %1426 = vmatprep.subr.mxu0 0.0
  %1427 = vmatpush2.msra.mxu0 0.0
  %1428 = vmatprep.subr.mxu0 0.0
  %1429 = vmatpush2.msra.mxu0 0.0
  %1430 = vmatprep.subr.mxu0 0.0
  %1431 = vmatpush2.msra.mxu0 0.0
  %1432 = vmatprep.subr.mxu0 0.0
  %1433 = vmatpush2.msra.mxu0 0.0
  %1434 = vmatprep.subr.mxu0 0.0
  %1435 = vmatpush2.msra.mxu0 0.0
  %1436 = vmatprep.subr.mxu0 0.0
  %1437 = vmatpush2.msra.mxu0 0.0
  %1438 = vmatprep.subr.mxu0 0.0
  %1439 = vmatpush2.msra.mxu0 0.0
  %1440 = vmatprep.mubr.f32.mxu0 0.0
  %1441 = vmatmul.mubr.f32.gmra.mxu0 %v415
  %v1442 = vpop.f32.mrf.mxu0
  %v1443 = vadd.f32 %v1058, %v1442
  %v1444 = vpop.f32.mrf.mxu0
  %1445 = vmatprep.mubr.f32.mxu0 0.0
  %1446 = vmatmul.mubr.f32.gmra.mxu0 %v418
  %v1447 = vpop.f32.mrf.mxu0
  %v1448 = vadd.f32 %v1063, %v1447
  %v1449 = vpop.f32.mrf.mxu0
  %1450 = vmatprep.mubr.f32.mxu0 0.0
  %1451 = vmatmul.mubr.f32.gmra.mxu0 %v421
  %v1452 = vpop.f32.mrf.mxu0
  %v1453 = vadd.f32 %v1068, %v1452
  %v1454 = vpop.f32.mrf.mxu0
  %1455 = vmatprep.mubr.f32.mxu0 0.0
  %1456 = vmatmul.mubr.f32.gmra.mxu0 %v424
  %v1457 = vpop.f32.mrf.mxu0
  %v1458 = vadd.f32 %v1073, %v1457
  %v1459 = vpop.f32.mrf.mxu0
  %1460 = vmatprep.mubr.f32.mxu0 0.0
  %1461 = vmatmul.mubr.f32.gmra.mxu0 %v427
  %v1462 = vpop.f32.mrf.mxu0
  %v1463 = vadd.f32 %v1078, %v1462
  %v1464 = vpop.f32.mrf.mxu0
  %1465 = vmatprep.mubr.f32.mxu0 0.0
  %1466 = vmatmul.mubr.f32.gmra.mxu0 %v430
  %v1467 = vpop.f32.mrf.mxu0
  %v1468 = vadd.f32 %v1083, %v1467
  %v1469 = vpop.f32.mrf.mxu0
  %1470 = vmatprep.mubr.f32.mxu0 0.0
  %1471 = vmatmul.mubr.f32.gmra.mxu0 %v433
  %v1472 = vpop.f32.mrf.mxu0
  %v1473 = vadd.f32 %v1088, %v1472
  %v1474 = vpop.f32.mrf.mxu0
  %1475 = vmatprep.mubr.f32.mxu0 0.0
  %1476 = vmatmul.mubr.f32.gmra.mxu0 %v436
  %v1477 = vpop.f32.mrf.mxu0
  %v1478 = vadd.f32 %v1093, %v1477
  %v1479 = vpop.f32.mrf.mxu0
  %1480 = vmatprep.mubr.f32.mxu0 0.0
  %1481 = vmatmul.mubr.f32.gmra.mxu0 %v439
  %v1482 = vpop.f32.mrf.mxu0
  %v1483 = vadd.f32 %v1098, %v1482
  %v1484 = vpop.f32.mrf.mxu0
  %1485 = vmatprep.mubr.f32.mxu0 0.0
  %1486 = vmatmul.mubr.f32.gmra.mxu0 %v442
  %v1487 = vpop.f32.mrf.mxu0
  %v1488 = vadd.f32 %v1103, %v1487
  %v1489 = vpop.f32.mrf.mxu0
  %1490 = vmatprep.mubr.f32.mxu0 0.0
  %1491 = vmatmul.mubr.f32.gmra.mxu0 %v445
  %v1492 = vpop.f32.mrf.mxu0
  %v1493 = vadd.f32 %v1108, %v1492
  %v1494 = vpop.f32.mrf.mxu0
  %1495 = vmatprep.mubr.f32.mxu0 0.0
  %1496 = vmatmul.mubr.f32.gmra.mxu0 %v448
  %v1497 = vpop.f32.mrf.mxu0
  %v1498 = vadd.f32 %v1113, %v1497
  %v1499 = vpop.f32.mrf.mxu0
  %1500 = vmatprep.mubr.f32.mxu0 0.0
  %1501 = vmatmul.mubr.f32.gmra.mxu0 %v451
  %v1502 = vpop.f32.mrf.mxu0
  %v1503 = vadd.f32 %v1118, %v1502
  %v1504 = vpop.f32.mrf.mxu0
  %1505 = vmatprep.mubr.f32.mxu0 0.0
  %1506 = vmatmul.mubr.f32.gmra.mxu0 %v454
  %v1507 = vpop.f32.mrf.mxu0
  %v1508 = vadd.f32 %v1123, %v1507
  %v1509 = vpop.f32.mrf.mxu0
  %1510 = vmatprep.mubr.f32.mxu0 0.0
  %1511 = vmatmul.mubr.f32.gmra.mxu0 %v457
  %v1512 = vpop.f32.mrf.mxu0
  %v1513 = vadd.f32 %v1128, %v1512
  %v1514 = vpop.f32.mrf.mxu0
  %1515 = vmatprep.mubr.f32.mxu0 0.0
  %1516 = vmatmul.mubr.f32.gmra.mxu0 %v460
  %v1517 = vpop.f32.mrf.mxu0
  %v1518 = vadd.f32 %v1133, %v1517
  %v1519 = vpop.f32.mrf.mxu0
  %1520 = vmatprep.mubr.f32.mxu0 0.0
  %1521 = vmatmul.mubr.f32.gmra.mxu0 %v463
  %v1522 = vpop.f32.mrf.mxu0
  %v1523 = vadd.f32 %v1138, %v1522
  %v1524 = vpop.f32.mrf.mxu0
  %1525 = vmatprep.mubr.f32.mxu0 0.0
  %1526 = vmatmul.mubr.f32.gmra.mxu0 %v466
  %v1527 = vpop.f32.mrf.mxu0
  %v1528 = vadd.f32 %v1143, %v1527
  %v1529 = vpop.f32.mrf.mxu0
  %1530 = vmatprep.mubr.f32.mxu0 0.0
  %1531 = vmatmul.mubr.f32.gmra.mxu0 %v469
  %v1532 = vpop.f32.mrf.mxu0
  %v1533 = vadd.f32 %v1148, %v1532
  %v1534 = vpop.f32.mrf.mxu0
  %1535 = vmatprep.mubr.f32.mxu0 0.0
  %1536 = vmatmul.mubr.f32.gmra.mxu0 %v472
  %v1537 = vpop.f32.mrf.mxu0
  %v1538 = vadd.f32 %v1153, %v1537
  %v1539 = vpop.f32.mrf.mxu0
  %1540 = vmatprep.mubr.f32.mxu0 0.0
  %1541 = vmatmul.mubr.f32.gmra.mxu0 %v475
  %v1542 = vpop.f32.mrf.mxu0
  %v1543 = vadd.f32 %v1158, %v1542
  %v1544 = vpop.f32.mrf.mxu0
  %1545 = vmatprep.mubr.f32.mxu0 0.0
  %1546 = vmatmul.mubr.f32.gmra.mxu0 %v478
  %v1547 = vpop.f32.mrf.mxu0
  %v1548 = vadd.f32 %v1163, %v1547
  %v1549 = vpop.f32.mrf.mxu0
  %1550 = vmatprep.mubr.f32.mxu0 0.0
  %1551 = vmatmul.mubr.f32.gmra.mxu0 %v481
  %v1552 = vpop.f32.mrf.mxu0
  %v1553 = vadd.f32 %v1168, %v1552
  %v1554 = vpop.f32.mrf.mxu0
  %1555 = vmatprep.mubr.f32.mxu0 0.0
  %1556 = vmatmul.mubr.f32.gmra.mxu0 %v484
  %v1557 = vpop.f32.mrf.mxu0
  %v1558 = vadd.f32 %v1173, %v1557
  %v1559 = vpop.f32.mrf.mxu0
  %1560 = vmatprep.mubr.f32.mxu0 0.0
  %1561 = vmatmul.mubr.f32.gmra.mxu0 %v487
  %v1562 = vpop.f32.mrf.mxu0
  %v1563 = vadd.f32 %v1178, %v1562
  %v1564 = vpop.f32.mrf.mxu0
  %1565 = vmatprep.mubr.f32.mxu0 0.0
  %1566 = vmatmul.mubr.f32.gmra.mxu0 %v490
  %v1567 = vpop.f32.mrf.mxu0
  %v1568 = vadd.f32 %v1183, %v1567
  %v1569 = vpop.f32.mrf.mxu0
  %1570 = vmatprep.mubr.f32.mxu0 0.0
  %1571 = vmatmul.mubr.f32.gmra.mxu0 %v493
  %v1572 = vpop.f32.mrf.mxu0
  %v1573 = vadd.f32 %v1188, %v1572
  %v1574 = vpop.f32.mrf.mxu0
  %1575 = vmatprep.mubr.f32.mxu0 0.0
  %1576 = vmatmul.mubr.f32.gmra.mxu0 %v496
  %v1577 = vpop.f32.mrf.mxu0
  %v1578 = vadd.f32 %v1193, %v1577
  %v1579 = vpop.f32.mrf.mxu0
  %1580 = vmatprep.mubr.f32.mxu0 0.0
  %1581 = vmatmul.mubr.f32.gmra.mxu0 %v499
  %v1582 = vpop.f32.mrf.mxu0
  %v1583 = vadd.f32 %v1198, %v1582
  %v1584 = vpop.f32.mrf.mxu0
  %1585 = vmatprep.mubr.f32.mxu0 0.0
  %1586 = vmatmul.mubr.f32.gmra.mxu0 %v502
  %v1587 = vpop.f32.mrf.mxu0
  %v1588 = vadd.f32 %v1203, %v1587
  %v1589 = vpop.f32.mrf.mxu0
  %1590 = vmatprep.mubr.f32.mxu0 0.0
  %1591 = vmatmul.mubr.f32.gmra.mxu0 %v505
  %v1592 = vpop.f32.mrf.mxu0
  %v1593 = vadd.f32 %v1208, %v1592
  %v1594 = vpop.f32.mrf.mxu0
  %1595 = vmatprep.mubr.f32.mxu0 0.0
  %1596 = vmatmul.mubr.f32.gmra.mxu0 %v508
  %v1597 = vpop.f32.mrf.mxu0
  %v1598 = vadd.f32 %v1213, %v1597
  %v1599 = vpop.f32.mrf.mxu0
  %1600 = vmatprep.mubr.f32.mxu0 0.0
  %1601 = vmatmul.mubr.f32.gmra.mxu0 %v511
  %v1602 = vpop.f32.mrf.mxu0
  %v1603 = vadd.f32 %v1218, %v1602
  %v1604 = vpop.f32.mrf.mxu0
  %1605 = vmatprep.mubr.f32.mxu0 0.0
  %1606 = vmatmul.mubr.f32.gmra.mxu0 %v514
  %v1607 = vpop.f32.mrf.mxu0
  %v1608 = vadd.f32 %v1223, %v1607
  %v1609 = vpop.f32.mrf.mxu0
  %1610 = vmatprep.mubr.f32.mxu0 0.0
  %1611 = vmatmul.mubr.f32.gmra.mxu0 %v517
  %v1612 = vpop.f32.mrf.mxu0
  %v1613 = vadd.f32 %v1228, %v1612
  %v1614 = vpop.f32.mrf.mxu0
  %1615 = vmatprep.mubr.f32.mxu0 0.0
  %1616 = vmatmul.mubr.f32.gmra.mxu0 %v520
  %v1617 = vpop.f32.mrf.mxu0
  %v1618 = vadd.f32 %v1233, %v1617
  %v1619 = vpop.f32.mrf.mxu0
  %1620 = vmatprep.mubr.f32.mxu0 0.0
  %1621 = vmatmul.mubr.f32.gmra.mxu0 %v523
  %v1622 = vpop.f32.mrf.mxu0
  %v1623 = vadd.f32 %v1238, %v1622
  %v1624 = vpop.f32.mrf.mxu0
  %1625 = vmatprep.mubr.f32.mxu0 0.0
  %1626 = vmatmul.mubr.f32.gmra.mxu0 %v526
  %v1627 = vpop.f32.mrf.mxu0
  %v1628 = vadd.f32 %v1243, %v1627
  %v1629 = vpop.f32.mrf.mxu0
  %1630 = vmatprep.mubr.f32.mxu0 0.0
  %1631 = vmatmul.mubr.f32.gmra.mxu0 %v529
  %v1632 = vpop.f32.mrf.mxu0
  %v1633 = vadd.f32 %v1248, %v1632
  %v1634 = vpop.f32.mrf.mxu0
  %1635 = vmatprep.mubr.f32.mxu0 0.0
  %1636 = vmatmul.mubr.f32.gmra.mxu0 %v532
  %v1637 = vpop.f32.mrf.mxu0
  %v1638 = vadd.f32 %v1253, %v1637
  %v1639 = vpop.f32.mrf.mxu0
  %1640 = vmatprep.mubr.f32.mxu0 0.0
  %1641 = vmatmul.mubr.f32.gmra.mxu0 %v535
  %v1642 = vpop.f32.mrf.mxu0
  %v1643 = vadd.f32 %v1258, %v1642
  %v1644 = vpop.f32.mrf.mxu0
  %1645 = vmatprep.mubr.f32.mxu0 0.0
  %1646 = vmatmul.mubr.f32.gmra.mxu0 %v538
  %v1647 = vpop.f32.mrf.mxu0
  %v1648 = vadd.f32 %v1263, %v1647
  %v1649 = vpop.f32.mrf.mxu0
  %1650 = vmatprep.mubr.f32.mxu0 0.0
  %1651 = vmatmul.mubr.f32.gmra.mxu0 %v541
  %v1652 = vpop.f32.mrf.mxu0
  %v1653 = vadd.f32 %v1268, %v1652
  %v1654 = vpop.f32.mrf.mxu0
  %1655 = vmatprep.mubr.f32.mxu0 0.0
  %1656 = vmatmul.mubr.f32.gmra.mxu0 %v544
  %v1657 = vpop.f32.mrf.mxu0
  %v1658 = vadd.f32 %v1273, %v1657
  %v1659 = vpop.f32.mrf.mxu0
  %1660 = vmatprep.mubr.f32.mxu0 0.0
  %1661 = vmatmul.mubr.f32.gmra.mxu0 %v547
  %v1662 = vpop.f32.mrf.mxu0
  %v1663 = vadd.f32 %v1278, %v1662
  %v1664 = vpop.f32.mrf.mxu0
  %1665 = vmatprep.mubr.f32.mxu0 0.0
  %1666 = vmatmul.mubr.f32.gmra.mxu0 %v550
  %v1667 = vpop.f32.mrf.mxu0
  %v1668 = vadd.f32 %v1283, %v1667
  %v1669 = vpop.f32.mrf.mxu0
  %1670 = vmatprep.mubr.f32.mxu0 0.0
  %1671 = vmatmul.mubr.f32.gmra.mxu0 %v553
  %v1672 = vpop.f32.mrf.mxu0
  %v1673 = vadd.f32 %v1288, %v1672
  %v1674 = vpop.f32.mrf.mxu0
  %1675 = vmatprep.mubr.f32.mxu0 0.0
  %1676 = vmatmul.mubr.f32.gmra.mxu0 %v556
  %v1677 = vpop.f32.mrf.mxu0
  %v1678 = vadd.f32 %v1293, %v1677
  %v1679 = vpop.f32.mrf.mxu0
  %1680 = vmatprep.mubr.f32.mxu0 0.0
  %1681 = vmatmul.mubr.f32.gmra.mxu0 %v559
  %v1682 = vpop.f32.mrf.mxu0
  %v1683 = vadd.f32 %v1298, %v1682
  %v1684 = vpop.f32.mrf.mxu0
  %1685 = vmatprep.mubr.f32.mxu0 0.0
  %1686 = vmatmul.mubr.f32.gmra.mxu0 %v562
  %v1687 = vpop.f32.mrf.mxu0
  %v1688 = vadd.f32 %v1303, %v1687
  %v1689 = vpop.f32.mrf.mxu0
  %1690 = vmatprep.mubr.f32.mxu0 0.0
  %1691 = vmatmul.mubr.f32.gmra.mxu0 %v565
  %v1692 = vpop.f32.mrf.mxu0
  %v1693 = vadd.f32 %v1308, %v1692
  %v1694 = vpop.f32.mrf.mxu0
  %1695 = vmatprep.mubr.f32.mxu0 0.0
  %1696 = vmatmul.mubr.f32.gmra.mxu0 %v568
  %v1697 = vpop.f32.mrf.mxu0
  %v1698 = vadd.f32 %v1313, %v1697
  %v1699 = vpop.f32.mrf.mxu0
  %1700 = vmatprep.mubr.f32.mxu0 0.0
  %1701 = vmatmul.mubr.f32.gmra.mxu0 %v571
  %v1702 = vpop.f32.mrf.mxu0
  %v1703 = vadd.f32 %v1318, %v1702
  %v1704 = vpop.f32.mrf.mxu0
  %1705 = vmatprep.mubr.f32.mxu0 0.0
  %1706 = vmatmul.mubr.f32.gmra.mxu0 %v574
  %v1707 = vpop.f32.mrf.mxu0
  %v1708 = vadd.f32 %v1323, %v1707
  %v1709 = vpop.f32.mrf.mxu0
  %1710 = vmatprep.mubr.f32.mxu0 0.0
  %1711 = vmatmul.mubr.f32.gmra.mxu0 %v577
  %v1712 = vpop.f32.mrf.mxu0
  %v1713 = vadd.f32 %v1328, %v1712
  %v1714 = vpop.f32.mrf.mxu0
  %1715 = vmatprep.mubr.f32.mxu0 0.0
  %1716 = vmatmul.mubr.f32.gmra.mxu0 %v580
  %v1717 = vpop.f32.mrf.mxu0
  %v1718 = vadd.f32 %v1333, %v1717
  %v1719 = vpop.f32.mrf.mxu0
  %1720 = vmatprep.mubr.f32.mxu0 0.0
  %1721 = vmatmul.mubr.f32.gmra.mxu0 %v583
  %v1722 = vpop.f32.mrf.mxu0
  %v1723 = vadd.f32 %v1338, %v1722
  %v1724 = vpop.f32.mrf.mxu0
  %1725 = vmatprep.mubr.f32.mxu0 0.0
  %1726 = vmatmul.mubr.f32.gmra.mxu0 %v586
  %v1727 = vpop.f32.mrf.mxu0
  %v1728 = vadd.f32 %v1343, %v1727
  %v1729 = vpop.f32.mrf.mxu0
  %1730 = vmatprep.mubr.f32.mxu0 0.0
  %1731 = vmatmul.mubr.f32.gmra.mxu0 %v589
  %v1732 = vpop.f32.mrf.mxu0
  %v1733 = vadd.f32 %v1348, %v1732
  %v1734 = vpop.f32.mrf.mxu0
  %1735 = vmatprep.mubr.f32.mxu0 0.0
  %1736 = vmatmul.mubr.f32.gmra.mxu0 %v592
  %v1737 = vpop.f32.mrf.mxu0
  %v1738 = vadd.f32 %v1353, %v1737
  %v1739 = vpop.f32.mrf.mxu0
  %1740 = vmatprep.mubr.f32.mxu0 0.0
  %1741 = vmatmul.mubr.f32.gmra.mxu0 %v595
  %v1742 = vpop.f32.mrf.mxu0
  %v1743 = vadd.f32 %v1358, %v1742
  %v1744 = vpop.f32.mrf.mxu0
  %1745 = vmatprep.mubr.f32.mxu0 0.0
  %1746 = vmatmul.mubr.f32.gmra.mxu0 %v598
  %v1747 = vpop.f32.mrf.mxu0
  %v1748 = vadd.f32 %v1363, %v1747
  %v1749 = vpop.f32.mrf.mxu0
  %1750 = vmatprep.mubr.f32.mxu0 0.0
  %1751 = vmatmul.mubr.f32.gmra.mxu0 %v601
  %v1752 = vpop.f32.mrf.mxu0
  %v1753 = vadd.f32 %v1368, %v1752
  %v1754 = vpop.f32.mrf.mxu0
  %1755 = vmatprep.mubr.f32.mxu0 0.0
  %1756 = vmatmul.mubr.f32.gmra.mxu0 %v604
  %v1757 = vpop.f32.mrf.mxu0
  %v1758 = vadd.f32 %v1373, %v1757
  %v1759 = vpop.f32.mrf.mxu0
  %1760 = vdwg.mxu0
  %v1761 = vmin.f32 %v1443, 0.0
  %v1762 = vmin.f32 %v1448, 0.0
  %v1763 = vmin.f32 %v1453, 0.0
  %v1764 = vmin.f32 %v1458, 0.0
  %v1765 = vmin.f32 %v1463, 0.0
  %v1766 = vmin.f32 %v1468, 0.0
  %v1767 = vmin.f32 %v1473, 0.0
  %v1768 = vmin.f32 %v1478, 0.0
  %v1769 = vmin.f32 %v1483, 0.0
  %v1770 = vmin.f32 %v1488, 0.0
  %v1771 = vmin.f32 %v1493, 0.0
  %v1772 = vmin.f32 %v1498, 0.0
  %v1773 = vmin.f32 %v1503, 0.0
  %v1774 = vmin.f32 %v1508, 0.0
  %v1775 = vmin.f32 %v1513, 0.0
  %v1776 = vmin.f32 %v1518, 0.0
  %v1777 = vmin.f32 %v1523, 0.0
  %v1778 = vmin.f32 %v1528, 0.0
  %v1779 = vmin.f32 %v1533, 0.0
  %v1780 = vmin.f32 %v1538, 0.0
  %v1781 = vmin.f32 %v1543, 0.0
  %v1782 = vmin.f32 %v1548, 0.0
  %v1783 = vmin.f32 %v1553, 0.0
  %v1784 = vmin.f32 %v1558, 0.0
  %v1785 = vmin.f32 %v1563, 0.0
  %v1786 = vmin.f32 %v1568, 0.0
  %v1787 = vmin.f32 %v1573, 0.0
  %v1788 = vmin.f32 %v1578, 0.0
  %v1789 = vmin.f32 %v1583, 0.0
  %v1790 = vmin.f32 %v1588, 0.0
  %v1791 = vmin.f32 %v1593, 0.0
  %v1792 = vmin.f32 %v1598, 0.0
  %v1793 = vmin.f32 %v1603, 0.0
  %v1794 = vmin.f32 %v1608, 0.0
  %v1795 = vmin.f32 %v1613, 0.0
  %v1796 = vmin.f32 %v1618, 0.0
  %v1797 = vmin.f32 %v1623, 0.0
  %v1798 = vmin.f32 %v1628, 0.0
  %v1799 = vmin.f32 %v1633, 0.0
  %v1800 = vmin.f32 %v1638, 0.0
  %v1801 = vmin.f32 %v1643, 0.0
  %v1802 = vmin.f32 %v1648, 0.0
  %v1803 = vmin.f32 %v1653, 0.0
  %v1804 = vmin.f32 %v1658, 0.0
  %v1805 = vmin.f32 %v1663, 0.0
  %v1806 = vmin.f32 %v1668, 0.0
  %v1807 = vmin.f32 %v1673, 0.0
  %v1808 = vmin.f32 %v1678, 0.0
  %v1809 = vmin.f32 %v1683, 0.0
  %v1810 = vmin.f32 %v1688, 0.0
  %v1811 = vmin.f32 %v1693, 0.0
  %v1812 = vmin.f32 %v1698, 0.0
  %v1813 = vmin.f32 %v1703, 0.0
  %v1814 = vmin.f32 %v1708, 0.0
  %v1815 = vmin.f32 %v1713, 0.0
  %v1816 = vmin.f32 %v1718, 0.0
  %v1817 = vmin.f32 %v1723, 0.0
  %v1818 = vmin.f32 %v1728, 0.0
  %v1819 = vmin.f32 %v1733, 0.0
  %v1820 = vmin.f32 %v1738, 0.0
  %v1821 = vmin.f32 %v1743, 0.0
  %v1822 = vmin.f32 %v1748, 0.0
  %v1823 = vmin.f32 %v1753, 0.0
  %v1824 = vmin.f32 %v1758, 0.0
  %v1825 = vmul.f32 %v1761, 1.442695
  %v1826 = vpow.pop %v1825
  %v1827 = vmul.f32 %v1762, 1.442695
  %v1828 = vpow.pop %v1827
  %v1829 = vmul.f32 %v1763, 1.442695
  %v1830 = vpow.pop %v1829
  %v1831 = vmul.f32 %v1764, 1.442695
  %v1832 = vpow.pop %v1831
  %v1833 = vmul.f32 %v1765, 1.442695
  %v1834 = vpow.pop %v1833
  %v1835 = vmul.f32 %v1766, 1.442695
  %v1836 = vpow.pop %v1835
  %v1837 = vmul.f32 %v1767, 1.442695
  %v1838 = vpow.pop %v1837
  %v1839 = vmul.f32 %v1768, 1.442695
  %v1840 = vpow.pop %v1839
  %v1841 = vmul.f32 %v1769, 1.442695
  %v1842 = vpow.pop %v1841
  %v1843 = vmul.f32 %v1770, 1.442695
  %v1844 = vpow.pop %v1843
  %v1845 = vmul.f32 %v1771, 1.442695
  %v1846 = vpow.pop %v1845
  %v1847 = vmul.f32 %v1772, 1.442695
  %v1848 = vpow.pop %v1847
  %v1849 = vmul.f32 %v1773, 1.442695
  %v1850 = vpow.pop %v1849
  %v1851 = vmul.f32 %v1774, 1.442695
  %v1852 = vpow.pop %v1851
  %v1853 = vmul.f32 %v1775, 1.442695
  %v1854 = vpow.pop %v1853
  %v1855 = vmul.f32 %v1776, 1.442695
  %v1856 = vpow.pop %v1855
  %v1857 = vmul.f32 %v1777, 1.442695
  %v1858 = vpow.pop %v1857
  %v1859 = vmul.f32 %v1778, 1.442695
  %v1860 = vpow.pop %v1859
  %v1861 = vmul.f32 %v1779, 1.442695
  %v1862 = vpow.pop %v1861
  %v1863 = vmul.f32 %v1780, 1.442695
  %v1864 = vpow.pop %v1863
  %v1865 = vmul.f32 %v1781, 1.442695
  %v1866 = vpow.pop %v1865
  %v1867 = vmul.f32 %v1782, 1.442695
  %v1868 = vpow.pop %v1867
  %v1869 = vmul.f32 %v1783, 1.442695
  %v1870 = vpow.pop %v1869
  %v1871 = vmul.f32 %v1784, 1.442695
  %v1872 = vpow.pop %v1871
  %v1873 = vmul.f32 %v1785, 1.442695
  %v1874 = vpow.pop %v1873
  %v1875 = vmul.f32 %v1786, 1.442695
  %v1876 = vpow.pop %v1875
  %v1877 = vmul.f32 %v1787, 1.442695
  %v1878 = vpow.pop %v1877
  %v1879 = vmul.f32 %v1788, 1.442695
  %v1880 = vpow.pop %v1879
  %v1881 = vmul.f32 %v1789, 1.442695
  %v1882 = vpow.pop %v1881
  %v1883 = vmul.f32 %v1790, 1.442695
  %v1884 = vpow.pop %v1883
  %v1885 = vmul.f32 %v1791, 1.442695
  %v1886 = vpow.pop %v1885
  %v1887 = vmul.f32 %v1792, 1.442695
  %v1888 = vpow.pop %v1887
  %v1889 = vmul.f32 %v1793, 1.442695
  %v1890 = vpow.pop %v1889
  %v1891 = vmul.f32 %v1794, 1.442695
  %v1892 = vpow.pop %v1891
  %v1893 = vmul.f32 %v1795, 1.442695
  %v1894 = vpow.pop %v1893
  %v1895 = vmul.f32 %v1796, 1.442695
  %v1896 = vpow.pop %v1895
  %v1897 = vmul.f32 %v1797, 1.442695
  %v1898 = vpow.pop %v1897
  %v1899 = vmul.f32 %v1798, 1.442695
  %v1900 = vpow.pop %v1899
  %v1901 = vmul.f32 %v1799, 1.442695
  %v1902 = vpow.pop %v1901
  %v1903 = vmul.f32 %v1800, 1.442695
  %v1904 = vpow.pop %v1903
  %v1905 = vmul.f32 %v1801, 1.442695
  %v1906 = vpow.pop %v1905
  %v1907 = vmul.f32 %v1802, 1.442695
  %v1908 = vpow.pop %v1907
  %v1909 = vmul.f32 %v1803, 1.442695
  %v1910 = vpow.pop %v1909
  %v1911 = vmul.f32 %v1804, 1.442695
  %v1912 = vpow.pop %v1911
  %v1913 = vmul.f32 %v1805, 1.442695
  %v1914 = vpow.pop %v1913
  %v1915 = vmul.f32 %v1806, 1.442695
  %v1916 = vpow.pop %v1915
  %v1917 = vmul.f32 %v1807, 1.442695
  %v1918 = vpow.pop %v1917
  %v1919 = vmul.f32 %v1808, 1.442695
  %v1920 = vpow.pop %v1919
  %v1921 = vmul.f32 %v1809, 1.442695
  %v1922 = vpow.pop %v1921
  %v1923 = vmul.f32 %v1810, 1.442695
  %v1924 = vpow.pop %v1923
  %v1925 = vmul.f32 %v1811, 1.442695
  %v1926 = vpow.pop %v1925
  %v1927 = vmul.f32 %v1812, 1.442695
  %v1928 = vpow.pop %v1927
  %v1929 = vmul.f32 %v1813, 1.442695
  %v1930 = vpow.pop %v1929
  %v1931 = vmul.f32 %v1814, 1.442695
  %v1932 = vpow.pop %v1931
  %v1933 = vmul.f32 %v1815, 1.442695
  %v1934 = vpow.pop %v1933
  %v1935 = vmul.f32 %v1816, 1.442695
  %v1936 = vpow.pop %v1935
  %v1937 = vmul.f32 %v1817, 1.442695
  %v1938 = vpow.pop %v1937
  %v1939 = vmul.f32 %v1818, 1.442695
  %v1940 = vpow.pop %v1939
  %v1941 = vmul.f32 %v1819, 1.442695
  %v1942 = vpow.pop %v1941
  %v1943 = vmul.f32 %v1820, 1.442695
  %v1944 = vpow.pop %v1943
  %v1945 = vmul.f32 %v1821, 1.442695
  %v1946 = vpow.pop %v1945
  %v1947 = vmul.f32 %v1822, 1.442695
  %v1948 = vpow.pop %v1947
  %v1949 = vmul.f32 %v1823, 1.442695
  %v1950 = vpow.pop %v1949
  %v1951 = vmul.f32 %v1824, 1.442695
  %v1952 = vpow.pop %v1951
  %v1953 = vsub.f32 %v1826, 1.0
  %v1954 = vsub.f32 %v1828, 1.0
  %v1955 = vsub.f32 %v1830, 1.0
  %v1956 = vsub.f32 %v1832, 1.0
  %v1957 = vsub.f32 %v1834, 1.0
  %v1958 = vsub.f32 %v1836, 1.0
  %v1959 = vsub.f32 %v1838, 1.0
  %v1960 = vsub.f32 %v1840, 1.0
  %v1961 = vsub.f32 %v1842, 1.0
  %v1962 = vsub.f32 %v1844, 1.0
  %v1963 = vsub.f32 %v1846, 1.0
  %v1964 = vsub.f32 %v1848, 1.0
  %v1965 = vsub.f32 %v1850, 1.0
  %v1966 = vsub.f32 %v1852, 1.0
  %v1967 = vsub.f32 %v1854, 1.0
  %v1968 = vsub.f32 %v1856, 1.0
  %v1969 = vsub.f32 %v1858, 1.0
  %v1970 = vsub.f32 %v1860, 1.0
  %v1971 = vsub.f32 %v1862, 1.0
  %v1972 = vsub.f32 %v1864, 1.0
  %v1973 = vsub.f32 %v1866, 1.0
  %v1974 = vsub.f32 %v1868, 1.0
  %v1975 = vsub.f32 %v1870, 1.0
  %v1976 = vsub.f32 %v1872, 1.0
  %v1977 = vsub.f32 %v1874, 1.0
  %v1978 = vsub.f32 %v1876, 1.0
  %v1979 = vsub.f32 %v1878, 1.0
  %v1980 = vsub.f32 %v1880, 1.0
  %v1981 = vsub.f32 %v1882, 1.0
  %v1982 = vsub.f32 %v1884, 1.0
  %v1983 = vsub.f32 %v1886, 1.0
  %v1984 = vsub.f32 %v1888, 1.0
  %v1985 = vsub.f32 %v1890, 1.0
  %v1986 = vsub.f32 %v1892, 1.0
  %v1987 = vsub.f32 %v1894, 1.0
  %v1988 = vsub.f32 %v1896, 1.0
  %v1989 = vsub.f32 %v1898, 1.0
  %v1990 = vsub.f32 %v1900, 1.0
  %v1991 = vsub.f32 %v1902, 1.0
  %v1992 = vsub.f32 %v1904, 1.0
  %v1993 = vsub.f32 %v1906, 1.0
  %v1994 = vsub.f32 %v1908, 1.0
  %v1995 = vsub.f32 %v1910, 1.0
  %v1996 = vsub.f32 %v1912, 1.0
  %v1997 = vsub.f32 %v1914, 1.0
  %v1998 = vsub.f32 %v1916, 1.0
  %v1999 = vsub.f32 %v1918, 1.0
  %v2000 = vsub.f32 %v1920, 1.0
  %v2001 = vsub.f32 %v1922, 1.0
  %v2002 = vsub.f32 %v1924, 1.0
  %v2003 = vsub.f32 %v1926, 1.0
  %v2004 = vsub.f32 %v1928, 1.0
  %v2005 = vsub.f32 %v1930, 1.0
  %v2006 = vsub.f32 %v1932, 1.0
  %v2007 = vsub.f32 %v1934, 1.0
  %v2008 = vsub.f32 %v1936, 1.0
  %v2009 = vsub.f32 %v1938, 1.0
  %v2010 = vsub.f32 %v1940, 1.0
  %v2011 = vsub.f32 %v1942, 1.0
  %v2012 = vsub.f32 %v1944, 1.0
  %v2013 = vsub.f32 %v1946, 1.0
  %v2014 = vsub.f32 %v1948, 1.0
  %v2015 = vsub.f32 %v1950, 1.0
  %v2016 = vsub.f32 %v1952, 1.0
  %vm2017 = vcmp.gt.f32.partialorder %v1443, 0.0
  %vm2018 = vcmp.gt.f32.partialorder %v1448, 0.0
  %vm2019 = vcmp.gt.f32.partialorder %v1453, 0.0
  %vm2020 = vcmp.gt.f32.partialorder %v1458, 0.0
  %vm2021 = vcmp.gt.f32.partialorder %v1463, 0.0
  %vm2022 = vcmp.gt.f32.partialorder %v1468, 0.0
  %vm2023 = vcmp.gt.f32.partialorder %v1473, 0.0
  %vm2024 = vcmp.gt.f32.partialorder %v1478, 0.0
  %vm2025 = vcmp.gt.f32.partialorder %v1483, 0.0
  %vm2026 = vcmp.gt.f32.partialorder %v1488, 0.0
  %vm2027 = vcmp.gt.f32.partialorder %v1493, 0.0
  %vm2028 = vcmp.gt.f32.partialorder %v1498, 0.0
  %vm2029 = vcmp.gt.f32.partialorder %v1503, 0.0
  %vm2030 = vcmp.gt.f32.partialorder %v1508, 0.0
  %vm2031 = vcmp.gt.f32.partialorder %v1513, 0.0
  %vm2032 = vcmp.gt.f32.partialorder %v1518, 0.0
  %vm2033 = vcmp.gt.f32.partialorder %v1523, 0.0
  %vm2034 = vcmp.gt.f32.partialorder %v1528, 0.0
  %vm2035 = vcmp.gt.f32.partialorder %v1533, 0.0
  %vm2036 = vcmp.gt.f32.partialorder %v1538, 0.0
  %vm2037 = vcmp.gt.f32.partialorder %v1543, 0.0
  %vm2038 = vcmp.gt.f32.partialorder %v1548, 0.0
  %vm2039 = vcmp.gt.f32.partialorder %v1553, 0.0
  %vm2040 = vcmp.gt.f32.partialorder %v1558, 0.0
  %vm2041 = vcmp.gt.f32.partialorder %v1563, 0.0
  %vm2042 = vcmp.gt.f32.partialorder %v1568, 0.0
  %vm2043 = vcmp.gt.f32.partialorder %v1573, 0.0
  %vm2044 = vcmp.gt.f32.partialorder %v1578, 0.0
  %vm2045 = vcmp.gt.f32.partialorder %v1583, 0.0
  %vm2046 = vcmp.gt.f32.partialorder %v1588, 0.0
  %vm2047 = vcmp.gt.f32.partialorder %v1593, 0.0
  %vm2048 = vcmp.gt.f32.partialorder %v1598, 0.0
  %vm2049 = vcmp.gt.f32.partialorder %v1603, 0.0
  %vm2050 = vcmp.gt.f32.partialorder %v1608, 0.0
  %vm2051 = vcmp.gt.f32.partialorder %v1613, 0.0
  %vm2052 = vcmp.gt.f32.partialorder %v1618, 0.0
  %vm2053 = vcmp.gt.f32.partialorder %v1623, 0.0
  %vm2054 = vcmp.gt.f32.partialorder %v1628, 0.0
  %vm2055 = vcmp.gt.f32.partialorder %v1633, 0.0
  %vm2056 = vcmp.gt.f32.partialorder %v1638, 0.0
  %vm2057 = vcmp.gt.f32.partialorder %v1643, 0.0
  %vm2058 = vcmp.gt.f32.partialorder %v1648, 0.0
  %vm2059 = vcmp.gt.f32.partialorder %v1653, 0.0
  %vm2060 = vcmp.gt.f32.partialorder %v1658, 0.0
  %vm2061 = vcmp.gt.f32.partialorder %v1663, 0.0
  %vm2062 = vcmp.gt.f32.partialorder %v1668, 0.0
  %vm2063 = vcmp.gt.f32.partialorder %v1673, 0.0
  %vm2064 = vcmp.gt.f32.partialorder %v1678, 0.0
  %vm2065 = vcmp.gt.f32.partialorder %v1683, 0.0
  %vm2066 = vcmp.gt.f32.partialorder %v1688, 0.0
  %vm2067 = vcmp.gt.f32.partialorder %v1693, 0.0
  %vm2068 = vcmp.gt.f32.partialorder %v1698, 0.0
  %vm2069 = vcmp.gt.f32.partialorder %v1703, 0.0
  %vm2070 = vcmp.gt.f32.partialorder %v1708, 0.0
  %vm2071 = vcmp.gt.f32.partialorder %v1713, 0.0
  %vm2072 = vcmp.gt.f32.partialorder %v1718, 0.0
  %vm2073 = vcmp.gt.f32.partialorder %v1723, 0.0
  %vm2074 = vcmp.gt.f32.partialorder %v1728, 0.0
  %vm2075 = vcmp.gt.f32.partialorder %v1733, 0.0
  %vm2076 = vcmp.gt.f32.partialorder %v1738, 0.0
  %vm2077 = vcmp.gt.f32.partialorder %v1743, 0.0
  %vm2078 = vcmp.gt.f32.partialorder %v1748, 0.0
  %vm2079 = vcmp.gt.f32.partialorder %v1753, 0.0
  %vm2080 = vcmp.gt.f32.partialorder %v1758, 0.0
  %v2081 = vsel %vm2017, %v1443, %v1953
  %v2082 = vsel %vm2018, %v1448, %v1954
  %v2083 = vsel %vm2019, %v1453, %v1955
  %v2084 = vsel %vm2020, %v1458, %v1956
  %v2085 = vsel %vm2021, %v1463, %v1957
  %v2086 = vsel %vm2022, %v1468, %v1958
  %v2087 = vsel %vm2023, %v1473, %v1959
  %v2088 = vsel %vm2024, %v1478, %v1960
  %v2089 = vsel %vm2025, %v1483, %v1961
  %v2090 = vsel %vm2026, %v1488, %v1962
  %v2091 = vsel %vm2027, %v1493, %v1963
  %v2092 = vsel %vm2028, %v1498, %v1964
  %v2093 = vsel %vm2029, %v1503, %v1965
  %v2094 = vsel %vm2030, %v1508, %v1966
  %v2095 = vsel %vm2031, %v1513, %v1967
  %v2096 = vsel %vm2032, %v1518, %v1968
  %v2097 = vsel %vm2033, %v1523, %v1969
  %v2098 = vsel %vm2034, %v1528, %v1970
  %v2099 = vsel %vm2035, %v1533, %v1971
  %v2100 = vsel %vm2036, %v1538, %v1972
  %v2101 = vsel %vm2037, %v1543, %v1973
  %v2102 = vsel %vm2038, %v1548, %v1974
  %v2103 = vsel %vm2039, %v1553, %v1975
  %v2104 = vsel %vm2040, %v1558, %v1976
  %v2105 = vsel %vm2041, %v1563, %v1977
  %v2106 = vsel %vm2042, %v1568, %v1978
  %v2107 = vsel %vm2043, %v1573, %v1979
  %v2108 = vsel %vm2044, %v1578, %v1980
  %v2109 = vsel %vm2045, %v1583, %v1981
  %v2110 = vsel %vm2046, %v1588, %v1982
  %v2111 = vsel %vm2047, %v1593, %v1983
  %v2112 = vsel %vm2048, %v1598, %v1984
  %v2113 = vsel %vm2049, %v1603, %v1985
  %v2114 = vsel %vm2050, %v1608, %v1986
  %v2115 = vsel %vm2051, %v1613, %v1987
  %v2116 = vsel %vm2052, %v1618, %v1988
  %v2117 = vsel %vm2053, %v1623, %v1989
  %v2118 = vsel %vm2054, %v1628, %v1990
  %v2119 = vsel %vm2055, %v1633, %v1991
  %v2120 = vsel %vm2056, %v1638, %v1992
  %v2121 = vsel %vm2057, %v1643, %v1993
  %v2122 = vsel %vm2058, %v1648, %v1994
  %v2123 = vsel %vm2059, %v1653, %v1995
  %v2124 = vsel %vm2060, %v1658, %v1996
  %v2125 = vsel %vm2061, %v1663, %v1997
  %v2126 = vsel %vm2062, %v1668, %v1998
  %v2127 = vsel %vm2063, %v1673, %v1999
  %v2128 = vsel %vm2064, %v1678, %v2000
  %v2129 = vsel %vm2065, %v1683, %v2001
  %v2130 = vsel %vm2066, %v1688, %v2002
  %v2131 = vsel %vm2067, %v1693, %v2003
  %v2132 = vsel %vm2068, %v1698, %v2004
  %v2133 = vsel %vm2069, %v1703, %v2005
  %v2134 = vsel %vm2070, %v1708, %v2006
  %v2135 = vsel %vm2071, %v1713, %v2007
  %v2136 = vsel %vm2072, %v1718, %v2008
  %v2137 = vsel %vm2073, %v1723, %v2009
  %v2138 = vsel %vm2074, %v1728, %v2010
  %v2139 = vsel %vm2075, %v1733, %v2011
  %v2140 = vsel %vm2076, %v1738, %v2012
  %v2141 = vsel %vm2077, %v1743, %v2013
  %v2142 = vsel %vm2078, %v1748, %v2014
  %v2143 = vsel %vm2079, %v1753, %v2015
  %v2144 = vsel %vm2080, %v1758, %v2016
  %2145 = vst.msk [vmem:[%s3] sm:$0xff] %vm413, %v2081
  %2146 = vst.msk [vmem:[%s3 + $0x8] sm:$0xff] %vm413, %v2082
  %2147 = vst.msk [vmem:[%s3 + $0x10] sm:$0xff] %vm413, %v2083
  %2148 = vst.msk [vmem:[%s3 + $0x18] sm:$0xff] %vm413, %v2084
  %2149 = vst.msk [vmem:[%s3 + $0x20] sm:$0xff] %vm413, %v2085
  %2150 = vst.msk [vmem:[%s3 + $0x28] sm:$0xff] %vm413, %v2086
  %2151 = vst.msk [vmem:[%s3 + $0x30] sm:$0xff] %vm413, %v2087
  %2152 = vst.msk [vmem:[%s3 + $0x38] sm:$0xff] %vm413, %v2088
  %2153 = vst.msk [vmem:[%s3 + $0x40] sm:$0xff] %vm413, %v2089
  %2154 = vst.msk [vmem:[%s3 + $0x48] sm:$0xff] %vm413, %v2090
  %2155 = vst.msk [vmem:[%s3 + $0x50] sm:$0xff] %vm413, %v2091
  %2156 = vst.msk [vmem:[%s3 + $0x58] sm:$0xff] %vm413, %v2092
  %2157 = vst.msk [vmem:[%s3 + $0x60] sm:$0xff] %vm413, %v2093
  %2158 = vst.msk [vmem:[%s3 + $0x68] sm:$0xff] %vm413, %v2094
  %2159 = vst.msk [vmem:[%s3 + $0x70] sm:$0xff] %vm413, %v2095
  %2160 = vst.msk [vmem:[%s3 + $0x78] sm:$0xff] %vm413, %v2096
  %2161 = vst.msk [vmem:[%s3 + $0x80] sm:$0xff] %vm413, %v2097
  %2162 = vst.msk [vmem:[%s3 + $0x88] sm:$0xff] %vm413, %v2098
  %2163 = vst.msk [vmem:[%s3 + $0x90] sm:$0xff] %vm413, %v2099
  %2164 = vst.msk [vmem:[%s3 + $0x98] sm:$0xff] %vm413, %v2100
  %2165 = vst.msk [vmem:[%s3 + $0xa0] sm:$0xff] %vm413, %v2101
  %2166 = vst.msk [vmem:[%s3 + $0xa8] sm:$0xff] %vm413, %v2102
  %2167 = vst.msk [vmem:[%s3 + $0xb0] sm:$0xff] %vm413, %v2103
  %2168 = vst.msk [vmem:[%s3 + $0xb8] sm:$0xff] %vm413, %v2104
  %2169 = vst.msk [vmem:[%s3 + $0xc0] sm:$0xff] %vm413, %v2105
  %2170 = vst.msk [vmem:[%s3 + $0xc8] sm:$0xff] %vm413, %v2106
  %2171 = vst.msk [vmem:[%s3 + $0xd0] sm:$0xff] %vm413, %v2107
  %2172 = vst.msk [vmem:[%s3 + $0xd8] sm:$0xff] %vm413, %v2108
  %2173 = vst.msk [vmem:[%s3 + $0xe0] sm:$0xff] %vm413, %v2109
  %2174 = vst.msk [vmem:[%s3 + $0xe8] sm:$0xff] %vm413, %v2110
  %2175 = vst.msk [vmem:[%s3 + $0xf0] sm:$0xff] %vm413, %v2111
  %2176 = vst.msk [vmem:[%s3 + $0xf8] sm:$0xff] %vm413, %v2112
  %2177 = vst.msk [vmem:[%s3 + $0x100] sm:$0xff] %vm413, %v2113
  %2178 = vst.msk [vmem:[%s3 + $0x108] sm:$0xff] %vm413, %v2114
  %2179 = vst.msk [vmem:[%s3 + $0x110] sm:$0xff] %vm413, %v2115
  %2180 = vst.msk [vmem:[%s3 + $0x118] sm:$0xff] %vm413, %v2116
  %2181 = vst.msk [vmem:[%s3 + $0x120] sm:$0xff] %vm413, %v2117
  %2182 = vst.msk [vmem:[%s3 + $0x128] sm:$0xff] %vm413, %v2118
  %2183 = vst.msk [vmem:[%s3 + $0x130] sm:$0xff] %vm413, %v2119
  %2184 = vst.msk [vmem:[%s3 + $0x138] sm:$0xff] %vm413, %v2120
  %2185 = vst.msk [vmem:[%s3 + $0x140] sm:$0xff] %vm413, %v2121
  %2186 = vst.msk [vmem:[%s3 + $0x148] sm:$0xff] %vm413, %v2122
  %2187 = vst.msk [vmem:[%s3 + $0x150] sm:$0xff] %vm413, %v2123
  %2188 = vst.msk [vmem:[%s3 + $0x158] sm:$0xff] %vm413, %v2124
  %2189 = vst.msk [vmem:[%s3 + $0x160] sm:$0xff] %vm413, %v2125
  %2190 = vst.msk [vmem:[%s3 + $0x168] sm:$0xff] %vm413, %v2126
  %2191 = vst.msk [vmem:[%s3 + $0x170] sm:$0xff] %vm413, %v2127
  %2192 = vst.msk [vmem:[%s3 + $0x178] sm:$0xff] %vm413, %v2128
  %2193 = vst.msk [vmem:[%s3 + $0x180] sm:$0xff] %vm413, %v2129
  %2194 = vst.msk [vmem:[%s3 + $0x188] sm:$0xff] %vm413, %v2130
  %2195 = vst.msk [vmem:[%s3 + $0x190] sm:$0xff] %vm413, %v2131
  %2196 = vst.msk [vmem:[%s3 + $0x198] sm:$0xff] %vm413, %v2132
  %2197 = vst.msk [vmem:[%s3 + $0x1a0] sm:$0xff] %vm413, %v2133
  %2198 = vst.msk [vmem:[%s3 + $0x1a8] sm:$0xff] %vm413, %v2134
  %2199 = vst.msk [vmem:[%s3 + $0x1b0] sm:$0xff] %vm413, %v2135
  %2200 = vst.msk [vmem:[%s3 + $0x1b8] sm:$0xff] %vm413, %v2136
  %2201 = vst.msk [vmem:[%s3 + $0x1c0] sm:$0xff] %vm413, %v2137
  %2202 = vst.msk [vmem:[%s3 + $0x1c8] sm:$0xff] %vm413, %v2138
  %2203 = vst.msk [vmem:[%s3 + $0x1d0] sm:$0xff] %vm413, %v2139
  %2204 = vst.msk [vmem:[%s3 + $0x1d8] sm:$0xff] %vm413, %v2140
  %2205 = vst.msk [vmem:[%s3 + $0x1e0] sm:$0xff] %vm413, %v2141
  %2206 = vst.msk [vmem:[%s3 + $0x1e8] sm:$0xff] %vm413, %v2142
  %2207 = vst.msk [vmem:[%s3 + $0x1f0] sm:$0xff] %vm413, %v2143
  %2208 = vst.msk [vmem:[%s3 + $0x1f8] sm:$0xff] %vm413, %v2144
  // Predicated region
  $region14: #{image_encoder_bg.6} parent=0 // pred_check
    _
  $region15: #{image_encoder_bg.6} parent=0 // pred_check_branch
    %2210 = sbr.rel (0) target = $region17
  $region16: #{image_encoder_bg.6} parent=0 // pred_region
    _
  $region17: #{image_encoder_bg.6} parent=0 // pred_fallthru
    _
  // Predicated region
  $region18: #{image_encoder_bg.6} parent=0 // pred_check
    _
  $region19: #{image_encoder_bg.6} parent=0 // pred_check_branch
    %2212 = sbr.rel (0) target = $region21
  $region20: #{image_encoder_bg.6} parent=0 // pred_region
    _
  $region21: #{image_encoder_bg.6} parent=0 // pred_fallthru
    _

// kernel: image_encoder_bg.7
$region0: #{image_encoder_bg.7}
  #allocation0 [shape = 'u32[]', space=smem, size = 0x4, offset = 0x4, fixed_abs, tag = 'smem constant byte address 0x4 - core index']
  #allocation1 [shape = 'u32[144,128]{1,0:T(1,128)}', space=vmem, size = 0x12000, scoped, tag = 'internal scratch']
  %s0 = inlined_call_operand.vmem [shape: f32[128,576], index: 0, kind: input, shape index: {}]
  %s1 = inlined_call_operand.vmem [shape: f32[576,64], index: 1, kind: input, shape index: {}]
  %s2 = inlined_call_operand.vmem [shape: f32[1,64], index: 2, kind: input, shape index: {}]
  %s3 = inlined_call_operand.vmem [shape: f32[128,64], index: 3, kind: output, shape index: {}]
  %s4 = sld [smem:[#allocation0]]
  $region22: #{image_encoder_bg.7} parent=0
    _
  %s6 = ssub.s32 1, %s4
  %s7 = scalar_select 0, %s6, %s4
  // Predicated region
  $region2: #{image_encoder_bg.7} parent=0 // pred_check
    _
  $region3: #{image_encoder_bg.7} parent=0 // pred_check_branch
    %9 = sbr.rel (0) target = $region5
  $region4: #{image_encoder_bg.7} parent=0 // pred_region
    _
  $region5: #{image_encoder_bg.7} parent=0 // pred_fallthru
    _
  // Predicated region
  $region6: #{image_encoder_bg.7} parent=0 // pred_check
    _
  $region7: #{image_encoder_bg.7} parent=0 // pred_check_branch
    %11 = sbr.rel (0) target = $region9
  $region8: #{image_encoder_bg.7} parent=0 // pred_region
    _
  $region9: #{image_encoder_bg.7} parent=0 // pred_fallthru
    _
  // Predicated region
  $region10: #{image_encoder_bg.7} parent=0 // pred_check
    _
  $region11: #{image_encoder_bg.7} parent=0 // pred_check_branch
    %13 = sbr.rel (0) target = $region13
  $region12: #{image_encoder_bg.7} parent=0 // pred_region
    _
  $region13: #{image_encoder_bg.7} parent=0 // pred_fallthru
    _
  %v14 = vld [vmem:[%s0] sm:$0xff]
  %v15 = vld [vmem:[%s0 + $0x8] sm:$0xff]
  %v16 = vld [vmem:[%s0 + $0x10] sm:$0xff]
  %v17 = vld [vmem:[%s0 + $0x18] sm:$0xff]
  %v18 = vld [vmem:[%s0 + $0x20] sm:$0xff]
  %v19 = vld [vmem:[%s0 + $0x28] sm:$0xff]
  %v20 = vld [vmem:[%s0 + $0x30] sm:$0xff]
  %v21 = vld [vmem:[%s0 + $0x38] sm:$0xff]
  %v22 = vld [vmem:[%s0 + $0x40] sm:$0xff]
  %v23 = vld [vmem:[%s0 + $0x48] sm:$0xff]
  %v24 = vld [vmem:[%s0 + $0x50] sm:$0xff]
  %v25 = vld [vmem:[%s0 + $0x58] sm:$0xff]
  %v26 = vld [vmem:[%s0 + $0x60] sm:$0xff]
  %v27 = vld [vmem:[%s0 + $0x68] sm:$0xff]
  %v28 = vld [vmem:[%s0 + $0x70] sm:$0xff]
  %v29 = vld [vmem:[%s0 + $0x78] sm:$0xff]
  %v30 = vld [vmem:[%s0 + $0x80] sm:$0xff]
  %v31 = vld [vmem:[%s0 + $0x88] sm:$0xff]
  %v32 = vld [vmem:[%s0 + $0x90] sm:$0xff]
  %v33 = vld [vmem:[%s0 + $0x98] sm:$0xff]
  %v34 = vld [vmem:[%s0 + $0xa0] sm:$0xff]
  %v35 = vld [vmem:[%s0 + $0xa8] sm:$0xff]
  %v36 = vld [vmem:[%s0 + $0xb0] sm:$0xff]
  %v37 = vld [vmem:[%s0 + $0xb8] sm:$0xff]
  %v38 = vld [vmem:[%s0 + $0xc0] sm:$0xff]
  %v39 = vld [vmem:[%s0 + $0xc8] sm:$0xff]
  %v40 = vld [vmem:[%s0 + $0xd0] sm:$0xff]
  %v41 = vld [vmem:[%s0 + $0xd8] sm:$0xff]
  %v42 = vld [vmem:[%s0 + $0xe0] sm:$0xff]
  %v43 = vld [vmem:[%s0 + $0xe8] sm:$0xff]
  %v44 = vld [vmem:[%s0 + $0xf0] sm:$0xff]
  %v45 = vld [vmem:[%s0 + $0xf8] sm:$0xff]
  %v46 = vld [vmem:[%s0 + $0x100] sm:$0xff]
  %v47 = vld [vmem:[%s0 + $0x108] sm:$0xff]
  %v48 = vld [vmem:[%s0 + $0x110] sm:$0xff]
  %v49 = vld [vmem:[%s0 + $0x118] sm:$0xff]
  %v50 = vld [vmem:[%s0 + $0x120] sm:$0xff]
  %v51 = vld [vmem:[%s0 + $0x128] sm:$0xff]
  %v52 = vld [vmem:[%s0 + $0x130] sm:$0xff]
  %v53 = vld [vmem:[%s0 + $0x138] sm:$0xff]
  %v54 = vld [vmem:[%s0 + $0x140] sm:$0xff]
  %v55 = vld [vmem:[%s0 + $0x148] sm:$0xff]
  %v56 = vld [vmem:[%s0 + $0x150] sm:$0xff]
  %v57 = vld [vmem:[%s0 + $0x158] sm:$0xff]
  %v58 = vld [vmem:[%s0 + $0x160] sm:$0xff]
  %v59 = vld [vmem:[%s0 + $0x168] sm:$0xff]
  %v60 = vld [vmem:[%s0 + $0x170] sm:$0xff]
  %v61 = vld [vmem:[%s0 + $0x178] sm:$0xff]
  %v62 = vld [vmem:[%s0 + $0x180] sm:$0xff]
  %v63 = vld [vmem:[%s0 + $0x188] sm:$0xff]
  %v64 = vld [vmem:[%s0 + $0x190] sm:$0xff]
  %v65 = vld [vmem:[%s0 + $0x198] sm:$0xff]
  %v66 = vld [vmem:[%s0 + $0x1a0] sm:$0xff]
  %v67 = vld [vmem:[%s0 + $0x1a8] sm:$0xff]
  %v68 = vld [vmem:[%s0 + $0x1b0] sm:$0xff]
  %v69 = vld [vmem:[%s0 + $0x1b8] sm:$0xff]
  %v70 = vld [vmem:[%s0 + $0x1c0] sm:$0xff]
  %v71 = vld [vmem:[%s0 + $0x1c8] sm:$0xff]
  %v72 = vld [vmem:[%s0 + $0x1d0] sm:$0xff]
  %v73 = vld [vmem:[%s0 + $0x1d8] sm:$0xff]
  %v74 = vld [vmem:[%s0 + $0x1e0] sm:$0xff]
  %v75 = vld [vmem:[%s0 + $0x1e8] sm:$0xff]
  %v76 = vld [vmem:[%s0 + $0x1f0] sm:$0xff]
  %v77 = vld [vmem:[%s0 + $0x1f8] sm:$0xff]
  %v78 = vld [vmem:[%s0 + $0x200] sm:$0xff]
  %v79 = vld [vmem:[%s0 + $0x208] sm:$0xff]
  %v80 = vld [vmem:[%s0 + $0x210] sm:$0xff]
  %v81 = vld [vmem:[%s0 + $0x218] sm:$0xff]
  %v82 = vld [vmem:[%s0 + $0x220] sm:$0xff]
  %v83 = vld [vmem:[%s0 + $0x228] sm:$0xff]
  %v84 = vld [vmem:[%s0 + $0x230] sm:$0xff]
  %v85 = vld [vmem:[%s0 + $0x238] sm:$0xff]
  %v86 = vld [vmem:[%s0 + $0x240] sm:$0xff]
  %v87 = vld [vmem:[%s0 + $0x248] sm:$0xff]
  %v88 = vld [vmem:[%s0 + $0x250] sm:$0xff]
  %v89 = vld [vmem:[%s0 + $0x258] sm:$0xff]
  %v90 = vld [vmem:[%s0 + $0x260] sm:$0xff]
  %v91 = vld [vmem:[%s0 + $0x268] sm:$0xff]
  %v92 = vld [vmem:[%s0 + $0x270] sm:$0xff]
  %v93 = vld [vmem:[%s0 + $0x278] sm:$0xff]
  %v94 = vld [vmem:[%s1] sm:$0xff]
  %v95 = vld [vmem:[%s1 + $0x8] sm:$0xff]
  %v96 = vld [vmem:[%s1 + $0x10] sm:$0xff]
  %v97 = vld [vmem:[%s1 + $0x18] sm:$0xff]
  %v98 = vld [vmem:[%s1 + $0x20] sm:$0xff]
  %v99 = vld [vmem:[%s1 + $0x28] sm:$0xff]
  %v100 = vld [vmem:[%s1 + $0x30] sm:$0xff]
  %v101 = vld [vmem:[%s1 + $0x38] sm:$0xff]
  %v102 = vld [vmem:[%s1 + $0x40] sm:$0xff]
  %v103 = vld [vmem:[%s1 + $0x48] sm:$0xff]
  %v104 = vld [vmem:[%s1 + $0x50] sm:$0xff]
  %v105 = vld [vmem:[%s1 + $0x58] sm:$0xff]
  %v106 = vld [vmem:[%s1 + $0x60] sm:$0xff]
  %v107 = vld [vmem:[%s1 + $0x68] sm:$0xff]
  %v108 = vld [vmem:[%s1 + $0x70] sm:$0xff]
  %v109 = vld [vmem:[%s1 + $0x78] sm:$0xff]
  %v110 = vld [vmem:[%s1 + $0x80] sm:$0xff]
  %v111 = vld [vmem:[%s1 + $0x88] sm:$0xff]
  %v112 = vld [vmem:[%s1 + $0x90] sm:$0xff]
  %v113 = vld [vmem:[%s1 + $0x98] sm:$0xff]
  %v114 = vld [vmem:[%s1 + $0xa0] sm:$0xff]
  %v115 = vld [vmem:[%s1 + $0xa8] sm:$0xff]
  %v116 = vld [vmem:[%s1 + $0xb0] sm:$0xff]
  %v117 = vld [vmem:[%s1 + $0xb8] sm:$0xff]
  %v118 = vld [vmem:[%s1 + $0xc0] sm:$0xff]
  %v119 = vld [vmem:[%s1 + $0xc8] sm:$0xff]
  %v120 = vld [vmem:[%s1 + $0xd0] sm:$0xff]
  %v121 = vld [vmem:[%s1 + $0xd8] sm:$0xff]
  %v122 = vld [vmem:[%s1 + $0xe0] sm:$0xff]
  %v123 = vld [vmem:[%s1 + $0xe8] sm:$0xff]
  %v124 = vld [vmem:[%s1 + $0xf0] sm:$0xff]
  %v125 = vld [vmem:[%s1 + $0xf8] sm:$0xff]
  %v126 = vld [vmem:[%s1 + $0x100] sm:$0xff]
  %v127 = vld [vmem:[%s1 + $0x108] sm:$0xff]
  %v128 = vld [vmem:[%s1 + $0x110] sm:$0xff]
  %v129 = vld [vmem:[%s1 + $0x118] sm:$0xff]
  %v130 = vld [vmem:[%s1 + $0x120] sm:$0xff]
  %v131 = vld [vmem:[%s1 + $0x128] sm:$0xff]
  %v132 = vld [vmem:[%s1 + $0x130] sm:$0xff]
  %v133 = vld [vmem:[%s1 + $0x138] sm:$0xff]
  %v134 = vld [vmem:[%s1 + $0x140] sm:$0xff]
  %v135 = vld [vmem:[%s1 + $0x148] sm:$0xff]
  %v136 = vld [vmem:[%s1 + $0x150] sm:$0xff]
  %v137 = vld [vmem:[%s1 + $0x158] sm:$0xff]
  %v138 = vld [vmem:[%s1 + $0x160] sm:$0xff]
  %v139 = vld [vmem:[%s1 + $0x168] sm:$0xff]
  %v140 = vld [vmem:[%s1 + $0x170] sm:$0xff]
  %v141 = vld [vmem:[%s1 + $0x178] sm:$0xff]
  %v142 = vld [vmem:[%s1 + $0x180] sm:$0xff]
  %v143 = vld [vmem:[%s1 + $0x188] sm:$0xff]
  %v144 = vld [vmem:[%s1 + $0x190] sm:$0xff]
  %v145 = vld [vmem:[%s1 + $0x198] sm:$0xff]
  %v146 = vld [vmem:[%s1 + $0x1a0] sm:$0xff]
  %v147 = vld [vmem:[%s1 + $0x1a8] sm:$0xff]
  %v148 = vld [vmem:[%s1 + $0x1b0] sm:$0xff]
  %v149 = vld [vmem:[%s1 + $0x1b8] sm:$0xff]
  %v150 = vld [vmem:[%s1 + $0x1c0] sm:$0xff]
  %v151 = vld [vmem:[%s1 + $0x1c8] sm:$0xff]
  %v152 = vld [vmem:[%s1 + $0x1d0] sm:$0xff]
  %v153 = vld [vmem:[%s1 + $0x1d8] sm:$0xff]
  %v154 = vld [vmem:[%s1 + $0x1e0] sm:$0xff]
  %v155 = vld [vmem:[%s1 + $0x1e8] sm:$0xff]
  %v156 = vld [vmem:[%s1 + $0x1f0] sm:$0xff]
  %v157 = vld [vmem:[%s1 + $0x1f8] sm:$0xff]
  %v158 = vld [vmem:[%s1 + $0x200] sm:$0xff]
  %v159 = vld [vmem:[%s1 + $0x208] sm:$0xff]
  %v160 = vld [vmem:[%s1 + $0x210] sm:$0xff]
  %v161 = vld [vmem:[%s1 + $0x218] sm:$0xff]
  %v162 = vld [vmem:[%s1 + $0x220] sm:$0xff]
  %v163 = vld [vmem:[%s1 + $0x228] sm:$0xff]
  %v164 = vld [vmem:[%s1 + $0x230] sm:$0xff]
  %v165 = vld [vmem:[%s1 + $0x238] sm:$0xff]
  %v166 = vld [vmem:[%s2] sm:$0x1]
  %v168 = vlaneseq
  %v169 = vshrl.u32 %v168, 7
  %v170 = vsub.s32 0, %v169
  %v171 = vrot.slane %v166, %v170
  %vm173 = vcmask 523264
  %v175 = vsel %vm173, %v18, 0
  %v178 = vsel %vm173, %v23, 0
  %v181 = vsel %vm173, %v28, 0
  %v184 = vsel %vm173, %v33, 0
  %v187 = vsel %vm173, %v38, 0
  %v190 = vsel %vm173, %v43, 0
  %v193 = vsel %vm173, %v48, 0
  %v196 = vsel %vm173, %v53, 0
  %v199 = vsel %vm173, %v58, 0
  %v202 = vsel %vm173, %v63, 0
  %v205 = vsel %vm173, %v68, 0
  %v208 = vsel %vm173, %v73, 0
  %v211 = vsel %vm173, %v78, 0
  %v214 = vsel %vm173, %v83, 0
  %v217 = vsel %vm173, %v88, 0
  %v220 = vsel %vm173, %v93, 0
  %222 = vmatprep.subr.mxu0 0.0
  %223 = vmatpush1.msra.mxu0 %v109
  %224 = vmatprep.subr.mxu0 0.0
  %225 = vmatpush1.msra.mxu0 %v108
  %226 = vmatprep.subr.mxu0 0.0
  %227 = vmatpush1.msra.mxu0 %v107
  %228 = vmatprep.subr.mxu0 0.0
  %229 = vmatpush1.msra.mxu0 %v106
  %230 = vmatprep.subr.mxu0 0.0
  %231 = vmatpush1.msra.mxu0 %v105
  %232 = vmatprep.subr.mxu0 0.0
  %233 = vmatpush1.msra.mxu0 %v104
  %234 = vmatprep.subr.mxu0 0.0
  %235 = vmatpush1.msra.mxu0 %v103
  %236 = vmatprep.subr.mxu0 0.0
  %237 = vmatpush1.msra.mxu0 %v102
  %238 = vmatprep.subr.mxu0 0.0
  %239 = vmatpush1.msra.mxu0 %v101
  %240 = vmatprep.subr.mxu0 0.0
  %241 = vmatpush1.msra.mxu0 %v100
  %242 = vmatprep.subr.mxu0 0.0
  %243 = vmatpush1.msra.mxu0 %v99
  %244 = vmatprep.subr.mxu0 0.0
  %245 = vmatpush1.msra.mxu0 %v98
  %246 = vmatprep.subr.mxu0 0.0
  %247 = vmatpush1.msra.mxu0 %v97
  %248 = vmatprep.subr.mxu0 0.0
  %249 = vmatpush1.msra.mxu0 %v96
  %250 = vmatprep.subr.mxu0 0.0
  %251 = vmatpush1.msra.mxu0 %v95
  %252 = vmatprep.subr.mxu0 0.0
  %253 = vmatpush1.msra.mxu0 %v94
  %254 = vmatprep.subr.mxu0 0.0
  %255 = vmatpush2.msra.mxu0 %v125
  %256 = vmatprep.subr.mxu0 0.0
  %257 = vmatpush2.msra.mxu0 %v124
  %258 = vmatprep.subr.mxu0 0.0
  %259 = vmatpush2.msra.mxu0 %v123
  %260 = vmatprep.subr.mxu0 0.0
  %261 = vmatpush2.msra.mxu0 %v122
  %262 = vmatprep.subr.mxu0 0.0
  %263 = vmatpush2.msra.mxu0 %v121
  %264 = vmatprep.subr.mxu0 0.0
  %265 = vmatpush2.msra.mxu0 %v120
  %266 = vmatprep.subr.mxu0 0.0
  %267 = vmatpush2.msra.mxu0 %v119
  %268 = vmatprep.subr.mxu0 0.0
  %269 = vmatpush2.msra.mxu0 %v118
  %270 = vmatprep.subr.mxu0 0.0
  %271 = vmatpush2.msra.mxu0 %v117
  %272 = vmatprep.subr.mxu0 0.0
  %273 = vmatpush2.msra.mxu0 %v116
  %274 = vmatprep.subr.mxu0 0.0
  %275 = vmatpush2.msra.mxu0 %v115
  %276 = vmatprep.subr.mxu0 0.0
  %277 = vmatpush2.msra.mxu0 %v114
  %278 = vmatprep.subr.mxu0 0.0
  %279 = vmatpush2.msra.mxu0 %v113
  %280 = vmatprep.subr.mxu0 0.0
  %281 = vmatpush2.msra.mxu0 %v112
  %282 = vmatprep.subr.mxu0 0.0
  %283 = vmatpush2.msra.mxu0 %v111
  %284 = vmatprep.subr.mxu0 0.0
  %285 = vmatpush2.msra.mxu0 %v110
  %286 = vmatprep.mubr.f32.mxu0 %v15
  %287 = vmatmul.mubr.f32.gmra.mxu0 %v14
  %v288 = vpop.f32.mrf.mxu0
  %v289 = vadd.f32 %v171, %v288
  %v290 = vpop.f32.mrf.mxu0
  %291 = vmatprep.mubr.f32.mxu0 %v20
  %292 = vmatmul.mubr.f32.gmra.mxu0 %v19
  %v293 = vpop.f32.mrf.mxu0
  %v294 = vadd.f32 %v171, %v293
  %v295 = vpop.f32.mrf.mxu0
  %296 = vmatprep.mubr.f32.mxu0 %v25
  %297 = vmatmul.mubr.f32.gmra.mxu0 %v24
  %v298 = vpop.f32.mrf.mxu0
  %v299 = vadd.f32 %v171, %v298
  %v300 = vpop.f32.mrf.mxu0
  %301 = vmatprep.mubr.f32.mxu0 %v30
  %302 = vmatmul.mubr.f32.gmra.mxu0 %v29
  %v303 = vpop.f32.mrf.mxu0
  %v304 = vadd.f32 %v171, %v303
  %v305 = vpop.f32.mrf.mxu0
  %306 = vmatprep.mubr.f32.mxu0 %v35
  %307 = vmatmul.mubr.f32.gmra.mxu0 %v34
  %v308 = vpop.f32.mrf.mxu0
  %v309 = vadd.f32 %v171, %v308
  %v310 = vpop.f32.mrf.mxu0
  %311 = vmatprep.mubr.f32.mxu0 %v40
  %312 = vmatmul.mubr.f32.gmra.mxu0 %v39
  %v313 = vpop.f32.mrf.mxu0
  %v314 = vadd.f32 %v171, %v313
  %v315 = vpop.f32.mrf.mxu0
  %316 = vmatprep.mubr.f32.mxu0 %v45
  %317 = vmatmul.mubr.f32.gmra.mxu0 %v44
  %v318 = vpop.f32.mrf.mxu0
  %v319 = vadd.f32 %v171, %v318
  %v320 = vpop.f32.mrf.mxu0
  %321 = vmatprep.mubr.f32.mxu0 %v50
  %322 = vmatmul.mubr.f32.gmra.mxu0 %v49
  %v323 = vpop.f32.mrf.mxu0
  %v324 = vadd.f32 %v171, %v323
  %v325 = vpop.f32.mrf.mxu0
  %326 = vmatprep.mubr.f32.mxu0 %v55
  %327 = vmatmul.mubr.f32.gmra.mxu0 %v54
  %v328 = vpop.f32.mrf.mxu0
  %v329 = vadd.f32 %v171, %v328
  %v330 = vpop.f32.mrf.mxu0
  %331 = vmatprep.mubr.f32.mxu0 %v60
  %332 = vmatmul.mubr.f32.gmra.mxu0 %v59
  %v333 = vpop.f32.mrf.mxu0
  %v334 = vadd.f32 %v171, %v333
  %v335 = vpop.f32.mrf.mxu0
  %336 = vmatprep.mubr.f32.mxu0 %v65
  %337 = vmatmul.mubr.f32.gmra.mxu0 %v64
  %v338 = vpop.f32.mrf.mxu0
  %v339 = vadd.f32 %v171, %v338
  %v340 = vpop.f32.mrf.mxu0
  %341 = vmatprep.mubr.f32.mxu0 %v70
  %342 = vmatmul.mubr.f32.gmra.mxu0 %v69
  %v343 = vpop.f32.mrf.mxu0
  %v344 = vadd.f32 %v171, %v343
  %v345 = vpop.f32.mrf.mxu0
  %346 = vmatprep.mubr.f32.mxu0 %v75
  %347 = vmatmul.mubr.f32.gmra.mxu0 %v74
  %v348 = vpop.f32.mrf.mxu0
  %v349 = vadd.f32 %v171, %v348
  %v350 = vpop.f32.mrf.mxu0
  %351 = vmatprep.mubr.f32.mxu0 %v80
  %352 = vmatmul.mubr.f32.gmra.mxu0 %v79
  %v353 = vpop.f32.mrf.mxu0
  %v354 = vadd.f32 %v171, %v353
  %v355 = vpop.f32.mrf.mxu0
  %356 = vmatprep.mubr.f32.mxu0 %v85
  %357 = vmatmul.mubr.f32.gmra.mxu0 %v84
  %v358 = vpop.f32.mrf.mxu0
  %v359 = vadd.f32 %v171, %v358
  %v360 = vpop.f32.mrf.mxu0
  %361 = vmatprep.mubr.f32.mxu0 %v90
  %362 = vmatmul.mubr.f32.gmra.mxu0 %v89
  %v363 = vpop.f32.mrf.mxu0
  %v364 = vadd.f32 %v171, %v363
  %v365 = vpop.f32.mrf.mxu0
  %366 = vdwg.mxu0
  %367 = vmatprep.subr.mxu0 0.0
  %368 = vmatpush1.msra.mxu0 %v141
  %369 = vmatprep.subr.mxu0 0.0
  %370 = vmatpush1.msra.mxu0 %v140
  %371 = vmatprep.subr.mxu0 0.0
  %372 = vmatpush1.msra.mxu0 %v139
  %373 = vmatprep.subr.mxu0 0.0
  %374 = vmatpush1.msra.mxu0 %v138
  %375 = vmatprep.subr.mxu0 0.0
  %376 = vmatpush1.msra.mxu0 %v137
  %377 = vmatprep.subr.mxu0 0.0
  %378 = vmatpush1.msra.mxu0 %v136
  %379 = vmatprep.subr.mxu0 0.0
  %380 = vmatpush1.msra.mxu0 %v135
  %381 = vmatprep.subr.mxu0 0.0
  %382 = vmatpush1.msra.mxu0 %v134
  %383 = vmatprep.subr.mxu0 0.0
  %384 = vmatpush1.msra.mxu0 %v133
  %385 = vmatprep.subr.mxu0 0.0
  %386 = vmatpush1.msra.mxu0 %v132
  %387 = vmatprep.subr.mxu0 0.0
  %388 = vmatpush1.msra.mxu0 %v131
  %389 = vmatprep.subr.mxu0 0.0
  %390 = vmatpush1.msra.mxu0 %v130
  %391 = vmatprep.subr.mxu0 0.0
  %392 = vmatpush1.msra.mxu0 %v129
  %393 = vmatprep.subr.mxu0 0.0
  %394 = vmatpush1.msra.mxu0 %v128
  %395 = vmatprep.subr.mxu0 0.0
  %396 = vmatpush1.msra.mxu0 %v127
  %397 = vmatprep.subr.mxu0 0.0
  %398 = vmatpush1.msra.mxu0 %v126
  %399 = vmatprep.subr.mxu0 0.0
  %400 = vmatpush2.msra.mxu0 %v157
  %401 = vmatprep.subr.mxu0 0.0
  %402 = vmatpush2.msra.mxu0 %v156
  %403 = vmatprep.subr.mxu0 0.0
  %404 = vmatpush2.msra.mxu0 %v155
  %405 = vmatprep.subr.mxu0 0.0
  %406 = vmatpush2.msra.mxu0 %v154
  %407 = vmatprep.subr.mxu0 0.0
  %408 = vmatpush2.msra.mxu0 %v153
  %409 = vmatprep.subr.mxu0 0.0
  %410 = vmatpush2.msra.mxu0 %v152
  %411 = vmatprep.subr.mxu0 0.0
  %412 = vmatpush2.msra.mxu0 %v151
  %413 = vmatprep.subr.mxu0 0.0
  %414 = vmatpush2.msra.mxu0 %v150
  %415 = vmatprep.subr.mxu0 0.0
  %416 = vmatpush2.msra.mxu0 %v149
  %417 = vmatprep.subr.mxu0 0.0
  %418 = vmatpush2.msra.mxu0 %v148
  %419 = vmatprep.subr.mxu0 0.0
  %420 = vmatpush2.msra.mxu0 %v147
  %421 = vmatprep.subr.mxu0 0.0
  %422 = vmatpush2.msra.mxu0 %v146
  %423 = vmatprep.subr.mxu0 0.0
  %424 = vmatpush2.msra.mxu0 %v145
  %425 = vmatprep.subr.mxu0 0.0
  %426 = vmatpush2.msra.mxu0 %v144
  %427 = vmatprep.subr.mxu0 0.0
  %428 = vmatpush2.msra.mxu0 %v143
  %429 = vmatprep.subr.mxu0 0.0
  %430 = vmatpush2.msra.mxu0 %v142
  %431 = vmatprep.mubr.f32.mxu0 %v17
  %432 = vmatmul.mubr.f32.gmra.mxu0 %v16
  %v433 = vpop.f32.mrf.mxu0
  %v434 = vadd.f32 %v289, %v433
  %v435 = vpop.f32.mrf.mxu0
  %436 = vmatprep.mubr.f32.mxu0 %v22
  %437 = vmatmul.mubr.f32.gmra.mxu0 %v21
  %v438 = vpop.f32.mrf.mxu0
  %v439 = vadd.f32 %v294, %v438
  %v440 = vpop.f32.mrf.mxu0
  %441 = vmatprep.mubr.f32.mxu0 %v27
  %442 = vmatmul.mubr.f32.gmra.mxu0 %v26
  %v443 = vpop.f32.mrf.mxu0
  %v444 = vadd.f32 %v299, %v443
  %v445 = vpop.f32.mrf.mxu0
  %446 = vmatprep.mubr.f32.mxu0 %v32
  %447 = vmatmul.mubr.f32.gmra.mxu0 %v31
  %v448 = vpop.f32.mrf.mxu0
  %v449 = vadd.f32 %v304, %v448
  %v450 = vpop.f32.mrf.mxu0
  %451 = vmatprep.mubr.f32.mxu0 %v37
  %452 = vmatmul.mubr.f32.gmra.mxu0 %v36
  %v453 = vpop.f32.mrf.mxu0
  %v454 = vadd.f32 %v309, %v453
  %v455 = vpop.f32.mrf.mxu0
  %456 = vmatprep.mubr.f32.mxu0 %v42
  %457 = vmatmul.mubr.f32.gmra.mxu0 %v41
  %v458 = vpop.f32.mrf.mxu0
  %v459 = vadd.f32 %v314, %v458
  %v460 = vpop.f32.mrf.mxu0
  %461 = vmatprep.mubr.f32.mxu0 %v47
  %462 = vmatmul.mubr.f32.gmra.mxu0 %v46
  %v463 = vpop.f32.mrf.mxu0
  %v464 = vadd.f32 %v319, %v463
  %v465 = vpop.f32.mrf.mxu0
  %466 = vmatprep.mubr.f32.mxu0 %v52
  %467 = vmatmul.mubr.f32.gmra.mxu0 %v51
  %v468 = vpop.f32.mrf.mxu0
  %v469 = vadd.f32 %v324, %v468
  %v470 = vpop.f32.mrf.mxu0
  %471 = vmatprep.mubr.f32.mxu0 %v57
  %472 = vmatmul.mubr.f32.gmra.mxu0 %v56
  %v473 = vpop.f32.mrf.mxu0
  %v474 = vadd.f32 %v329, %v473
  %v475 = vpop.f32.mrf.mxu0
  %476 = vmatprep.mubr.f32.mxu0 %v62
  %477 = vmatmul.mubr.f32.gmra.mxu0 %v61
  %v478 = vpop.f32.mrf.mxu0
  %v479 = vadd.f32 %v334, %v478
  %v480 = vpop.f32.mrf.mxu0
  %481 = vmatprep.mubr.f32.mxu0 %v67
  %482 = vmatmul.mubr.f32.gmra.mxu0 %v66
  %v483 = vpop.f32.mrf.mxu0
  %v484 = vadd.f32 %v339, %v483
  %v485 = vpop.f32.mrf.mxu0
  %486 = vmatprep.mubr.f32.mxu0 %v72
  %487 = vmatmul.mubr.f32.gmra.mxu0 %v71
  %v488 = vpop.f32.mrf.mxu0
  %v489 = vadd.f32 %v344, %v488
  %v490 = vpop.f32.mrf.mxu0
  %491 = vmatprep.mubr.f32.mxu0 %v77
  %492 = vmatmul.mubr.f32.gmra.mxu0 %v76
  %v493 = vpop.f32.mrf.mxu0
  %v494 = vadd.f32 %v349, %v493
  %v495 = vpop.f32.mrf.mxu0
  %496 = vmatprep.mubr.f32.mxu0 %v82
  %497 = vmatmul.mubr.f32.gmra.mxu0 %v81
  %v498 = vpop.f32.mrf.mxu0
  %v499 = vadd.f32 %v354, %v498
  %v500 = vpop.f32.mrf.mxu0
  %501 = vmatprep.mubr.f32.mxu0 %v87
  %502 = vmatmul.mubr.f32.gmra.mxu0 %v86
  %v503 = vpop.f32.mrf.mxu0
  %v504 = vadd.f32 %v359, %v503
  %v505 = vpop.f32.mrf.mxu0
  %506 = vmatprep.mubr.f32.mxu0 %v92
  %507 = vmatmul.mubr.f32.gmra.mxu0 %v91
  %v508 = vpop.f32.mrf.mxu0
  %v509 = vadd.f32 %v364, %v508
  %v510 = vpop.f32.mrf.mxu0
  %511 = vdwg.mxu0
  %512 = vmatprep.subr.mxu0 0.0
  %513 = vmatpush1.msra.mxu0 0.0
  %514 = vmatprep.subr.mxu0 0.0
  %515 = vmatpush1.msra.mxu0 0.0
  %516 = vmatprep.subr.mxu0 0.0
  %517 = vmatpush1.msra.mxu0 0.0
  %518 = vmatprep.subr.mxu0 0.0
  %519 = vmatpush1.msra.mxu0 0.0
  %520 = vmatprep.subr.mxu0 0.0
  %521 = vmatpush1.msra.mxu0 0.0
  %522 = vmatprep.subr.mxu0 0.0
  %523 = vmatpush1.msra.mxu0 0.0
  %524 = vmatprep.subr.mxu0 0.0
  %525 = vmatpush1.msra.mxu0 0.0
  %526 = vmatprep.subr.mxu0 0.0
  %527 = vmatpush1.msra.mxu0 0.0
  %528 = vmatprep.subr.mxu0 0.0
  %529 = vmatpush1.msra.mxu0 %v165
  %530 = vmatprep.subr.mxu0 0.0
  %531 = vmatpush1.msra.mxu0 %v164
  %532 = vmatprep.subr.mxu0 0.0
  %533 = vmatpush1.msra.mxu0 %v163
  %534 = vmatprep.subr.mxu0 0.0
  %535 = vmatpush1.msra.mxu0 %v162
  %536 = vmatprep.subr.mxu0 0.0
  %537 = vmatpush1.msra.mxu0 %v161
  %538 = vmatprep.subr.mxu0 0.0
  %539 = vmatpush1.msra.mxu0 %v160
  %540 = vmatprep.subr.mxu0 0.0
  %541 = vmatpush1.msra.mxu0 %v159
  %542 = vmatprep.subr.mxu0 0.0
  %543 = vmatpush1.msra.mxu0 %v158
  %544 = vmatprep.subr.mxu0 0.0
  %545 = vmatpush2.msra.mxu0 0.0
  %546 = vmatprep.subr.mxu0 0.0
  %547 = vmatpush2.msra.mxu0 0.0
  %548 = vmatprep.subr.mxu0 0.0
  %549 = vmatpush2.msra.mxu0 0.0
  %550 = vmatprep.subr.mxu0 0.0
  %551 = vmatpush2.msra.mxu0 0.0
  %552 = vmatprep.subr.mxu0 0.0
  %553 = vmatpush2.msra.mxu0 0.0
  %554 = vmatprep.subr.mxu0 0.0
  %555 = vmatpush2.msra.mxu0 0.0
  %556 = vmatprep.subr.mxu0 0.0
  %557 = vmatpush2.msra.mxu0 0.0
  %558 = vmatprep.subr.mxu0 0.0
  %559 = vmatpush2.msra.mxu0 0.0
  %560 = vmatprep.subr.mxu0 0.0
  %561 = vmatpush2.msra.mxu0 0.0
  %562 = vmatprep.subr.mxu0 0.0
  %563 = vmatpush2.msra.mxu0 0.0
  %564 = vmatprep.subr.mxu0 0.0
  %565 = vmatpush2.msra.mxu0 0.0
  %566 = vmatprep.subr.mxu0 0.0
  %567 = vmatpush2.msra.mxu0 0.0
  %568 = vmatprep.subr.mxu0 0.0
  %569 = vmatpush2.msra.mxu0 0.0
  %570 = vmatprep.subr.mxu0 0.0
  %571 = vmatpush2.msra.mxu0 0.0
  %572 = vmatprep.subr.mxu0 0.0
  %573 = vmatpush2.msra.mxu0 0.0
  %574 = vmatprep.subr.mxu0 0.0
  %575 = vmatpush2.msra.mxu0 0.0
  %576 = vmatprep.mubr.f32.mxu0 0.0
  %577 = vmatmul.mubr.f32.gmra.mxu0 %v175
  %v578 = vpop.f32.mrf.mxu0
  %v579 = vadd.f32 %v434, %v578
  %v580 = vpop.f32.mrf.mxu0
  %581 = vmatprep.mubr.f32.mxu0 0.0
  %582 = vmatmul.mubr.f32.gmra.mxu0 %v178
  %v583 = vpop.f32.mrf.mxu0
  %v584 = vadd.f32 %v439, %v583
  %v585 = vpop.f32.mrf.mxu0
  %586 = vmatprep.mubr.f32.mxu0 0.0
  %587 = vmatmul.mubr.f32.gmra.mxu0 %v181
  %v588 = vpop.f32.mrf.mxu0
  %v589 = vadd.f32 %v444, %v588
  %v590 = vpop.f32.mrf.mxu0
  %591 = vmatprep.mubr.f32.mxu0 0.0
  %592 = vmatmul.mubr.f32.gmra.mxu0 %v184
  %v593 = vpop.f32.mrf.mxu0
  %v594 = vadd.f32 %v449, %v593
  %v595 = vpop.f32.mrf.mxu0
  %596 = vmatprep.mubr.f32.mxu0 0.0
  %597 = vmatmul.mubr.f32.gmra.mxu0 %v187
  %v598 = vpop.f32.mrf.mxu0
  %v599 = vadd.f32 %v454, %v598
  %v600 = vpop.f32.mrf.mxu0
  %601 = vmatprep.mubr.f32.mxu0 0.0
  %602 = vmatmul.mubr.f32.gmra.mxu0 %v190
  %v603 = vpop.f32.mrf.mxu0
  %v604 = vadd.f32 %v459, %v603
  %v605 = vpop.f32.mrf.mxu0
  %606 = vmatprep.mubr.f32.mxu0 0.0
  %607 = vmatmul.mubr.f32.gmra.mxu0 %v193
  %v608 = vpop.f32.mrf.mxu0
  %v609 = vadd.f32 %v464, %v608
  %v610 = vpop.f32.mrf.mxu0
  %611 = vmatprep.mubr.f32.mxu0 0.0
  %612 = vmatmul.mubr.f32.gmra.mxu0 %v196
  %v613 = vpop.f32.mrf.mxu0
  %v614 = vadd.f32 %v469, %v613
  %v615 = vpop.f32.mrf.mxu0
  %616 = vmatprep.mubr.f32.mxu0 0.0
  %617 = vmatmul.mubr.f32.gmra.mxu0 %v199
  %v618 = vpop.f32.mrf.mxu0
  %v619 = vadd.f32 %v474, %v618
  %v620 = vpop.f32.mrf.mxu0
  %621 = vmatprep.mubr.f32.mxu0 0.0
  %622 = vmatmul.mubr.f32.gmra.mxu0 %v202
  %v623 = vpop.f32.mrf.mxu0
  %v624 = vadd.f32 %v479, %v623
  %v625 = vpop.f32.mrf.mxu0
  %626 = vmatprep.mubr.f32.mxu0 0.0
  %627 = vmatmul.mubr.f32.gmra.mxu0 %v205
  %v628 = vpop.f32.mrf.mxu0
  %v629 = vadd.f32 %v484, %v628
  %v630 = vpop.f32.mrf.mxu0
  %631 = vmatprep.mubr.f32.mxu0 0.0
  %632 = vmatmul.mubr.f32.gmra.mxu0 %v208
  %v633 = vpop.f32.mrf.mxu0
  %v634 = vadd.f32 %v489, %v633
  %v635 = vpop.f32.mrf.mxu0
  %636 = vmatprep.mubr.f32.mxu0 0.0
  %637 = vmatmul.mubr.f32.gmra.mxu0 %v211
  %v638 = vpop.f32.mrf.mxu0
  %v639 = vadd.f32 %v494, %v638
  %v640 = vpop.f32.mrf.mxu0
  %641 = vmatprep.mubr.f32.mxu0 0.0
  %642 = vmatmul.mubr.f32.gmra.mxu0 %v214
  %v643 = vpop.f32.mrf.mxu0
  %v644 = vadd.f32 %v499, %v643
  %v645 = vpop.f32.mrf.mxu0
  %646 = vmatprep.mubr.f32.mxu0 0.0
  %647 = vmatmul.mubr.f32.gmra.mxu0 %v217
  %v648 = vpop.f32.mrf.mxu0
  %v649 = vadd.f32 %v504, %v648
  %v650 = vpop.f32.mrf.mxu0
  %651 = vmatprep.mubr.f32.mxu0 0.0
  %652 = vmatmul.mubr.f32.gmra.mxu0 %v220
  %v653 = vpop.f32.mrf.mxu0
  %v654 = vadd.f32 %v509, %v653
  %v655 = vpop.f32.mrf.mxu0
  %656 = vdwg.mxu0
  %v657 = vmin.f32 %v579, 0.0
  %v658 = vmin.f32 %v584, 0.0
  %v659 = vmin.f32 %v589, 0.0
  %v660 = vmin.f32 %v594, 0.0
  %v661 = vmin.f32 %v599, 0.0
  %v662 = vmin.f32 %v604, 0.0
  %v663 = vmin.f32 %v609, 0.0
  %v664 = vmin.f32 %v614, 0.0
  %v665 = vmin.f32 %v619, 0.0
  %v666 = vmin.f32 %v624, 0.0
  %v667 = vmin.f32 %v629, 0.0
  %v668 = vmin.f32 %v634, 0.0
  %v669 = vmin.f32 %v639, 0.0
  %v670 = vmin.f32 %v644, 0.0
  %v671 = vmin.f32 %v649, 0.0
  %v672 = vmin.f32 %v654, 0.0
  %v673 = vmul.f32 %v657, 1.442695
  %v674 = vpow.pop %v673
  %v675 = vmul.f32 %v658, 1.442695
  %v676 = vpow.pop %v675
  %v677 = vmul.f32 %v659, 1.442695
  %v678 = vpow.pop %v677
  %v679 = vmul.f32 %v660, 1.442695
  %v680 = vpow.pop %v679
  %v681 = vmul.f32 %v661, 1.442695
  %v682 = vpow.pop %v681
  %v683 = vmul.f32 %v662, 1.442695
  %v684 = vpow.pop %v683
  %v685 = vmul.f32 %v663, 1.442695
  %v686 = vpow.pop %v685
  %v687 = vmul.f32 %v664, 1.442695
  %v688 = vpow.pop %v687
  %v689 = vmul.f32 %v665, 1.442695
  %v690 = vpow.pop %v689
  %v691 = vmul.f32 %v666, 1.442695
  %v692 = vpow.pop %v691
  %v693 = vmul.f32 %v667, 1.442695
  %v694 = vpow.pop %v693
  %v695 = vmul.f32 %v668, 1.442695
  %v696 = vpow.pop %v695
  %v697 = vmul.f32 %v669, 1.442695
  %v698 = vpow.pop %v697
  %v699 = vmul.f32 %v670, 1.442695
  %v700 = vpow.pop %v699
  %v701 = vmul.f32 %v671, 1.442695
  %v702 = vpow.pop %v701
  %v703 = vmul.f32 %v672, 1.442695
  %v704 = vpow.pop %v703
  %v705 = vsub.f32 %v674, 1.0
  %v706 = vsub.f32 %v676, 1.0
  %v707 = vsub.f32 %v678, 1.0
  %v708 = vsub.f32 %v680, 1.0
  %v709 = vsub.f32 %v682, 1.0
  %v710 = vsub.f32 %v684, 1.0
  %v711 = vsub.f32 %v686, 1.0
  %v712 = vsub.f32 %v688, 1.0
  %v713 = vsub.f32 %v690, 1.0
  %v714 = vsub.f32 %v692, 1.0
  %v715 = vsub.f32 %v694, 1.0
  %v716 = vsub.f32 %v696, 1.0
  %v717 = vsub.f32 %v698, 1.0
  %v718 = vsub.f32 %v700, 1.0
  %v719 = vsub.f32 %v702, 1.0
  %v720 = vsub.f32 %v704, 1.0
  %vm721 = vcmp.gt.f32.partialorder %v579, 0.0
  %vm722 = vcmp.gt.f32.partialorder %v584, 0.0
  %vm723 = vcmp.gt.f32.partialorder %v589, 0.0
  %vm724 = vcmp.gt.f32.partialorder %v594, 0.0
  %vm725 = vcmp.gt.f32.partialorder %v599, 0.0
  %vm726 = vcmp.gt.f32.partialorder %v604, 0.0
  %vm727 = vcmp.gt.f32.partialorder %v609, 0.0
  %vm728 = vcmp.gt.f32.partialorder %v614, 0.0
  %vm729 = vcmp.gt.f32.partialorder %v619, 0.0
  %vm730 = vcmp.gt.f32.partialorder %v624, 0.0
  %vm731 = vcmp.gt.f32.partialorder %v629, 0.0
  %vm732 = vcmp.gt.f32.partialorder %v634, 0.0
  %vm733 = vcmp.gt.f32.partialorder %v639, 0.0
  %vm734 = vcmp.gt.f32.partialorder %v644, 0.0
  %vm735 = vcmp.gt.f32.partialorder %v649, 0.0
  %vm736 = vcmp.gt.f32.partialorder %v654, 0.0
  %v737 = vsel %vm721, %v579, %v705
  %v738 = vsel %vm722, %v584, %v706
  %v739 = vsel %vm723, %v589, %v707
  %v740 = vsel %vm724, %v594, %v708
  %v741 = vsel %vm725, %v599, %v709
  %v742 = vsel %vm726, %v604, %v710
  %v743 = vsel %vm727, %v609, %v711
  %v744 = vsel %vm728, %v614, %v712
  %v745 = vsel %vm729, %v619, %v713
  %v746 = vsel %vm730, %v624, %v714
  %v747 = vsel %vm731, %v629, %v715
  %v748 = vsel %vm732, %v634, %v716
  %v749 = vsel %vm733, %v639, %v717
  %v750 = vsel %vm734, %v644, %v718
  %v751 = vsel %vm735, %v649, %v719
  %v752 = vsel %vm736, %v654, %v720
  %753 = vst.msk [vmem:[%s3] sm:$0xff] %vm173, %v737
  %754 = vst.msk [vmem:[%s3 + $0x8] sm:$0xff] %vm173, %v738
  %755 = vst.msk [vmem:[%s3 + $0x10] sm:$0xff] %vm173, %v739
  %756 = vst.msk [vmem:[%s3 + $0x18] sm:$0xff] %vm173, %v740
  %757 = vst.msk [vmem:[%s3 + $0x20] sm:$0xff] %vm173, %v741
  %758 = vst.msk [vmem:[%s3 + $0x28] sm:$0xff] %vm173, %v742
  %759 = vst.msk [vmem:[%s3 + $0x30] sm:$0xff] %vm173, %v743
  %760 = vst.msk [vmem:[%s3 + $0x38] sm:$0xff] %vm173, %v744
  %761 = vst.msk [vmem:[%s3 + $0x40] sm:$0xff] %vm173, %v745
  %762 = vst.msk [vmem:[%s3 + $0x48] sm:$0xff] %vm173, %v746
  %763 = vst.msk [vmem:[%s3 + $0x50] sm:$0xff] %vm173, %v747
  %764 = vst.msk [vmem:[%s3 + $0x58] sm:$0xff] %vm173, %v748
  %765 = vst.msk [vmem:[%s3 + $0x60] sm:$0xff] %vm173, %v749
  %766 = vst.msk [vmem:[%s3 + $0x68] sm:$0xff] %vm173, %v750
  %767 = vst.msk [vmem:[%s3 + $0x70] sm:$0xff] %vm173, %v751
  %768 = vst.msk [vmem:[%s3 + $0x78] sm:$0xff] %vm173, %v752
  // Predicated region
  $region14: #{image_encoder_bg.7} parent=0 // pred_check
    _
  $region15: #{image_encoder_bg.7} parent=0 // pred_check_branch
    %770 = sbr.rel (0) target = $region17
  $region16: #{image_encoder_bg.7} parent=0 // pred_region
    _
  $region17: #{image_encoder_bg.7} parent=0 // pred_fallthru
    _
  // Predicated region
  $region18: #{image_encoder_bg.7} parent=0 // pred_check
    _
  $region19: #{image_encoder_bg.7} parent=0 // pred_check_branch
    %772 = sbr.rel (0) target = $region21
  $region20: #{image_encoder_bg.7} parent=0 // pred_region
    _
  $region21: #{image_encoder_bg.7} parent=0 // pred_fallthru
    _

// kernel: image_encoder_bg.8
$region0: #{image_encoder_bg.8}
  #allocation0 [shape = 'u32[]', space=smem, size = 0x4, offset = 0x4, fixed_abs, tag = 'smem constant byte address 0x4 - core index']
  #allocation1 [shape = 'u32[144,128]{1,0:T(1,128)}', space=vmem, size = 0x12000, scoped, tag = 'internal scratch']
  %s0 = inlined_call_operand.vmem [shape: f32[32,576], index: 0, kind: input, shape index: {}]
  %s1 = inlined_call_operand.vmem [shape: f32[576,64], index: 1, kind: input, shape index: {}]
  %s2 = inlined_call_operand.vmem [shape: f32[1,64], index: 2, kind: input, shape index: {}]
  %s3 = inlined_call_operand.vmem [shape: f32[32,64], index: 3, kind: output, shape index: {}]
  %s4 = sld [smem:[#allocation0]]
  $region22: #{image_encoder_bg.8} parent=0
    _
  %s6 = ssub.s32 1, %s4
  %s7 = scalar_select 0, %s6, %s4
  // Predicated region
  $region2: #{image_encoder_bg.8} parent=0 // pred_check
    _
  $region3: #{image_encoder_bg.8} parent=0 // pred_check_branch
    %9 = sbr.rel (0) target = $region5
  $region4: #{image_encoder_bg.8} parent=0 // pred_region
    _
  $region5: #{image_encoder_bg.8} parent=0 // pred_fallthru
    _
  // Predicated region
  $region6: #{image_encoder_bg.8} parent=0 // pred_check
    _
  $region7: #{image_encoder_bg.8} parent=0 // pred_check_branch
    %11 = sbr.rel (0) target = $region9
  $region8: #{image_encoder_bg.8} parent=0 // pred_region
    _
  $region9: #{image_encoder_bg.8} parent=0 // pred_fallthru
    _
  // Predicated region
  $region10: #{image_encoder_bg.8} parent=0 // pred_check
    _
  $region11: #{image_encoder_bg.8} parent=0 // pred_check_branch
    %13 = sbr.rel (0) target = $region13
  $region12: #{image_encoder_bg.8} parent=0 // pred_region
    _
  $region13: #{image_encoder_bg.8} parent=0 // pred_fallthru
    _
  %v14 = vld [vmem:[%s0] sm:$0xff]
  %v15 = vld [vmem:[%s0 + $0x8] sm:$0xff]
  %v16 = vld [vmem:[%s0 + $0x10] sm:$0xff]
  %v17 = vld [vmem:[%s0 + $0x18] sm:$0xff]
  %v18 = vld [vmem:[%s0 + $0x20] sm:$0xff]
  %v19 = vld [vmem:[%s0 + $0x28] sm:$0xff]
  %v20 = vld [vmem:[%s0 + $0x30] sm:$0xff]
  %v21 = vld [vmem:[%s0 + $0x38] sm:$0xff]
  %v22 = vld [vmem:[%s0 + $0x40] sm:$0xff]
  %v23 = vld [vmem:[%s0 + $0x48] sm:$0xff]
  %v24 = vld [vmem:[%s0 + $0x50] sm:$0xff]
  %v25 = vld [vmem:[%s0 + $0x58] sm:$0xff]
  %v26 = vld [vmem:[%s0 + $0x60] sm:$0xff]
  %v27 = vld [vmem:[%s0 + $0x68] sm:$0xff]
  %v28 = vld [vmem:[%s0 + $0x70] sm:$0xff]
  %v29 = vld [vmem:[%s0 + $0x78] sm:$0xff]
  %v30 = vld [vmem:[%s0 + $0x80] sm:$0xff]
  %v31 = vld [vmem:[%s0 + $0x88] sm:$0xff]
  %v32 = vld [vmem:[%s0 + $0x90] sm:$0xff]
  %v33 = vld [vmem:[%s0 + $0x98] sm:$0xff]
  %v34 = vld [vmem:[%s1] sm:$0xff]
  %v35 = vld [vmem:[%s1 + $0x8] sm:$0xff]
  %v36 = vld [vmem:[%s1 + $0x10] sm:$0xff]
  %v37 = vld [vmem:[%s1 + $0x18] sm:$0xff]
  %v38 = vld [vmem:[%s1 + $0x20] sm:$0xff]
  %v39 = vld [vmem:[%s1 + $0x28] sm:$0xff]
  %v40 = vld [vmem:[%s1 + $0x30] sm:$0xff]
  %v41 = vld [vmem:[%s1 + $0x38] sm:$0xff]
  %v42 = vld [vmem:[%s1 + $0x40] sm:$0xff]
  %v43 = vld [vmem:[%s1 + $0x48] sm:$0xff]
  %v44 = vld [vmem:[%s1 + $0x50] sm:$0xff]
  %v45 = vld [vmem:[%s1 + $0x58] sm:$0xff]
  %v46 = vld [vmem:[%s1 + $0x60] sm:$0xff]
  %v47 = vld [vmem:[%s1 + $0x68] sm:$0xff]
  %v48 = vld [vmem:[%s1 + $0x70] sm:$0xff]
  %v49 = vld [vmem:[%s1 + $0x78] sm:$0xff]
  %v50 = vld [vmem:[%s1 + $0x80] sm:$0xff]
  %v51 = vld [vmem:[%s1 + $0x88] sm:$0xff]
  %v52 = vld [vmem:[%s1 + $0x90] sm:$0xff]
  %v53 = vld [vmem:[%s1 + $0x98] sm:$0xff]
  %v54 = vld [vmem:[%s1 + $0xa0] sm:$0xff]
  %v55 = vld [vmem:[%s1 + $0xa8] sm:$0xff]
  %v56 = vld [vmem:[%s1 + $0xb0] sm:$0xff]
  %v57 = vld [vmem:[%s1 + $0xb8] sm:$0xff]
  %v58 = vld [vmem:[%s1 + $0xc0] sm:$0xff]
  %v59 = vld [vmem:[%s1 + $0xc8] sm:$0xff]
  %v60 = vld [vmem:[%s1 + $0xd0] sm:$0xff]
  %v61 = vld [vmem:[%s1 + $0xd8] sm:$0xff]
  %v62 = vld [vmem:[%s1 + $0xe0] sm:$0xff]
  %v63 = vld [vmem:[%s1 + $0xe8] sm:$0xff]
  %v64 = vld [vmem:[%s1 + $0xf0] sm:$0xff]
  %v65 = vld [vmem:[%s1 + $0xf8] sm:$0xff]
  %v66 = vld [vmem:[%s1 + $0x100] sm:$0xff]
  %v67 = vld [vmem:[%s1 + $0x108] sm:$0xff]
  %v68 = vld [vmem:[%s1 + $0x110] sm:$0xff]
  %v69 = vld [vmem:[%s1 + $0x118] sm:$0xff]
  %v70 = vld [vmem:[%s1 + $0x120] sm:$0xff]
  %v71 = vld [vmem:[%s1 + $0x128] sm:$0xff]
  %v72 = vld [vmem:[%s1 + $0x130] sm:$0xff]
  %v73 = vld [vmem:[%s1 + $0x138] sm:$0xff]
  %v74 = vld [vmem:[%s1 + $0x140] sm:$0xff]
  %v75 = vld [vmem:[%s1 + $0x148] sm:$0xff]
  %v76 = vld [vmem:[%s1 + $0x150] sm:$0xff]
  %v77 = vld [vmem:[%s1 + $0x158] sm:$0xff]
  %v78 = vld [vmem:[%s1 + $0x160] sm:$0xff]
  %v79 = vld [vmem:[%s1 + $0x168] sm:$0xff]
  %v80 = vld [vmem:[%s1 + $0x170] sm:$0xff]
  %v81 = vld [vmem:[%s1 + $0x178] sm:$0xff]
  %v82 = vld [vmem:[%s1 + $0x180] sm:$0xff]
  %v83 = vld [vmem:[%s1 + $0x188] sm:$0xff]
  %v84 = vld [vmem:[%s1 + $0x190] sm:$0xff]
  %v85 = vld [vmem:[%s1 + $0x198] sm:$0xff]
  %v86 = vld [vmem:[%s1 + $0x1a0] sm:$0xff]
  %v87 = vld [vmem:[%s1 + $0x1a8] sm:$0xff]
  %v88 = vld [vmem:[%s1 + $0x1b0] sm:$0xff]
  %v89 = vld [vmem:[%s1 + $0x1b8] sm:$0xff]
  %v90 = vld [vmem:[%s1 + $0x1c0] sm:$0xff]
  %v91 = vld [vmem:[%s1 + $0x1c8] sm:$0xff]
  %v92 = vld [vmem:[%s1 + $0x1d0] sm:$0xff]
  %v93 = vld [vmem:[%s1 + $0x1d8] sm:$0xff]
  %v94 = vld [vmem:[%s1 + $0x1e0] sm:$0xff]
  %v95 = vld [vmem:[%s1 + $0x1e8] sm:$0xff]
  %v96 = vld [vmem:[%s1 + $0x1f0] sm:$0xff]
  %v97 = vld [vmem:[%s1 + $0x1f8] sm:$0xff]
  %v98 = vld [vmem:[%s1 + $0x200] sm:$0xff]
  %v99 = vld [vmem:[%s1 + $0x208] sm:$0xff]
  %v100 = vld [vmem:[%s1 + $0x210] sm:$0xff]
  %v101 = vld [vmem:[%s1 + $0x218] sm:$0xff]
  %v102 = vld [vmem:[%s1 + $0x220] sm:$0xff]
  %v103 = vld [vmem:[%s1 + $0x228] sm:$0xff]
  %v104 = vld [vmem:[%s1 + $0x230] sm:$0xff]
  %v105 = vld [vmem:[%s1 + $0x238] sm:$0xff]
  %v106 = vld [vmem:[%s2] sm:$0x1]
  %v108 = vlaneseq
  %v109 = vshrl.u32 %v108, 7
  %v110 = vsub.s32 0, %v109
  %v111 = vrot.slane %v106, %v110
  %vm113 = vcmask 523264
  %v115 = vsel %vm113, %v18, 0
  %v118 = vsel %vm113, %v23, 0
  %v121 = vsel %vm113, %v28, 0
  %v124 = vsel %vm113, %v33, 0
  %126 = vmatprep.subr.mxu0 0.0
  %127 = vmatpush1.msra.mxu0 %v49
  %128 = vmatprep.subr.mxu0 0.0
  %129 = vmatpush1.msra.mxu0 %v48
  %130 = vmatprep.subr.mxu0 0.0
  %131 = vmatpush1.msra.mxu0 %v47
  %132 = vmatprep.subr.mxu0 0.0
  %133 = vmatpush1.msra.mxu0 %v46
  %134 = vmatprep.subr.mxu0 0.0
  %135 = vmatpush1.msra.mxu0 %v45
  %136 = vmatprep.subr.mxu0 0.0
  %137 = vmatpush1.msra.mxu0 %v44
  %138 = vmatprep.subr.mxu0 0.0
  %139 = vmatpush1.msra.mxu0 %v43
  %140 = vmatprep.subr.mxu0 0.0
  %141 = vmatpush1.msra.mxu0 %v42
  %142 = vmatprep.subr.mxu0 0.0
  %143 = vmatpush1.msra.mxu0 %v41
  %144 = vmatprep.subr.mxu0 0.0
  %145 = vmatpush1.msra.mxu0 %v40
  %146 = vmatprep.subr.mxu0 0.0
  %147 = vmatpush1.msra.mxu0 %v39
  %148 = vmatprep.subr.mxu0 0.0
  %149 = vmatpush1.msra.mxu0 %v38
  %150 = vmatprep.subr.mxu0 0.0
  %151 = vmatpush1.msra.mxu0 %v37
  %152 = vmatprep.subr.mxu0 0.0
  %153 = vmatpush1.msra.mxu0 %v36
  %154 = vmatprep.subr.mxu0 0.0
  %155 = vmatpush1.msra.mxu0 %v35
  %156 = vmatprep.subr.mxu0 0.0
  %157 = vmatpush1.msra.mxu0 %v34
  %158 = vmatprep.subr.mxu0 0.0
  %159 = vmatpush2.msra.mxu0 %v65
  %160 = vmatprep.subr.mxu0 0.0
  %161 = vmatpush2.msra.mxu0 %v64
  %162 = vmatprep.subr.mxu0 0.0
  %163 = vmatpush2.msra.mxu0 %v63
  %164 = vmatprep.subr.mxu0 0.0
  %165 = vmatpush2.msra.mxu0 %v62
  %166 = vmatprep.subr.mxu0 0.0
  %167 = vmatpush2.msra.mxu0 %v61
  %168 = vmatprep.subr.mxu0 0.0
  %169 = vmatpush2.msra.mxu0 %v60
  %170 = vmatprep.subr.mxu0 0.0
  %171 = vmatpush2.msra.mxu0 %v59
  %172 = vmatprep.subr.mxu0 0.0
  %173 = vmatpush2.msra.mxu0 %v58
  %174 = vmatprep.subr.mxu0 0.0
  %175 = vmatpush2.msra.mxu0 %v57
  %176 = vmatprep.subr.mxu0 0.0
  %177 = vmatpush2.msra.mxu0 %v56
  %178 = vmatprep.subr.mxu0 0.0
  %179 = vmatpush2.msra.mxu0 %v55
  %180 = vmatprep.subr.mxu0 0.0
  %181 = vmatpush2.msra.mxu0 %v54
  %182 = vmatprep.subr.mxu0 0.0
  %183 = vmatpush2.msra.mxu0 %v53
  %184 = vmatprep.subr.mxu0 0.0
  %185 = vmatpush2.msra.mxu0 %v52
  %186 = vmatprep.subr.mxu0 0.0
  %187 = vmatpush2.msra.mxu0 %v51
  %188 = vmatprep.subr.mxu0 0.0
  %189 = vmatpush2.msra.mxu0 %v50
  %190 = vmatprep.mubr.f32.mxu0 %v15
  %191 = vmatmul.mubr.f32.gmra.mxu0 %v14
  %v192 = vpop.f32.mrf.mxu0
  %v193 = vadd.f32 %v111, %v192
  %v194 = vpop.f32.mrf.mxu0
  %195 = vmatprep.mubr.f32.mxu0 %v20
  %196 = vmatmul.mubr.f32.gmra.mxu0 %v19
  %v197 = vpop.f32.mrf.mxu0
  %v198 = vadd.f32 %v111, %v197
  %v199 = vpop.f32.mrf.mxu0
  %200 = vmatprep.mubr.f32.mxu0 %v25
  %201 = vmatmul.mubr.f32.gmra.mxu0 %v24
  %v202 = vpop.f32.mrf.mxu0
  %v203 = vadd.f32 %v111, %v202
  %v204 = vpop.f32.mrf.mxu0
  %205 = vmatprep.mubr.f32.mxu0 %v30
  %206 = vmatmul.mubr.f32.gmra.mxu0 %v29
  %v207 = vpop.f32.mrf.mxu0
  %v208 = vadd.f32 %v111, %v207
  %v209 = vpop.f32.mrf.mxu0
  %210 = vdwg.mxu0
  %211 = vmatprep.subr.mxu0 0.0
  %212 = vmatpush1.msra.mxu0 %v81
  %213 = vmatprep.subr.mxu0 0.0
  %214 = vmatpush1.msra.mxu0 %v80
  %215 = vmatprep.subr.mxu0 0.0
  %216 = vmatpush1.msra.mxu0 %v79
  %217 = vmatprep.subr.mxu0 0.0
  %218 = vmatpush1.msra.mxu0 %v78
  %219 = vmatprep.subr.mxu0 0.0
  %220 = vmatpush1.msra.mxu0 %v77
  %221 = vmatprep.subr.mxu0 0.0
  %222 = vmatpush1.msra.mxu0 %v76
  %223 = vmatprep.subr.mxu0 0.0
  %224 = vmatpush1.msra.mxu0 %v75
  %225 = vmatprep.subr.mxu0 0.0
  %226 = vmatpush1.msra.mxu0 %v74
  %227 = vmatprep.subr.mxu0 0.0
  %228 = vmatpush1.msra.mxu0 %v73
  %229 = vmatprep.subr.mxu0 0.0
  %230 = vmatpush1.msra.mxu0 %v72
  %231 = vmatprep.subr.mxu0 0.0
  %232 = vmatpush1.msra.mxu0 %v71
  %233 = vmatprep.subr.mxu0 0.0
  %234 = vmatpush1.msra.mxu0 %v70
  %235 = vmatprep.subr.mxu0 0.0
  %236 = vmatpush1.msra.mxu0 %v69
  %237 = vmatprep.subr.mxu0 0.0
  %238 = vmatpush1.msra.mxu0 %v68
  %239 = vmatprep.subr.mxu0 0.0
  %240 = vmatpush1.msra.mxu0 %v67
  %241 = vmatprep.subr.mxu0 0.0
  %242 = vmatpush1.msra.mxu0 %v66
  %243 = vmatprep.subr.mxu0 0.0
  %244 = vmatpush2.msra.mxu0 %v97
  %245 = vmatprep.subr.mxu0 0.0
  %246 = vmatpush2.msra.mxu0 %v96
  %247 = vmatprep.subr.mxu0 0.0
  %248 = vmatpush2.msra.mxu0 %v95
  %249 = vmatprep.subr.mxu0 0.0
  %250 = vmatpush2.msra.mxu0 %v94
  %251 = vmatprep.subr.mxu0 0.0
  %252 = vmatpush2.msra.mxu0 %v93
  %253 = vmatprep.subr.mxu0 0.0
  %254 = vmatpush2.msra.mxu0 %v92
  %255 = vmatprep.subr.mxu0 0.0
  %256 = vmatpush2.msra.mxu0 %v91
  %257 = vmatprep.subr.mxu0 0.0
  %258 = vmatpush2.msra.mxu0 %v90
  %259 = vmatprep.subr.mxu0 0.0
  %260 = vmatpush2.msra.mxu0 %v89
  %261 = vmatprep.subr.mxu0 0.0
  %262 = vmatpush2.msra.mxu0 %v88
  %263 = vmatprep.subr.mxu0 0.0
  %264 = vmatpush2.msra.mxu0 %v87
  %265 = vmatprep.subr.mxu0 0.0
  %266 = vmatpush2.msra.mxu0 %v86
  %267 = vmatprep.subr.mxu0 0.0
  %268 = vmatpush2.msra.mxu0 %v85
  %269 = vmatprep.subr.mxu0 0.0
  %270 = vmatpush2.msra.mxu0 %v84
  %271 = vmatprep.subr.mxu0 0.0
  %272 = vmatpush2.msra.mxu0 %v83
  %273 = vmatprep.subr.mxu0 0.0
  %274 = vmatpush2.msra.mxu0 %v82
  %275 = vmatprep.mubr.f32.mxu0 %v17
  %276 = vmatmul.mubr.f32.gmra.mxu0 %v16
  %v277 = vpop.f32.mrf.mxu0
  %v278 = vadd.f32 %v193, %v277
  %v279 = vpop.f32.mrf.mxu0
  %280 = vmatprep.mubr.f32.mxu0 %v22
  %281 = vmatmul.mubr.f32.gmra.mxu0 %v21
  %v282 = vpop.f32.mrf.mxu0
  %v283 = vadd.f32 %v198, %v282
  %v284 = vpop.f32.mrf.mxu0
  %285 = vmatprep.mubr.f32.mxu0 %v27
  %286 = vmatmul.mubr.f32.gmra.mxu0 %v26
  %v287 = vpop.f32.mrf.mxu0
  %v288 = vadd.f32 %v203, %v287
  %v289 = vpop.f32.mrf.mxu0
  %290 = vmatprep.mubr.f32.mxu0 %v32
  %291 = vmatmul.mubr.f32.gmra.mxu0 %v31
  %v292 = vpop.f32.mrf.mxu0
  %v293 = vadd.f32 %v208, %v292
  %v294 = vpop.f32.mrf.mxu0
  %295 = vdwg.mxu0
  %296 = vmatprep.subr.mxu0 0.0
  %297 = vmatpush1.msra.mxu0 0.0
  %298 = vmatprep.subr.mxu0 0.0
  %299 = vmatpush1.msra.mxu0 0.0
  %300 = vmatprep.subr.mxu0 0.0
  %301 = vmatpush1.msra.mxu0 0.0
  %302 = vmatprep.subr.mxu0 0.0
  %303 = vmatpush1.msra.mxu0 0.0
  %304 = vmatprep.subr.mxu0 0.0
  %305 = vmatpush1.msra.mxu0 0.0
  %306 = vmatprep.subr.mxu0 0.0
  %307 = vmatpush1.msra.mxu0 0.0
  %308 = vmatprep.subr.mxu0 0.0
  %309 = vmatpush1.msra.mxu0 0.0
  %310 = vmatprep.subr.mxu0 0.0
  %311 = vmatpush1.msra.mxu0 0.0
  %312 = vmatprep.subr.mxu0 0.0
  %313 = vmatpush1.msra.mxu0 %v105
  %314 = vmatprep.subr.mxu0 0.0
  %315 = vmatpush1.msra.mxu0 %v104
  %316 = vmatprep.subr.mxu0 0.0
  %317 = vmatpush1.msra.mxu0 %v103
  %318 = vmatprep.subr.mxu0 0.0
  %319 = vmatpush1.msra.mxu0 %v102
  %320 = vmatprep.subr.mxu0 0.0
  %321 = vmatpush1.msra.mxu0 %v101
  %322 = vmatprep.subr.mxu0 0.0
  %323 = vmatpush1.msra.mxu0 %v100
  %324 = vmatprep.subr.mxu0 0.0
  %325 = vmatpush1.msra.mxu0 %v99
  %326 = vmatprep.subr.mxu0 0.0
  %327 = vmatpush1.msra.mxu0 %v98
  %328 = vmatprep.subr.mxu0 0.0
  %329 = vmatpush2.msra.mxu0 0.0
  %330 = vmatprep.subr.mxu0 0.0
  %331 = vmatpush2.msra.mxu0 0.0
  %332 = vmatprep.subr.mxu0 0.0
  %333 = vmatpush2.msra.mxu0 0.0
  %334 = vmatprep.subr.mxu0 0.0
  %335 = vmatpush2.msra.mxu0 0.0
  %336 = vmatprep.subr.mxu0 0.0
  %337 = vmatpush2.msra.mxu0 0.0
  %338 = vmatprep.subr.mxu0 0.0
  %339 = vmatpush2.msra.mxu0 0.0
  %340 = vmatprep.subr.mxu0 0.0
  %341 = vmatpush2.msra.mxu0 0.0
  %342 = vmatprep.subr.mxu0 0.0
  %343 = vmatpush2.msra.mxu0 0.0
  %344 = vmatprep.subr.mxu0 0.0
  %345 = vmatpush2.msra.mxu0 0.0
  %346 = vmatprep.subr.mxu0 0.0
  %347 = vmatpush2.msra.mxu0 0.0
  %348 = vmatprep.subr.mxu0 0.0
  %349 = vmatpush2.msra.mxu0 0.0
  %350 = vmatprep.subr.mxu0 0.0
  %351 = vmatpush2.msra.mxu0 0.0
  %352 = vmatprep.subr.mxu0 0.0
  %353 = vmatpush2.msra.mxu0 0.0
  %354 = vmatprep.subr.mxu0 0.0
  %355 = vmatpush2.msra.mxu0 0.0
  %356 = vmatprep.subr.mxu0 0.0
  %357 = vmatpush2.msra.mxu0 0.0
  %358 = vmatprep.subr.mxu0 0.0
  %359 = vmatpush2.msra.mxu0 0.0
  %360 = vmatprep.mubr.f32.mxu0 0.0
  %361 = vmatmul.mubr.f32.gmra.mxu0 %v115
  %v362 = vpop.f32.mrf.mxu0
  %v363 = vadd.f32 %v278, %v362
  %v364 = vpop.f32.mrf.mxu0
  %365 = vmatprep.mubr.f32.mxu0 0.0
  %366 = vmatmul.mubr.f32.gmra.mxu0 %v118
  %v367 = vpop.f32.mrf.mxu0
  %v368 = vadd.f32 %v283, %v367
  %v369 = vpop.f32.mrf.mxu0
  %370 = vmatprep.mubr.f32.mxu0 0.0
  %371 = vmatmul.mubr.f32.gmra.mxu0 %v121
  %v372 = vpop.f32.mrf.mxu0
  %v373 = vadd.f32 %v288, %v372
  %v374 = vpop.f32.mrf.mxu0
  %375 = vmatprep.mubr.f32.mxu0 0.0
  %376 = vmatmul.mubr.f32.gmra.mxu0 %v124
  %v377 = vpop.f32.mrf.mxu0
  %v378 = vadd.f32 %v293, %v377
  %v379 = vpop.f32.mrf.mxu0
  %380 = vdwg.mxu0
  %v381 = vmin.f32 %v363, 0.0
  %v382 = vmin.f32 %v368, 0.0
  %v383 = vmin.f32 %v373, 0.0
  %v384 = vmin.f32 %v378, 0.0
  %v385 = vmul.f32 %v381, 1.442695
  %v386 = vpow.pop %v385
  %v387 = vmul.f32 %v382, 1.442695
  %v388 = vpow.pop %v387
  %v389 = vmul.f32 %v383, 1.442695
  %v390 = vpow.pop %v389
  %v391 = vmul.f32 %v384, 1.442695
  %v392 = vpow.pop %v391
  %v393 = vsub.f32 %v386, 1.0
  %v394 = vsub.f32 %v388, 1.0
  %v395 = vsub.f32 %v390, 1.0
  %v396 = vsub.f32 %v392, 1.0
  %vm397 = vcmp.gt.f32.partialorder %v363, 0.0
  %vm398 = vcmp.gt.f32.partialorder %v368, 0.0
  %vm399 = vcmp.gt.f32.partialorder %v373, 0.0
  %vm400 = vcmp.gt.f32.partialorder %v378, 0.0
  %v401 = vsel %vm397, %v363, %v393
  %v402 = vsel %vm398, %v368, %v394
  %v403 = vsel %vm399, %v373, %v395
  %v404 = vsel %vm400, %v378, %v396
  %405 = vst.msk [vmem:[%s3] sm:$0xff] %vm113, %v401
  %406 = vst.msk [vmem:[%s3 + $0x8] sm:$0xff] %vm113, %v402
  %407 = vst.msk [vmem:[%s3 + $0x10] sm:$0xff] %vm113, %v403
  %408 = vst.msk [vmem:[%s3 + $0x18] sm:$0xff] %vm113, %v404
  // Predicated region
  $region14: #{image_encoder_bg.8} parent=0 // pred_check
    _
  $region15: #{image_encoder_bg.8} parent=0 // pred_check_branch
    %410 = sbr.rel (0) target = $region17
  $region16: #{image_encoder_bg.8} parent=0 // pred_region
    _
  $region17: #{image_encoder_bg.8} parent=0 // pred_fallthru
    _
  // Predicated region
  $region18: #{image_encoder_bg.8} parent=0 // pred_check
    _
  $region19: #{image_encoder_bg.8} parent=0 // pred_check_branch
    %412 = sbr.rel (0) target = $region21
  $region20: #{image_encoder_bg.8} parent=0 // pred_region
    _
  $region21: #{image_encoder_bg.8} parent=0 // pred_fallthru
    _

// kernel: image_encoder_bg.9
$region0: #{image_encoder_bg.9}
  #allocation0 [shape = 'u32[]', space=smem, size = 0x4, offset = 0x4, fixed_abs, tag = 'smem constant byte address 0x4 - core index']
  #allocation1 [shape = 'u32[144,128]{1,0:T(1,128)}', space=vmem, size = 0x12000, scoped, tag = 'internal scratch']
  %s0 = inlined_call_operand.vmem [shape: f32[2,1024], index: 0, kind: input, shape index: {}]
  %s1 = inlined_call_operand.vmem [shape: f32[1024,64], index: 1, kind: input, shape index: {}]
  %s2 = inlined_call_operand.vmem [shape: f32[1,64], index: 2, kind: input, shape index: {}]
  %s3 = inlined_call_operand.hbm [shape: f32[2,64], index: 3, kind: output, shape index: {}]
  %s4 = sld [smem:[#allocation0]]
  $region22: #{image_encoder_bg.9} parent=0
    _
  %s6 = ssub.s32 1, %s4
  %s7 = scalar_select 0, %s6, %s4
  $region1: #{image_encoder_bg.9} parent=0
    #allocation2 [shape = 'u8[1024]{0}', space=vmem, size = 0x400, scoped, tag = 'output window, operand 0, single buffered']
    #allocation3 [shape = 's32[1]{0}', space=sflag, size = 0x4, scoped, tag = 'scoped memory for image_encoder_bg.9']
    %8 = vsyncpa [#allocation3], 0
    // Predicated region
    $region2: #{image_encoder_bg.9} parent=1 // pred_check
      _
    $region3: #{image_encoder_bg.9} parent=1 // pred_check_branch
      %10 = sbr.rel (0) target = $region5
    $region4: #{image_encoder_bg.9} parent=1 // pred_region
      _
    $region5: #{image_encoder_bg.9} parent=1 // pred_fallthru
      _
    // Predicated region
    $region6: #{image_encoder_bg.9} parent=1 // pred_check
      _
    $region7: #{image_encoder_bg.9} parent=1 // pred_check_branch
      %12 = sbr.rel (0) target = $region9
    $region8: #{image_encoder_bg.9} parent=1 // pred_region
      _
    $region9: #{image_encoder_bg.9} parent=1 // pred_fallthru
      _
    // Predicated region
    $region10: #{image_encoder_bg.9} parent=1 // pred_check
      _
    $region11: #{image_encoder_bg.9} parent=1 // pred_check_branch
      %14 = sbr.rel (0) target = $region13
    $region12: #{image_encoder_bg.9} parent=1 // pred_region
      _
    $region13: #{image_encoder_bg.9} parent=1 // pred_fallthru
      _
    %v15 = vld [vmem:[%s0] sm:$0xff]
    %v16 = vld [vmem:[%s0 + $0x8] sm:$0xff]
    %v17 = vld [vmem:[%s1] sm:$0xff]
    %v18 = vld [vmem:[%s1 + $0x8] sm:$0xff]
    %v19 = vld [vmem:[%s1 + $0x10] sm:$0xff]
    %v20 = vld [vmem:[%s1 + $0x18] sm:$0xff]
    %v21 = vld [vmem:[%s1 + $0x20] sm:$0xff]
    %v22 = vld [vmem:[%s1 + $0x28] sm:$0xff]
    %v23 = vld [vmem:[%s1 + $0x30] sm:$0xff]
    %v24 = vld [vmem:[%s1 + $0x38] sm:$0xff]
    %v25 = vld [vmem:[%s1 + $0x40] sm:$0xff]
    %v26 = vld [vmem:[%s1 + $0x48] sm:$0xff]
    %v27 = vld [vmem:[%s1 + $0x50] sm:$0xff]
    %v28 = vld [vmem:[%s1 + $0x58] sm:$0xff]
    %v29 = vld [vmem:[%s1 + $0x60] sm:$0xff]
    %v30 = vld [vmem:[%s1 + $0x68] sm:$0xff]
    %v31 = vld [vmem:[%s1 + $0x70] sm:$0xff]
    %v32 = vld [vmem:[%s1 + $0x78] sm:$0xff]
    %v33 = vld [vmem:[%s1 + $0x80] sm:$0xff]
    %v34 = vld [vmem:[%s1 + $0x88] sm:$0xff]
    %v35 = vld [vmem:[%s1 + $0x90] sm:$0xff]
    %v36 = vld [vmem:[%s1 + $0x98] sm:$0xff]
    %v37 = vld [vmem:[%s1 + $0xa0] sm:$0xff]
    %v38 = vld [vmem:[%s1 + $0xa8] sm:$0xff]
    %v39 = vld [vmem:[%s1 + $0xb0] sm:$0xff]
    %v40 = vld [vmem:[%s1 + $0xb8] sm:$0xff]
    %v41 = vld [vmem:[%s1 + $0xc0] sm:$0xff]
    %v42 = vld [vmem:[%s1 + $0xc8] sm:$0xff]
    %v43 = vld [vmem:[%s1 + $0xd0] sm:$0xff]
    %v44 = vld [vmem:[%s1 + $0xd8] sm:$0xff]
    %v45 = vld [vmem:[%s1 + $0xe0] sm:$0xff]
    %v46 = vld [vmem:[%s1 + $0xe8] sm:$0xff]
    %v47 = vld [vmem:[%s1 + $0xf0] sm:$0xff]
    %v48 = vld [vmem:[%s1 + $0xf8] sm:$0xff]
    %v49 = vld [vmem:[%s1 + $0x100] sm:$0xff]
    %v50 = vld [vmem:[%s1 + $0x108] sm:$0xff]
    %v51 = vld [vmem:[%s1 + $0x110] sm:$0xff]
    %v52 = vld [vmem:[%s1 + $0x118] sm:$0xff]
    %v53 = vld [vmem:[%s1 + $0x120] sm:$0xff]
    %v54 = vld [vmem:[%s1 + $0x128] sm:$0xff]
    %v55 = vld [vmem:[%s1 + $0x130] sm:$0xff]
    %v56 = vld [vmem:[%s1 + $0x138] sm:$0xff]
    %v57 = vld [vmem:[%s1 + $0x140] sm:$0xff]
    %v58 = vld [vmem:[%s1 + $0x148] sm:$0xff]
    %v59 = vld [vmem:[%s1 + $0x150] sm:$0xff]
    %v60 = vld [vmem:[%s1 + $0x158] sm:$0xff]
    %v61 = vld [vmem:[%s1 + $0x160] sm:$0xff]
    %v62 = vld [vmem:[%s1 + $0x168] sm:$0xff]
    %v63 = vld [vmem:[%s1 + $0x170] sm:$0xff]
    %v64 = vld [vmem:[%s1 + $0x178] sm:$0xff]
    %v65 = vld [vmem:[%s1 + $0x180] sm:$0xff]
    %v66 = vld [vmem:[%s1 + $0x188] sm:$0xff]
    %v67 = vld [vmem:[%s1 + $0x190] sm:$0xff]
    %v68 = vld [vmem:[%s1 + $0x198] sm:$0xff]
    %v69 = vld [vmem:[%s1 + $0x1a0] sm:$0xff]
    %v70 = vld [vmem:[%s1 + $0x1a8] sm:$0xff]
    %v71 = vld [vmem:[%s1 + $0x1b0] sm:$0xff]
    %v72 = vld [vmem:[%s1 + $0x1b8] sm:$0xff]
    %v73 = vld [vmem:[%s1 + $0x1c0] sm:$0xff]
    %v74 = vld [vmem:[%s1 + $0x1c8] sm:$0xff]
    %v75 = vld [vmem:[%s1 + $0x1d0] sm:$0xff]
    %v76 = vld [vmem:[%s1 + $0x1d8] sm:$0xff]
    %v77 = vld [vmem:[%s1 + $0x1e0] sm:$0xff]
    %v78 = vld [vmem:[%s1 + $0x1e8] sm:$0xff]
    %v79 = vld [vmem:[%s1 + $0x1f0] sm:$0xff]
    %v80 = vld [vmem:[%s1 + $0x1f8] sm:$0xff]
    %v81 = vld [vmem:[%s1 + $0x200] sm:$0xff]
    %v82 = vld [vmem:[%s1 + $0x208] sm:$0xff]
    %v83 = vld [vmem:[%s1 + $0x210] sm:$0xff]
    %v84 = vld [vmem:[%s1 + $0x218] sm:$0xff]
    %v85 = vld [vmem:[%s1 + $0x220] sm:$0xff]
    %v86 = vld [vmem:[%s1 + $0x228] sm:$0xff]
    %v87 = vld [vmem:[%s1 + $0x230] sm:$0xff]
    %v88 = vld [vmem:[%s1 + $0x238] sm:$0xff]
    %v89 = vld [vmem:[%s1 + $0x240] sm:$0xff]
    %v90 = vld [vmem:[%s1 + $0x248] sm:$0xff]
    %v91 = vld [vmem:[%s1 + $0x250] sm:$0xff]
    %v92 = vld [vmem:[%s1 + $0x258] sm:$0xff]
    %v93 = vld [vmem:[%s1 + $0x260] sm:$0xff]
    %v94 = vld [vmem:[%s1 + $0x268] sm:$0xff]
    %v95 = vld [vmem:[%s1 + $0x270] sm:$0xff]
    %v96 = vld [vmem:[%s1 + $0x278] sm:$0xff]
    %v97 = vld [vmem:[%s1 + $0x280] sm:$0xff]
    %v98 = vld [vmem:[%s1 + $0x288] sm:$0xff]
    %v99 = vld [vmem:[%s1 + $0x290] sm:$0xff]
    %v100 = vld [vmem:[%s1 + $0x298] sm:$0xff]
    %v101 = vld [vmem:[%s1 + $0x2a0] sm:$0xff]
    %v102 = vld [vmem:[%s1 + $0x2a8] sm:$0xff]
    %v103 = vld [vmem:[%s1 + $0x2b0] sm:$0xff]
    %v104 = vld [vmem:[%s1 + $0x2b8] sm:$0xff]
    %v105 = vld [vmem:[%s1 + $0x2c0] sm:$0xff]
    %v106 = vld [vmem:[%s1 + $0x2c8] sm:$0xff]
    %v107 = vld [vmem:[%s1 + $0x2d0] sm:$0xff]
    %v108 = vld [vmem:[%s1 + $0x2d8] sm:$0xff]
    %v109 = vld [vmem:[%s1 + $0x2e0] sm:$0xff]
    %v110 = vld [vmem:[%s1 + $0x2e8] sm:$0xff]
    %v111 = vld [vmem:[%s1 + $0x2f0] sm:$0xff]
    %v112 = vld [vmem:[%s1 + $0x2f8] sm:$0xff]
    %v113 = vld [vmem:[%s1 + $0x300] sm:$0xff]
    %v114 = vld [vmem:[%s1 + $0x308] sm:$0xff]
    %v115 = vld [vmem:[%s1 + $0x310] sm:$0xff]
    %v116 = vld [vmem:[%s1 + $0x318] sm:$0xff]
    %v117 = vld [vmem:[%s1 + $0x320] sm:$0xff]
    %v118 = vld [vmem:[%s1 + $0x328] sm:$0xff]
    %v119 = vld [vmem:[%s1 + $0x330] sm:$0xff]
    %v120 = vld [vmem:[%s1 + $0x338] sm:$0xff]
    %v121 = vld [vmem:[%s1 + $0x340] sm:$0xff]
    %v122 = vld [vmem:[%s1 + $0x348] sm:$0xff]
    %v123 = vld [vmem:[%s1 + $0x350] sm:$0xff]
    %v124 = vld [vmem:[%s1 + $0x358] sm:$0xff]
    %v125 = vld [vmem:[%s1 + $0x360] sm:$0xff]
    %v126 = vld [vmem:[%s1 + $0x368] sm:$0xff]
    %v127 = vld [vmem:[%s1 + $0x370] sm:$0xff]
    %v128 = vld [vmem:[%s1 + $0x378] sm:$0xff]
    %v129 = vld [vmem:[%s1 + $0x380] sm:$0xff]
    %v130 = vld [vmem:[%s1 + $0x388] sm:$0xff]
    %v131 = vld [vmem:[%s1 + $0x390] sm:$0xff]
    %v132 = vld [vmem:[%s1 + $0x398] sm:$0xff]
    %v133 = vld [vmem:[%s1 + $0x3a0] sm:$0xff]
    %v134 = vld [vmem:[%s1 + $0x3a8] sm:$0xff]
    %v135 = vld [vmem:[%s1 + $0x3b0] sm:$0xff]
    %v136 = vld [vmem:[%s1 + $0x3b8] sm:$0xff]
    %v137 = vld [vmem:[%s1 + $0x3c0] sm:$0xff]
    %v138 = vld [vmem:[%s1 + $0x3c8] sm:$0xff]
    %v139 = vld [vmem:[%s1 + $0x3d0] sm:$0xff]
    %v140 = vld [vmem:[%s1 + $0x3d8] sm:$0xff]
    %v141 = vld [vmem:[%s1 + $0x3e0] sm:$0xff]
    %v142 = vld [vmem:[%s1 + $0x3e8] sm:$0xff]
    %v143 = vld [vmem:[%s1 + $0x3f0] sm:$0xff]
    %v144 = vld [vmem:[%s1 + $0x3f8] sm:$0xff]
    %v145 = vld [vmem:[%s2] sm:$0x1]
    %v147 = vlaneseq
    %v148 = vshrl.u32 %v147, 7
    %v149 = vsub.s32 0, %v148
    %v150 = vrot.slane %v145, %v149
    %v154 = vcombine.high %v15, %v15
    %v156 = vunpack.c.l.s4 1983009808
    %v157 = vunpack.c.0.s8 %v156
    %v158 = vlaneseq
    %v159 = vshrl.u32 %v158, 7
    %v160 = vsub.s32 %v157, %v159
    %v161 = vrot.slane %v15, %v160
    %v163 = vunpack.c.l.s4 1983009808
    %v164 = vunpack.c.0.s8 %v163
    %v165 = vlaneseq
    %v166 = vshrl.u32 %v165, 7
    %v167 = vsub.s32 %v164, %v166
    %v168 = vrot.slane %v154, %v167
    %v169 = vcombine.high %v161, %v161
    %v170 = vcombine.high %v168, %v168
    %v171 = vcombine.high %v16, %v16
    %v173 = vunpack.c.l.s4 1983009808
    %v174 = vunpack.c.0.s8 %v173
    %v175 = vlaneseq
    %v176 = vshrl.u32 %v175, 7
    %v177 = vsub.s32 %v174, %v176
    %v178 = vrot.slane %v16, %v177
    %v180 = vunpack.c.l.s4 1983009808
    %v181 = vunpack.c.0.s8 %v180
    %v182 = vlaneseq
    %v183 = vshrl.u32 %v182, 7
    %v184 = vsub.s32 %v181, %v183
    %v185 = vrot.slane %v171, %v184
    %v186 = vcombine.high %v178, %v178
    %v187 = vcombine.high %v185, %v185
    %196 = vmatprep.subr.mxu0 0.0
    %197 = vmatpush1.msra.mxu0 %v32
    %198 = vmatprep.subr.mxu0 0.0
    %199 = vmatpush1.msra.mxu0 %v31
    %200 = vmatprep.subr.mxu0 0.0
    %201 = vmatpush1.msra.mxu0 %v30
    %202 = vmatprep.subr.mxu0 0.0
    %203 = vmatpush1.msra.mxu0 %v29
    %204 = vmatprep.subr.mxu0 0.0
    %205 = vmatpush1.msra.mxu0 %v28
    %206 = vmatprep.subr.mxu0 0.0
    %207 = vmatpush1.msra.mxu0 %v27
    %208 = vmatprep.subr.mxu0 0.0
    %209 = vmatpush1.msra.mxu0 %v26
    %210 = vmatprep.subr.mxu0 0.0
    %211 = vmatpush1.msra.mxu0 %v25
    %212 = vmatprep.subr.mxu0 0.0
    %213 = vmatpush1.msra.mxu0 %v24
    %214 = vmatprep.subr.mxu0 0.0
    %215 = vmatpush1.msra.mxu0 %v23
    %216 = vmatprep.subr.mxu0 0.0
    %217 = vmatpush1.msra.mxu0 %v22
    %218 = vmatprep.subr.mxu0 0.0
    %219 = vmatpush1.msra.mxu0 %v21
    %220 = vmatprep.subr.mxu0 0.0
    %221 = vmatpush1.msra.mxu0 %v20
    %222 = vmatprep.subr.mxu0 0.0
    %223 = vmatpush1.msra.mxu0 %v19
    %224 = vmatprep.subr.mxu0 0.0
    %225 = vmatpush1.msra.mxu0 %v18
    %226 = vmatprep.subr.mxu0 0.0
    %227 = vmatpush1.msra.mxu0 %v17
    %228 = vmatprep.subr.mxu0 0.0
    %229 = vmatpush2.msra.mxu0 %v48
    %230 = vmatprep.subr.mxu0 0.0
    %231 = vmatpush2.msra.mxu0 %v47
    %232 = vmatprep.subr.mxu0 0.0
    %233 = vmatpush2.msra.mxu0 %v46
    %234 = vmatprep.subr.mxu0 0.0
    %235 = vmatpush2.msra.mxu0 %v45
    %236 = vmatprep.subr.mxu0 0.0
    %237 = vmatpush2.msra.mxu0 %v44
    %238 = vmatprep.subr.mxu0 0.0
    %239 = vmatpush2.msra.mxu0 %v43
    %240 = vmatprep.subr.mxu0 0.0
    %241 = vmatpush2.msra.mxu0 %v42
    %242 = vmatprep.subr.mxu0 0.0
    %243 = vmatpush2.msra.mxu0 %v41
    %244 = vmatprep.subr.mxu0 0.0
    %245 = vmatpush2.msra.mxu0 %v40
    %246 = vmatprep.subr.mxu0 0.0
    %247 = vmatpush2.msra.mxu0 %v39
    %248 = vmatprep.subr.mxu0 0.0
    %249 = vmatpush2.msra.mxu0 %v38
    %250 = vmatprep.subr.mxu0 0.0
    %251 = vmatpush2.msra.mxu0 %v37
    %252 = vmatprep.subr.mxu0 0.0
    %253 = vmatpush2.msra.mxu0 %v36
    %254 = vmatprep.subr.mxu0 0.0
    %255 = vmatpush2.msra.mxu0 %v35
    %256 = vmatprep.subr.mxu0 0.0
    %257 = vmatpush2.msra.mxu0 %v34
    %258 = vmatprep.subr.mxu0 0.0
    %259 = vmatpush2.msra.mxu0 %v33
    %260 = vmatprep.mubr.f32.mxu0 %v169
    %261 = vmatmul.mubr.f32.gmra.mxu0 %v161
    %v262 = vpop.f32.mrf.mxu0
    %v263 = vadd.f32 %v150, %v262
    %v264 = vpop.f32.mrf.mxu0
    %265 = vdwg.mxu0
    %266 = vmatprep.subr.mxu0 0.0
    %267 = vmatpush1.msra.mxu0 %v64
    %268 = vmatprep.subr.mxu0 0.0
    %269 = vmatpush1.msra.mxu0 %v63
    %270 = vmatprep.subr.mxu0 0.0
    %271 = vmatpush1.msra.mxu0 %v62
    %272 = vmatprep.subr.mxu0 0.0
    %273 = vmatpush1.msra.mxu0 %v61
    %274 = vmatprep.subr.mxu0 0.0
    %275 = vmatpush1.msra.mxu0 %v60
    %276 = vmatprep.subr.mxu0 0.0
    %277 = vmatpush1.msra.mxu0 %v59
    %278 = vmatprep.subr.mxu0 0.0
    %279 = vmatpush1.msra.mxu0 %v58
    %280 = vmatprep.subr.mxu0 0.0
    %281 = vmatpush1.msra.mxu0 %v57
    %282 = vmatprep.subr.mxu0 0.0
    %283 = vmatpush1.msra.mxu0 %v56
    %284 = vmatprep.subr.mxu0 0.0
    %285 = vmatpush1.msra.mxu0 %v55
    %286 = vmatprep.subr.mxu0 0.0
    %287 = vmatpush1.msra.mxu0 %v54
    %288 = vmatprep.subr.mxu0 0.0
    %289 = vmatpush1.msra.mxu0 %v53
    %290 = vmatprep.subr.mxu0 0.0
    %291 = vmatpush1.msra.mxu0 %v52
    %292 = vmatprep.subr.mxu0 0.0
    %293 = vmatpush1.msra.mxu0 %v51
    %294 = vmatprep.subr.mxu0 0.0
    %295 = vmatpush1.msra.mxu0 %v50
    %296 = vmatprep.subr.mxu0 0.0
    %297 = vmatpush1.msra.mxu0 %v49
    %298 = vmatprep.subr.mxu0 0.0
    %299 = vmatpush2.msra.mxu0 %v80
    %300 = vmatprep.subr.mxu0 0.0
    %301 = vmatpush2.msra.mxu0 %v79
    %302 = vmatprep.subr.mxu0 0.0
    %303 = vmatpush2.msra.mxu0 %v78
    %304 = vmatprep.subr.mxu0 0.0
    %305 = vmatpush2.msra.mxu0 %v77
    %306 = vmatprep.subr.mxu0 0.0
    %307 = vmatpush2.msra.mxu0 %v76
    %308 = vmatprep.subr.mxu0 0.0
    %309 = vmatpush2.msra.mxu0 %v75
    %310 = vmatprep.subr.mxu0 0.0
    %311 = vmatpush2.msra.mxu0 %v74
    %312 = vmatprep.subr.mxu0 0.0
    %313 = vmatpush2.msra.mxu0 %v73
    %314 = vmatprep.subr.mxu0 0.0
    %315 = vmatpush2.msra.mxu0 %v72
    %316 = vmatprep.subr.mxu0 0.0
    %317 = vmatpush2.msra.mxu0 %v71
    %318 = vmatprep.subr.mxu0 0.0
    %319 = vmatpush2.msra.mxu0 %v70
    %320 = vmatprep.subr.mxu0 0.0
    %321 = vmatpush2.msra.mxu0 %v69
    %322 = vmatprep.subr.mxu0 0.0
    %323 = vmatpush2.msra.mxu0 %v68
    %324 = vmatprep.subr.mxu0 0.0
    %325 = vmatpush2.msra.mxu0 %v67
    %326 = vmatprep.subr.mxu0 0.0
    %327 = vmatpush2.msra.mxu0 %v66
    %328 = vmatprep.subr.mxu0 0.0
    %329 = vmatpush2.msra.mxu0 %v65
    %330 = vmatprep.mubr.f32.mxu0 %v170
    %331 = vmatmul.mubr.f32.gmra.mxu0 %v168
    %v332 = vpop.f32.mrf.mxu0
    %v333 = vadd.f32 %v263, %v332
    %v334 = vpop.f32.mrf.mxu0
    %335 = vdwg.mxu0
    %336 = vmatprep.subr.mxu0 0.0
    %337 = vmatpush1.msra.mxu0 %v96
    %338 = vmatprep.subr.mxu0 0.0
    %339 = vmatpush1.msra.mxu0 %v95
    %340 = vmatprep.subr.mxu0 0.0
    %341 = vmatpush1.msra.mxu0 %v94
    %342 = vmatprep.subr.mxu0 0.0
    %343 = vmatpush1.msra.mxu0 %v93
    %344 = vmatprep.subr.mxu0 0.0
    %345 = vmatpush1.msra.mxu0 %v92
    %346 = vmatprep.subr.mxu0 0.0
    %347 = vmatpush1.msra.mxu0 %v91
    %348 = vmatprep.subr.mxu0 0.0
    %349 = vmatpush1.msra.mxu0 %v90
    %350 = vmatprep.subr.mxu0 0.0
    %351 = vmatpush1.msra.mxu0 %v89
    %352 = vmatprep.subr.mxu0 0.0
    %353 = vmatpush1.msra.mxu0 %v88
    %354 = vmatprep.subr.mxu0 0.0
    %355 = vmatpush1.msra.mxu0 %v87
    %356 = vmatprep.subr.mxu0 0.0
    %357 = vmatpush1.msra.mxu0 %v86
    %358 = vmatprep.subr.mxu0 0.0
    %359 = vmatpush1.msra.mxu0 %v85
    %360 = vmatprep.subr.mxu0 0.0
    %361 = vmatpush1.msra.mxu0 %v84
    %362 = vmatprep.subr.mxu0 0.0
    %363 = vmatpush1.msra.mxu0 %v83
    %364 = vmatprep.subr.mxu0 0.0
    %365 = vmatpush1.msra.mxu0 %v82
    %366 = vmatprep.subr.mxu0 0.0
    %367 = vmatpush1.msra.mxu0 %v81
    %368 = vmatprep.subr.mxu0 0.0
    %369 = vmatpush2.msra.mxu0 %v112
    %370 = vmatprep.subr.mxu0 0.0
    %371 = vmatpush2.msra.mxu0 %v111
    %372 = vmatprep.subr.mxu0 0.0
    %373 = vmatpush2.msra.mxu0 %v110
    %374 = vmatprep.subr.mxu0 0.0
    %375 = vmatpush2.msra.mxu0 %v109
    %376 = vmatprep.subr.mxu0 0.0
    %377 = vmatpush2.msra.mxu0 %v108
    %378 = vmatprep.subr.mxu0 0.0
    %379 = vmatpush2.msra.mxu0 %v107
    %380 = vmatprep.subr.mxu0 0.0
    %381 = vmatpush2.msra.mxu0 %v106
    %382 = vmatprep.subr.mxu0 0.0
    %383 = vmatpush2.msra.mxu0 %v105
    %384 = vmatprep.subr.mxu0 0.0
    %385 = vmatpush2.msra.mxu0 %v104
    %386 = vmatprep.subr.mxu0 0.0
    %387 = vmatpush2.msra.mxu0 %v103
    %388 = vmatprep.subr.mxu0 0.0
    %389 = vmatpush2.msra.mxu0 %v102
    %390 = vmatprep.subr.mxu0 0.0
    %391 = vmatpush2.msra.mxu0 %v101
    %392 = vmatprep.subr.mxu0 0.0
    %393 = vmatpush2.msra.mxu0 %v100
    %394 = vmatprep.subr.mxu0 0.0
    %395 = vmatpush2.msra.mxu0 %v99
    %396 = vmatprep.subr.mxu0 0.0
    %397 = vmatpush2.msra.mxu0 %v98
    %398 = vmatprep.subr.mxu0 0.0
    %399 = vmatpush2.msra.mxu0 %v97
    %400 = vmatprep.mubr.f32.mxu0 %v186
    %401 = vmatmul.mubr.f32.gmra.mxu0 %v178
    %v402 = vpop.f32.mrf.mxu0
    %v403 = vadd.f32 %v333, %v402
    %v404 = vpop.f32.mrf.mxu0
    %405 = vdwg.mxu0
    %406 = vmatprep.subr.mxu0 0.0
    %407 = vmatpush1.msra.mxu0 %v128
    %408 = vmatprep.subr.mxu0 0.0
    %409 = vmatpush1.msra.mxu0 %v127
    %410 = vmatprep.subr.mxu0 0.0
    %411 = vmatpush1.msra.mxu0 %v126
    %412 = vmatprep.subr.mxu0 0.0
    %413 = vmatpush1.msra.mxu0 %v125
    %414 = vmatprep.subr.mxu0 0.0
    %415 = vmatpush1.msra.mxu0 %v124
    %416 = vmatprep.subr.mxu0 0.0
    %417 = vmatpush1.msra.mxu0 %v123
    %418 = vmatprep.subr.mxu0 0.0
    %419 = vmatpush1.msra.mxu0 %v122
    %420 = vmatprep.subr.mxu0 0.0
    %421 = vmatpush1.msra.mxu0 %v121
    %422 = vmatprep.subr.mxu0 0.0
    %423 = vmatpush1.msra.mxu0 %v120
    %424 = vmatprep.subr.mxu0 0.0
    %425 = vmatpush1.msra.mxu0 %v119
    %426 = vmatprep.subr.mxu0 0.0
    %427 = vmatpush1.msra.mxu0 %v118
    %428 = vmatprep.subr.mxu0 0.0
    %429 = vmatpush1.msra.mxu0 %v117
    %430 = vmatprep.subr.mxu0 0.0
    %431 = vmatpush1.msra.mxu0 %v116
    %432 = vmatprep.subr.mxu0 0.0
    %433 = vmatpush1.msra.mxu0 %v115
    %434 = vmatprep.subr.mxu0 0.0
    %435 = vmatpush1.msra.mxu0 %v114
    %436 = vmatprep.subr.mxu0 0.0
    %437 = vmatpush1.msra.mxu0 %v113
    %438 = vmatprep.subr.mxu0 0.0
    %439 = vmatpush2.msra.mxu0 %v144
    %440 = vmatprep.subr.mxu0 0.0
    %441 = vmatpush2.msra.mxu0 %v143
    %442 = vmatprep.subr.mxu0 0.0
    %443 = vmatpush2.msra.mxu0 %v142
    %444 = vmatprep.subr.mxu0 0.0
    %445 = vmatpush2.msra.mxu0 %v141
    %446 = vmatprep.subr.mxu0 0.0
    %447 = vmatpush2.msra.mxu0 %v140
    %448 = vmatprep.subr.mxu0 0.0
    %449 = vmatpush2.msra.mxu0 %v139
    %450 = vmatprep.subr.mxu0 0.0
    %451 = vmatpush2.msra.mxu0 %v138
    %452 = vmatprep.subr.mxu0 0.0
    %453 = vmatpush2.msra.mxu0 %v137
    %454 = vmatprep.subr.mxu0 0.0
    %455 = vmatpush2.msra.mxu0 %v136
    %456 = vmatprep.subr.mxu0 0.0
    %457 = vmatpush2.msra.mxu0 %v135
    %458 = vmatprep.subr.mxu0 0.0
    %459 = vmatpush2.msra.mxu0 %v134
    %460 = vmatprep.subr.mxu0 0.0
    %461 = vmatpush2.msra.mxu0 %v133
    %462 = vmatprep.subr.mxu0 0.0
    %463 = vmatpush2.msra.mxu0 %v132
    %464 = vmatprep.subr.mxu0 0.0
    %465 = vmatpush2.msra.mxu0 %v131
    %466 = vmatprep.subr.mxu0 0.0
    %467 = vmatpush2.msra.mxu0 %v130
    %468 = vmatprep.subr.mxu0 0.0
    %469 = vmatpush2.msra.mxu0 %v129
    %470 = vmatprep.mubr.f32.mxu0 %v187
    %471 = vmatmul.mubr.f32.gmra.mxu0 %v185
    %v472 = vpop.f32.mrf.mxu0
    %v473 = vadd.f32 %v403, %v472
    %v474 = vpop.f32.mrf.mxu0
    %475 = vdwg.mxu0
    %v476 = vmin.f32 %v473, 0.0
    %v477 = vmul.f32 %v476, 1.442695
    %v478 = vpow.pop %v477
    %v479 = vsub.f32 %v478, 1.0
    %vm480 = vcmp.gt.f32.partialorder %v473, 0.0
    %v481 = vsel %vm480, %v473, %v479
    %vm482 = vcmask 517120
    %483 = vst.msk [vmem:[#allocation2] sm:$0x3] %vm482, %v481
    // Predicated region
    $region14: #{image_encoder_bg.9} parent=1 // pred_check
      _
    $region15: #{image_encoder_bg.9} parent=1 // pred_check_branch
      %485 = sbr.rel (0) target = $region17
    $region16: #{image_encoder_bg.9} parent=1 // pred_region
      %s487 = ssub.s32 32, 32
      %488 = vsyncadd [#allocation3], %s487
      %s490 = sshll.u32 [#allocation2], 4
      %s491 = int_to_ptr.vmem [resolvable:$true] %s490
      %493 = dma.vmem_to_hbm [thread:$0]  %s491, 32, %s3, [#allocation3]
    $region17: #{image_encoder_bg.9} parent=1 // pred_fallthru
      _
    // Predicated region
    $region18: #{image_encoder_bg.9} parent=1 // pred_check
      _
    $region19: #{image_encoder_bg.9} parent=1 // pred_check_branch
      %495 = sbr.rel (0) target = $region21
    $region20: #{image_encoder_bg.9} parent=1 // pred_region
      %496 = dma.done [#allocation3], 32
    $region21: #{image_encoder_bg.9} parent=1 // pred_fallthru
      _
    %497 = vsyncpa [#allocation3], 1

</llo_original>
